<compile_context>
chip_gen: v5e
topology: v5e:2x2
jax: 0.10.0
libtpu: 0.0.40
codegen_flags: <defaults>
</compile_context>

<pallas_src>
import functools
import math

import jax
import jax.numpy as jnp
from jax.experimental import pallas as pl
from jax.experimental.pallas import tpu as pltpu


def _round_up(x: int, m: int) -> int:
    return ((x + m - 1) // m) * m


def _pe_table_kernel(freq_ref, phase_ref, o_ref, *, seq_tile: int):
    # freq_ref, phase_ref: (1, H_pad) rows, constant across the grid.
    # o_ref: (seq_tile, H_pad) block of the sinusoidal table.
    i = pl.program_id(0)
    # Integer row iota, cast after adding the tile offset (precision-safe for
    # large max_len).
    pos = jax.lax.broadcasted_iota(jnp.int32, o_ref.shape, 0) + i * seq_tile
    pos = pos.astype(jnp.float32)
    # Single transcendental per element: cos(x) == sin(x + pi/2).
    angle = pos * freq_ref[...] + phase_ref[...]
    o_ref[...] = jnp.sin(angle)


@functools.lru_cache(maxsize=None)
def _build_pe_table(hidden_size: int, max_len: int) -> jax.Array:
    """Build the full (1, max_len, hidden_size) float32 PE table once."""
    h_pad = _round_up(hidden_size, 128)                 # lane-dense output
    seq_tile = 256 if max_len > 256 else _round_up(max_len, 8)
    l_pad = _round_up(max_len, seq_tile)
    grid = l_pad // seq_tile

    # Per-column frequency and phase, computed ONCE (hoisted out of kernel).
    #   pe[:, 2i]   = sin(pos * exp(-(2i) * ln(10000)/H))
    #   pe[:, 2i+1] = cos(pos * exp(-(2i) * ln(10000)/H)) = sin(angle + pi/2)
    col = jnp.arange(h_pad, dtype=jnp.int32)
    parity = col % 2
    base = (col - parity).astype(jnp.float32)           # 2 * (col // 2)
    freq = jnp.exp(base * (-(math.log(10000.0) / hidden_size)))[None, :]
    phase = ((math.pi / 2.0) * parity.astype(jnp.float32))[None, :]

    kernel = functools.partial(_pe_table_kernel, seq_tile=seq_tile)

    table = pl.pallas_call(
        kernel,
        out_shape=jax.ShapeDtypeStruct((l_pad, h_pad), jnp.float32),
        grid=(grid,),
        in_specs=[
            pl.BlockSpec((1, h_pad), lambda i: (0, 0)),
            pl.BlockSpec((1, h_pad), lambda i: (0, 0)),
        ],
        out_specs=pl.BlockSpec((seq_tile, h_pad), lambda i: (i, 0)),
        compiler_params=pltpu.CompilerParams(
            dimension_semantics=("parallel",),
        ),
    )(freq, phase)

    pe = table[:max_len, :hidden_size][None]            # (1, max_len, hidden)
    return jax.block_until_ready(pe)


def positional_embedding(x: jax.Array, hidden_size: int, max_len: int = 512) -> jax.Array:
    """forward(x): returns pe[:, :x.shape[1]] -> (1, seq_len, hidden_size) f32."""
    seq_len = x.shape[1]
    assert seq_len <= max_len, "sequence length exceeds max_len"
    pe = _build_pe_table(hidden_size, max_len)          # cached, built once
    return pe[:, :seq_len]


def _reference(seq_len: int, hidden_size: int) -> jnp.ndarray:
    # Pure-JAX reference mirroring the PyTorch __init__ construction.
    pos = jnp.arange(seq_len, dtype=jnp.float32)[:, None]
    d = jnp.exp(
        jnp.arange(0, hidden_size, 2, dtype=jnp.float32)
        * -(math.log(10000.0) / hidden_size)
    )
    pe = jnp.zeros((seq_len, hidden_size), jnp.float32)
    pe = pe.at[:, 0::2].set(jnp.sin(pos * d))
    pe = pe.at[:, 1::2].set(jnp.cos(pos * d))
    return pe[None]


if __name__ == "__main__":
    key = jax.random.PRNGKey(0)
    batch, seq_len, hidden = 2, 8, 32

    # x: (batch_size, sentence_size) token ids -- only its shape matters.
    x = jax.random.randint(key, (batch, seq_len), 0, 100, dtype=jnp.int32)

    out = positional_embedding(x, hidden_size=hidden, max_len=512)
    out = jax.block_until_ready(out)

    ref = _reference(seq_len, hidden)
    assert out.shape == (1, seq_len, hidden), out.shape
    assert out.dtype == jnp.float32
    # f32 tolerance: cos folded into phase-shifted sin gives a few-ulp argument
    # rounding difference vs the reference's direct cos.
    assert jnp.allclose(out, ref, atol=1e-4, rtol=1e-4), "mismatch vs reference"

    # Second call hits the cache (no recompute / relaunch).
    out2 = jax.block_until_ready(positional_embedding(x, hidden_size=hidden, max_len=512))
    assert jnp.array_equal(out, out2)

    print("KERNEL_OK")
</pallas_src>

<mosaic_0001>
module attributes {stable_mosaic.version = 11 : i64} {
  func.func @_pe_table_kernel(%arg0: i32, %arg1: memref<1x128xf32, #tpu.memory_space<vmem>>, %arg2: memref<1x128xf32, #tpu.memory_space<vmem>>, %arg3: memref<256x128xf32, #tpu.memory_space<vmem>>) attributes {dimension_semantics = [#tpu.dimension_semantics<parallel>], iteration_bounds = array<i64: 2>, scalar_prefetch = 0 : i64, scratch_operands = 0 : i64, tpu.core_type = #tpu.core_type<tc>, window_params = [{pipeline_mode = #tpu.pipeline_mode<synchronous>, transform_indices = @transform_0, window_bounds = array<i64: 1, 128>}, {pipeline_mode = #tpu.pipeline_mode<synchronous>, transform_indices = @transform_1, window_bounds = array<i64: 1, 128>}, {transform_indices = @transform_2, window_bounds = array<i64: 256, 128>}]} {
    %0 = tpu.iota {dimensions = array<i32: 0>} : vector<256x128xi32>
    %c256_i32 = arith.constant 256 : i32
    %1 = arith.muli %arg0, %c256_i32 : i32
    %2 = vector.broadcast %1 : i32 to vector<256x128xi32>
    %3 = arith.addi %0, %2 : vector<256x128xi32>
    %4 = arith.sitofp %3 : vector<256x128xi32> to vector<256x128xf32>
    %c0 = arith.constant 0 : index
    %c0_0 = arith.constant 0 : index
    %5 = vector.load %arg1[%c0, %c0_0] : memref<1x128xf32, #tpu.memory_space<vmem>>, vector<1x128xf32>
    %6 = vector.broadcast %5 : vector<1x128xf32> to vector<256x128xf32>
    %7 = arith.mulf %4, %6 : vector<256x128xf32>
    %c0_1 = arith.constant 0 : index
    %c0_2 = arith.constant 0 : index
    %8 = vector.load %arg2[%c0_1, %c0_2] : memref<1x128xf32, #tpu.memory_space<vmem>>, vector<1x128xf32>
    %9 = vector.broadcast %8 : vector<1x128xf32> to vector<256x128xf32>
    %10 = arith.addf %7, %9 : vector<256x128xf32>
    %11 = math.sin %10 : vector<256x128xf32>
    %c0_3 = arith.constant 0 : index
    %c0_4 = arith.constant 0 : index
    %12 = vector.load %arg3[%c0_3, %c0_4] : memref<256x128xf32, #tpu.memory_space<vmem>>, vector<256x128xf32>
    tpu.vector_store %arg3[%c0_3, %c0_4], %11 {strides = array<i32>} : memref<256x128xf32, #tpu.memory_space<vmem>>, vector<256x128xf32>,
    return
  }
  func.func @transform_0(%arg0: i32) -> (i32, i32) {
    %c0_i32 = arith.constant 0 : i32
    %c0_i32_0 = arith.constant 0 : i32
    %c0_i32_1 = arith.constant 0 : i32
    return %c0_i32, %c0_i32_0 : i32, i32
  }
  func.func @transform_1(%arg0: i32) -> (i32, i32) {
    %c0_i32 = arith.constant 0 : i32
    %c0_i32_0 = arith.constant 0 : i32
    %c0_i32_1 = arith.constant 0 : i32
    return %c0_i32, %c0_i32_0 : i32, i32
  }
  func.func @transform_2(%arg0: i32) -> (i32, i32) {
    %c0_i32 = arith.constant 0 : i32
    %c0_i32_0 = arith.constant 0 : i32
    return %arg0, %c0_i32 : i32, i32
  }
}

</mosaic_0001>

<llo_original>
// kernel: tpu_custom_call.1
$region0: #{tpu_custom_call.1}
  #allocation0 [shape = 'u32[]', space=smem, size = 0x4, offset = 0x4, fixed_abs, tag = 'smem constant byte address 0x4 - core index']
  #allocation1 [shape = 'u32[72,128]{1,0:T(1,128)}', space=vmem, size = 0x9000, scoped, tag = 'internal scratch']
  %s0 = inlined_call_operand.hbm [shape: f32[1,128], index: 0, kind: input, shape index: {}]
  %s1 = inlined_call_operand.hbm [shape: f32[1,128], index: 1, kind: input, shape index: {}]
  %s2 = inlined_call_operand.hbm [shape: f32[512,128], index: 2, kind: output, shape index: {}]
  %s3 = sld [smem:[#allocation0]]
  $region49: #{tpu_custom_call.1} parent=0
    _
  %s5 = ssub.s32 1, %s3
  %s6 = scalar_select 0, %s5, %s3
  $region1: #{tpu_custom_call.1} parent=0
    #allocation2 [shape = 'u8[512]{0}', space=vmem, size = 0x400, scoped, tag = 'input window, operand 0, single buffered']
    #allocation3 [shape = 's32[2]{0}', space=sflag, size = 0x8, scoped, tag = 'scoped memory for tpu_custom_call.1']
    #allocation4 [shape = 's32[2]{0}', space=sflag, size = 0x8, scoped, tag = 'scoped memory for tpu_custom_call.1']
    #allocation5 [shape = 'u8[512]{0}', space=vmem, size = 0x400, scoped, tag = 'input window, operand 1, single buffered']
    #allocation6 [shape = 's32[1]{0}', space=sflag, size = 0x4, scoped, tag = 'scoped memory for tpu_custom_call.1']
    #allocation7 [shape = 'u8[262144]{0}', space=vmem, size = 0x40000, scoped, tag = 'output window, operand 0']
    %7 = vsyncpa [#allocation3], 0
    %8 = vsyncpa [#allocation6], 0
    %9 = vsyncpa [#allocation4], 0
    %s10 = scalar_lea.sflag [#allocation4], 1
    %11 = vsyncpa %s10, 0
    loop: start=0, step=1, limit=4
    $region2: #{tpu_custom_call.1} parent=1 // loop_pre_header
      _
    $region3: #{tpu_custom_call.1} parent=1 // loop_header
      %s13 = sphi 0, %s17
      %p14 = scmp.ge.s32.totalorder %s13, 4
      %s21 = sphi 0, %s21
      %s23 = sphi 0, %s21
      %s24 = sphi 0, %s23
      %s38 = sphi 0, %s24
      %s42 = sphi 0, %s42
      %s44 = sphi 0, %s42
      %s45 = sphi 0, %s44
      %s59 = sphi 0, %s45
      %s65 = sphi 0, %s67
      %s68 = sphi 0, %s65
      %s69 = sphi 0, %s68
      %s85 = sphi 0, %s69
    $region4: #{tpu_custom_call.1} parent=1 // loop_header_branch
      %16 = sbr.rel (%p14) target = $region8
    $region5: #{tpu_custom_call.1} parent=1 // loop_body
      %s18 = ssub.s32 %s13, 1
      %s19 = ssub.s32 %s13, 2
      %s20 = sadd.s32 %s13, 1
      %s22 = sadd.s32 %s21, 1
      %p25 = scmp.eq.s32.totalorder %s13, 1
      %p26 = scmp.ne.s32.totalorder %s21, %s23
      %p27 = scmp.eq.s32.totalorder %s13, 0
      %p28 = por %p26, %p27
      %p29 = scmp.ne.s32.totalorder %s21, %s23
      %p30 = scmp.eq.s32.totalorder %s18, 1
      %p31 = por %p29, %p30
      %p32 = scmp.ne.s32.totalorder %s23, %s24
      %p33 = scmp.eq.s32.totalorder %s18, 0
      %p34 = por %p32, %p33
      %p35 = scmp.ne.s32.totalorder %s23, %s24
      %p36 = scmp.eq.s32.totalorder %s19, 1
      %p37 = por %p35, %p36
      %p39 = scmp.ne.s32.totalorder %s24, %s38
      %p40 = scmp.eq.s32.totalorder %s19, 0
      %p41 = por %p39, %p40
      %s43 = sadd.s32 %s42, 1
      %p46 = scmp.eq.s32.totalorder %s13, 1
      %p47 = scmp.ne.s32.totalorder %s42, %s44
      %p48 = scmp.eq.s32.totalorder %s13, 0
      %p49 = por %p47, %p48
      %p50 = scmp.ne.s32.totalorder %s42, %s44
      %p51 = scmp.eq.s32.totalorder %s18, 1
      %p52 = por %p50, %p51
      %p53 = scmp.ne.s32.totalorder %s44, %s45
      %p54 = scmp.eq.s32.totalorder %s18, 0
      %p55 = por %p53, %p54
      %p56 = scmp.ne.s32.totalorder %s44, %s45
      %p57 = scmp.eq.s32.totalorder %s19, 1
      %p58 = por %p56, %p57
      %p60 = scmp.ne.s32.totalorder %s45, %s59
      %p61 = scmp.eq.s32.totalorder %s19, 0
      %p62 = por %p60, %p61
      %s63 = ssub.s32 %s13, %s20
      %p64 = scmp.eq.s32.totalorder %s63, 0
      %s66 = sadd.s32 %s65, 1
      %s67 = scalar_select %p64, %s65, %s66
      %p70 = pneg %p64
      %p71 = scmp.eq.s32.totalorder %s13, 1
      %p72 = por %p70, %p71
      %p73 = scmp.ne.s32.totalorder %s65, %s68
      %p74 = scmp.eq.s32.totalorder %s13, 0
      %p75 = por %p73, %p74
      %p76 = scmp.ne.s32.totalorder %s65, %s68
      %p77 = scmp.eq.s32.totalorder %s18, 1
      %p78 = por %p76, %p77
      %p79 = scmp.ne.s32.totalorder %s68, %s69
      %p80 = scmp.eq.s32.totalorder %s18, 0
      %p81 = por %p79, %p80
      %p82 = scmp.ne.s32.totalorder %s68, %s69
      %p83 = scmp.eq.s32.totalorder %s19, 1
      %p84 = por %p82, %p83
      %p86 = scmp.ne.s32.totalorder %s69, %s85
      %p87 = scmp.eq.s32.totalorder %s19, 0
      %p88 = por %p86, %p87
      %p89 = scmp.le.s32.totalorder 1, %s13
      %p90 = scmp.lt.s32.totalorder %s13, 3
      %p91 = pnand %p89, %p90
      %p92 = pneg %p91
      // Predicated region
      $region9: #{tpu_custom_call.1} parent=5 // pred_check
        _
      $region10: #{tpu_custom_call.1} parent=5 // pred_check_branch
        %94 = sbr.rel (%p91) target = $region12
      $region11: #{tpu_custom_call.1} parent=5 // pred_region
        %s95 = ssub.s32 %s13, 1
        // Predicated region
        $region13: #{tpu_custom_call.1} parent=11 // pred_check
          %p96 = pneg %p34
        $region14: #{tpu_custom_call.1} parent=11 // pred_check_branch
          %98 = sbr.rel (%p96) target = $region16
        $region15: #{tpu_custom_call.1} parent=11 // pred_region
          %100 = vsyncadd [#allocation3], 0
          %s102 = sshll.u32 %s0, 4
          %s103 = int_to_ptr.hbm [resolvable:$true] %s102
          %s104 = sshll.u32 [#allocation2], 4
          %s105 = int_to_ptr.vmem [resolvable:$true] %s104
          %107 = dma.hbm_to_vmem [thread:$0]  %s103, 16, %s105, [#allocation3]
        $region16: #{tpu_custom_call.1} parent=11 // pred_fallthru
          _
        // Predicated region
        $region17: #{tpu_custom_call.1} parent=11 // pred_check
          %p108 = pneg %p55
        $region18: #{tpu_custom_call.1} parent=11 // pred_check_branch
          %110 = sbr.rel (%p108) target = $region20
        $region19: #{tpu_custom_call.1} parent=11 // pred_region
          %112 = vsyncadd [#allocation6], 0
          %s114 = sshll.u32 %s1, 4
          %s115 = int_to_ptr.hbm [resolvable:$true] %s114
          %s116 = sshll.u32 [#allocation5], 4
          %s117 = int_to_ptr.vmem [resolvable:$true] %s116
          %119 = dma.hbm_to_vmem [thread:$0]  %s115, 16, %s117, [#allocation6]
        $region20: #{tpu_custom_call.1} parent=11 // pred_fallthru
          _
      $region12: #{tpu_custom_call.1} parent=5 // pred_fallthru
        _
      %p120 = scmp.lt.s32.totalorder %s13, 2
      // Predicated region
      $region21: #{tpu_custom_call.1} parent=5 // pred_check
        %p121 = pneg %p120
      $region22: #{tpu_custom_call.1} parent=5 // pred_check_branch
        %123 = sbr.rel (%p121) target = $region24
      $region23: #{tpu_custom_call.1} parent=5 // pred_region
        _
      $region24: #{tpu_custom_call.1} parent=5 // pred_fallthru
        _
      %p124 = scmp.le.s32.totalorder 1, %s13
      %p125 = scmp.lt.s32.totalorder %s13, 3
      %p126 = pnand %p124, %p125
      %p127 = pneg %p126
      // Predicated region
      $region25: #{tpu_custom_call.1} parent=5 // pred_check
        _
      $region26: #{tpu_custom_call.1} parent=5 // pred_check_branch
        %129 = sbr.rel (%p126) target = $region28
      $region27: #{tpu_custom_call.1} parent=5 // pred_region
        %s130 = ssub.s32 %s13, 1
        // Predicated region
        $region29: #{tpu_custom_call.1} parent=27 // pred_check
          %p131 = pneg %p34
        $region30: #{tpu_custom_call.1} parent=27 // pred_check_branch
          %133 = sbr.rel (%p131) target = $region32
        $region31: #{tpu_custom_call.1} parent=27 // pred_region
          %135 = dma.done [#allocation3], 16
        $region32: #{tpu_custom_call.1} parent=27 // pred_fallthru
          _
        // Predicated region
        $region33: #{tpu_custom_call.1} parent=27 // pred_check
          %p136 = pneg %p55
        $region34: #{tpu_custom_call.1} parent=27 // pred_check_branch
          %138 = sbr.rel (%p136) target = $region36
        $region35: #{tpu_custom_call.1} parent=27 // pred_region
          %140 = dma.done [#allocation6], 16
        $region36: #{tpu_custom_call.1} parent=27 // pred_fallthru
          _
        %p141 = pneg %p34
        %p142 = pneg %p31
        %p143 = pneg %p55
        %p144 = pneg %p52
        %p145 = pneg %p81
        %p146 = pneg %p78
        %s147 = sand.u32 %s68, 1
        %s148 = scalar_lea.sflag [#allocation4], %s147
        %s149 = sand.u32 %s68, 1
        %s150 = smul.addr %s149, 256
        %s151 = scalar_lea.vmem [#allocation7], %s150
        %s152 = smul.u32 32, %s18
        %v153 = vlaneseq
        %v154 = vshrl.u32 %v153, 7
        %v155 = vadd.s32 %v154, 8
        %v156 = vadd.s32 %v154, 16
        %v157 = vadd.s32 %v154, 24
        %v158 = vadd.s32 %v154, 32
        %v159 = vadd.s32 %v154, 40
        %v160 = vadd.s32 %v154, 48
        %v161 = vadd.s32 %v154, 56
        %v162 = vadd.s32 %v154, 64
        %v163 = vadd.s32 %v154, 72
        %v164 = vadd.s32 %v154, 80
        %v165 = vadd.s32 %v154, 88
        %v166 = vadd.s32 %v154, 96
        %v167 = vadd.s32 %v154, 104
        %v168 = vadd.s32 %v154, 112
        %v169 = vadd.s32 %v154, 120
        %v170 = vadd.s32 %v154, 128
        %v171 = vadd.s32 %v154, 136
        %v172 = vadd.s32 %v154, 144
        %v173 = vadd.s32 %v154, 152
        %v174 = vadd.s32 %v154, 160
        %v175 = vadd.s32 %v154, 168
        %v176 = vadd.s32 %v154, 176
        %v177 = vadd.s32 %v154, 184
        %v178 = vadd.s32 %v154, 192
        %v179 = vadd.s32 %v154, 200
        %v180 = vadd.s32 %v154, 208
        %v181 = vadd.s32 %v154, 216
        %v182 = vadd.s32 %v154, 224
        %v183 = vadd.s32 %v154, 232
        %v184 = vadd.s32 %v154, 240
        %v185 = vadd.s32 %v154, 248
        %s186 = smul.u32 %s18, 256
        %v187 = vstv %s186
        %v188 = vadd.s32 %v154, %v187
        %v189 = vadd.s32 %v155, %v187
        %v190 = vadd.s32 %v156, %v187
        %v191 = vadd.s32 %v157, %v187
        %v192 = vadd.s32 %v158, %v187
        %v193 = vadd.s32 %v159, %v187
        %v194 = vadd.s32 %v160, %v187
        %v195 = vadd.s32 %v161, %v187
        %v196 = vadd.s32 %v162, %v187
        %v197 = vadd.s32 %v163, %v187
        %v198 = vadd.s32 %v164, %v187
        %v199 = vadd.s32 %v165, %v187
        %v200 = vadd.s32 %v166, %v187
        %v201 = vadd.s32 %v167, %v187
        %v202 = vadd.s32 %v168, %v187
        %v203 = vadd.s32 %v169, %v187
        %v204 = vadd.s32 %v170, %v187
        %v205 = vadd.s32 %v171, %v187
        %v206 = vadd.s32 %v172, %v187
        %v207 = vadd.s32 %v173, %v187
        %v208 = vadd.s32 %v174, %v187
        %v209 = vadd.s32 %v175, %v187
        %v210 = vadd.s32 %v176, %v187
        %v211 = vadd.s32 %v177, %v187
        %v212 = vadd.s32 %v178, %v187
        %v213 = vadd.s32 %v179, %v187
        %v214 = vadd.s32 %v180, %v187
        %v215 = vadd.s32 %v181, %v187
        %v216 = vadd.s32 %v182, %v187
        %v217 = vadd.s32 %v183, %v187
        %v218 = vadd.s32 %v184, %v187
        %v219 = vadd.s32 %v185, %v187
        %v220 = vcvt.s32.f32 %v188
        %v221 = vcvt.s32.f32 %v189
        %v222 = vcvt.s32.f32 %v190
        %v223 = vcvt.s32.f32 %v191
        %v224 = vcvt.s32.f32 %v192
        %v225 = vcvt.s32.f32 %v193
        %v226 = vcvt.s32.f32 %v194
        %v227 = vcvt.s32.f32 %v195
        %v228 = vcvt.s32.f32 %v196
        %v229 = vcvt.s32.f32 %v197
        %v230 = vcvt.s32.f32 %v198
        %v231 = vcvt.s32.f32 %v199
        %v232 = vcvt.s32.f32 %v200
        %v233 = vcvt.s32.f32 %v201
        %v234 = vcvt.s32.f32 %v202
        %v235 = vcvt.s32.f32 %v203
        %v236 = vcvt.s32.f32 %v204
        %v237 = vcvt.s32.f32 %v205
        %v238 = vcvt.s32.f32 %v206
        %v239 = vcvt.s32.f32 %v207
        %v240 = vcvt.s32.f32 %v208
        %v241 = vcvt.s32.f32 %v209
        %v242 = vcvt.s32.f32 %v210
        %v243 = vcvt.s32.f32 %v211
        %v244 = vcvt.s32.f32 %v212
        %v245 = vcvt.s32.f32 %v213
        %v246 = vcvt.s32.f32 %v214
        %v247 = vcvt.s32.f32 %v215
        %v248 = vcvt.s32.f32 %v216
        %v249 = vcvt.s32.f32 %v217
        %v250 = vcvt.s32.f32 %v218
        %v251 = vcvt.s32.f32 %v219
        %v252 = vld [vmem:[#allocation2] sm:$0x1]
        %v254 = vperm.slane %v252, 0
        %v256 = vmul.f32 %v220, %v254
        %v257 = vmul.f32 %v221, %v254
        %v258 = vmul.f32 %v222, %v254
        %v259 = vmul.f32 %v223, %v254
        %v260 = vmul.f32 %v224, %v254
        %v261 = vmul.f32 %v225, %v254
        %v262 = vmul.f32 %v226, %v254
        %v263 = vmul.f32 %v227, %v254
        %v264 = vmul.f32 %v228, %v254
        %v265 = vmul.f32 %v229, %v254
        %v266 = vmul.f32 %v230, %v254
        %v267 = vmul.f32 %v231, %v254
        %v268 = vmul.f32 %v232, %v254
        %v269 = vmul.f32 %v233, %v254
        %v270 = vmul.f32 %v234, %v254
        %v271 = vmul.f32 %v235, %v254
        %v272 = vmul.f32 %v236, %v254
        %v273 = vmul.f32 %v237, %v254
        %v274 = vmul.f32 %v238, %v254
        %v275 = vmul.f32 %v239, %v254
        %v276 = vmul.f32 %v240, %v254
        %v277 = vmul.f32 %v241, %v254
        %v278 = vmul.f32 %v242, %v254
        %v279 = vmul.f32 %v243, %v254
        %v280 = vmul.f32 %v244, %v254
        %v281 = vmul.f32 %v245, %v254
        %v282 = vmul.f32 %v246, %v254
        %v283 = vmul.f32 %v247, %v254
        %v284 = vmul.f32 %v248, %v254
        %v285 = vmul.f32 %v249, %v254
        %v286 = vmul.f32 %v250, %v254
        %v287 = vmul.f32 %v251, %v254
        %v288 = vld [vmem:[#allocation5] sm:$0x1]
        %v290 = vperm.slane %v288, 0
        %v292 = vadd.f32 %v256, %v290
        %v293 = vadd.f32 %v257, %v290
        %v294 = vadd.f32 %v258, %v290
        %v295 = vadd.f32 %v259, %v290
        %v296 = vadd.f32 %v260, %v290
        %v297 = vadd.f32 %v261, %v290
        %v298 = vadd.f32 %v262, %v290
        %v299 = vadd.f32 %v263, %v290
        %v300 = vadd.f32 %v264, %v290
        %v301 = vadd.f32 %v265, %v290
        %v302 = vadd.f32 %v266, %v290
        %v303 = vadd.f32 %v267, %v290
        %v304 = vadd.f32 %v268, %v290
        %v305 = vadd.f32 %v269, %v290
        %v306 = vadd.f32 %v270, %v290
        %v307 = vadd.f32 %v271, %v290
        %v308 = vadd.f32 %v272, %v290
        %v309 = vadd.f32 %v273, %v290
        %v310 = vadd.f32 %v274, %v290
        %v311 = vadd.f32 %v275, %v290
        %v312 = vadd.f32 %v276, %v290
        %v313 = vadd.f32 %v277, %v290
        %v314 = vadd.f32 %v278, %v290
        %v315 = vadd.f32 %v279, %v290
        %v316 = vadd.f32 %v280, %v290
        %v317 = vadd.f32 %v281, %v290
        %v318 = vadd.f32 %v282, %v290
        %v319 = vadd.f32 %v283, %v290
        %v320 = vadd.f32 %v284, %v290
        %v321 = vadd.f32 %v285, %v290
        %v322 = vadd.f32 %v286, %v290
        %v323 = vadd.f32 %v287, %v290
        %v324 = vand.u32 2147483647, %v292
        %vm325 = vcmp.le.f32.partialorder %v324, 0.7853982
        %vm326 = vcmp.lt.s32.totalorder %v292, 0
        %v327 = vand.u32 %v292, 2139095040
        %v328 = vshrl.u32 %v327, 23
        %v329 = vsub.s32 %v328, 127
        %v330 = vand.u32 2147483647, %v292
        %v331 = vand.u32 %v330, 8388607
        %v332 = vor.u32 %v331, 8388608
        %v333 = vsub.s32 0, %v332
        %v334 = vadd.s32 %v329, 1
        %vm335 = vcmp.gt.s32.totalorder %v334, 0
        %v336 = vsel %vm335, %v334, 0
        %v337 = vshrl.u32 %v336, 5
        %v338 = vand.u32 %v336, 31
        %v339 = vsub.s32 32, %v338
        %v340 = vshrl.u32 683565275, %v339
        %v341 = vshll.u32 683565275, %v338
        %v342 = vshrl.u32 2475754826, %v339
        %v343 = vor.u32 %v341, %v342
        %v344 = vshll.u32 2475754826, %v338
        %v345 = vshrl.u32 2131351028, %v339
        %v346 = vor.u32 %v344, %v345
        %v347 = vshll.u32 2131351028, %v338
        %v348 = vshrl.u32 2102212464, %v339
        %v349 = vor.u32 %v347, %v348
        %v350 = vshll.u32 2102212464, %v338
        %v351 = vshrl.u32 920167782, %v339
        %v352 = vor.u32 %v350, %v351
        %v353 = vshll.u32 920167782, %v338
        %v354 = vshrl.u32 1326507024, %v339
        %v355 = vor.u32 %v353, %v354
        %vm356 = vcmp.lt.s32.totalorder %v337, 1
        %vm357 = vcmp.lt.s32.totalorder %v337, 2
        %vm358 = vcmp.lt.s32.totalorder %v337, 3
        %vm359 = vcmp.lt.s32.totalorder %v337, 4
        %v360 = vsel %vm356, %v340, %v343
        %v361 = vsel %vm359, %v349, 2102212464
        %v362 = vsel %vm358, %v346, %v361
        %v363 = vsel %vm357, %v360, %v362
        %v364 = vsel %vm356, %v343, %v346
        %v365 = vsel %vm359, %v352, 920167782
        %v366 = vsel %vm358, %v349, %v365
        %v367 = vsel %vm357, %v364, %v366
        %v368 = vsel %vm356, %v346, %v349
        %v369 = vsel %vm359, %v355, 1326507024
        %v370 = vsel %vm358, %v352, %v369
        %v371 = vsel %vm357, %v368, %v370
        %v372 = vshll.u32 %v332, 8
        %v373 = vand.u32 %v372, 65535
        %v374 = vshrl.u32 %v372, 16
        %v375 = vand.u32 %v371, 65535
        %v376 = vshrl.u32 %v371, 16
        %v377 = vmul.u32 %v373, %v375
        %v378 = vmul.u32 %v373, %v376
        %v379 = vmul.u32 %v374, %v375
        %v380 = vmul.u32 %v374, %v376
        %v381 = vshll.u32 %v378, 16
        %v382 = vshrl.u32 %v378, 16
        %v383 = vshll.u32 %v379, 16
        %v384 = vshrl.u32 %v379, 16
        %vm385 = vc.u32 %v377, %v381
        %v386 = vsel %vm385, 1, 0
        %v387 = vadd.s32 %v377, %v381
        %v388 = vadd.s32 %v380, %v386
        %vm389 = vc.u32 %v387, %v383
        %v390 = vsel %vm389, 1, 0
        %v391 = vadd.s32 %v387, %v383
        %v392 = vadd.s32 %v388, %v390
        %v393 = vadd.s32 %v392, %v382
        %v394 = vadd.s32 %v393, %v384
        %v395 = vand.u32 %v372, 65535
        %v396 = vshrl.u32 %v372, 16
        %v397 = vand.u32 %v367, 65535
        %v398 = vshrl.u32 %v367, 16
        %v399 = vmul.u32 %v395, %v397
        %v400 = vmul.u32 %v395, %v398
        %v401 = vmul.u32 %v396, %v397
        %v402 = vmul.u32 %v396, %v398
        %v403 = vshll.u32 %v400, 16
        %v404 = vshrl.u32 %v400, 16
        %v405 = vshll.u32 %v401, 16
        %v406 = vshrl.u32 %v401, 16
        %vm407 = vc.u32 %v399, %v403
        %v408 = vsel %vm407, 1, 0
        %v409 = vadd.s32 %v399, %v403
        %v410 = vadd.s32 %v402, %v408
        %vm411 = vc.u32 %v409, %v405
        %v412 = vsel %vm411, 1, 0
        %v413 = vadd.s32 %v409, %v405
        %v414 = vadd.s32 %v410, %v412
        %v415 = vadd.s32 %v414, %v404
        %v416 = vadd.s32 %v415, %v406
        %v417 = vmul.u32 %v372, %v363
        %v418 = vadd.s32 %v394, %v413
        %vm419 = vc.u32 %v394, %v413
        %v420 = vadd.s32 %v416, 1
        %v421 = vsel %vm419, %v420, %v416
        %v422 = vadd.s32 %v417, %v421
        %v423 = vadd.s32 %v422, 536870912
        %v424 = vshrl.u32 %v423, 30
        %v425 = vshll.u32 %v424, 30
        %v426 = vsub.s32 %v422, %v425
        %vm427 = vcmp.lt.s32.totalorder %v426, 0
        %v428 = vsub.s32 0, %v426
        %v429 = vsel %vm427, %v428, %v426
        %v430 = vclz %v429
        %v431 = vsub.s32 %v430, 2
        %vm432 = vcmp.gt.s32.totalorder 0, %v431
        %v433 = vsel %vm432, 0, %v431
        %v434 = vsub.s32 32, %v433
        %v435 = vshll.u32 %v426, %v433
        %v436 = vshrl.u32 %v418, %v434
        %v437 = vor.u32 %v435, %v436
        %v438 = vsub.s32 4294967266, %v433
        %v439 = vadd.s32 %v438, 127
        %v440 = vshll.u32 %v439, 23
        %v441 = vor.u32 4788187, %v440
        %v442 = vand.u32 2147483647, %v441
        %v444 = vcvt.s32.f32 %v437
        %v445 = vmul.f32 %v444, %v442
        %v446 = vxor.u32 %v445, 2147483648
        %v447 = vsel %vm326, %v446, %v445
        %v448 = vsub.s32 4, %v424
        %v449 = vsel %vm326, %v448, %v424
        %v450 = vsel %vm325, %v292, %v447
        %v451 = vsel %vm325, 0, %v449
        %v452 = vmul.f32 %v450, %v450
        %v453 = vmul.f32 %v452, -0.001358992
        %v454 = vadd.f32 %v453, 0.041655596
        %v455 = vmul.f32 %v452, %v454
        %v456 = vadd.f32 %v455, -0.4999988
        %v457 = vmul.f32 %v452, %v456
        %v458 = vadd.f32 1.0, %v457
        %v459 = vmul.f32 %v450, %v450
        %v460 = vmul.f32 %v459, -0.00019511016
        %v461 = vadd.f32 %v460, 0.008332121
        %v462 = vmul.f32 %v459, %v461
        %v463 = vadd.f32 %v462, -0.16666654
        %v464 = vmul.f32 %v459, %v463
        %v465 = vadd.f32 %v464, 1.0
        %v466 = vmul.f32 %v465, %v450
        %vm467 = vweird.f32 %v292
        %v468 = vadd.s32 %v451, 3
        %v469 = vand.u32 %v468, 3
        %vm470 = vcmp.lt.s32.totalorder %v469, 2
        %vm471 = vcmp.eq.s32.totalorder %v469, 0
        %v472 = vxor.u32 %v466, 2147483648
        %v473 = vsel %vm471, %v458, %v472
        %vm474 = vcmp.eq.s32.totalorder %v469, 2
        %v475 = vxor.u32 %v458, 2147483648
        %v476 = vsel %vm474, %v475, %v466
        %v477 = vsel %vm470, %v473, %v476
        %v478 = vsel %vm467, nan, %v477
        %v479 = vand.u32 2147483647, %v293
        %vm480 = vcmp.le.f32.partialorder %v479, 0.7853982
        %vm481 = vcmp.lt.s32.totalorder %v293, 0
        %v482 = vand.u32 %v293, 2139095040
        %v483 = vshrl.u32 %v482, 23
        %v484 = vsub.s32 %v483, 127
        %v485 = vand.u32 2147483647, %v293
        %v486 = vand.u32 %v485, 8388607
        %v487 = vor.u32 %v486, 8388608
        %v488 = vsub.s32 0, %v487
        %v489 = vadd.s32 %v484, 1
        %vm490 = vcmp.gt.s32.totalorder %v489, 0
        %v491 = vsel %vm490, %v489, 0
        %v492 = vshrl.u32 %v491, 5
        %v493 = vand.u32 %v491, 31
        %v494 = vsub.s32 32, %v493
        %v495 = vshrl.u32 683565275, %v494
        %v496 = vshll.u32 683565275, %v493
        %v497 = vshrl.u32 2475754826, %v494
        %v498 = vor.u32 %v496, %v497
        %v499 = vshll.u32 2475754826, %v493
        %v500 = vshrl.u32 2131351028, %v494
        %v501 = vor.u32 %v499, %v500
        %v502 = vshll.u32 2131351028, %v493
        %v503 = vshrl.u32 2102212464, %v494
        %v504 = vor.u32 %v502, %v503
        %v505 = vshll.u32 2102212464, %v493
        %v506 = vshrl.u32 920167782, %v494
        %v507 = vor.u32 %v505, %v506
        %v508 = vshll.u32 920167782, %v493
        %v509 = vshrl.u32 1326507024, %v494
        %v510 = vor.u32 %v508, %v509
        %vm511 = vcmp.lt.s32.totalorder %v492, 1
        %vm512 = vcmp.lt.s32.totalorder %v492, 2
        %vm513 = vcmp.lt.s32.totalorder %v492, 3
        %vm514 = vcmp.lt.s32.totalorder %v492, 4
        %v515 = vsel %vm511, %v495, %v498
        %v516 = vsel %vm514, %v504, 2102212464
        %v517 = vsel %vm513, %v501, %v516
        %v518 = vsel %vm512, %v515, %v517
        %v519 = vsel %vm511, %v498, %v501
        %v520 = vsel %vm514, %v507, 920167782
        %v521 = vsel %vm513, %v504, %v520
        %v522 = vsel %vm512, %v519, %v521
        %v523 = vsel %vm511, %v501, %v504
        %v524 = vsel %vm514, %v510, 1326507024
        %v525 = vsel %vm513, %v507, %v524
        %v526 = vsel %vm512, %v523, %v525
        %v527 = vshll.u32 %v487, 8
        %v528 = vand.u32 %v527, 65535
        %v529 = vshrl.u32 %v527, 16
        %v530 = vand.u32 %v526, 65535
        %v531 = vshrl.u32 %v526, 16
        %v532 = vmul.u32 %v528, %v530
        %v533 = vmul.u32 %v528, %v531
        %v534 = vmul.u32 %v529, %v530
        %v535 = vmul.u32 %v529, %v531
        %v536 = vshll.u32 %v533, 16
        %v537 = vshrl.u32 %v533, 16
        %v538 = vshll.u32 %v534, 16
        %v539 = vshrl.u32 %v534, 16
        %vm540 = vc.u32 %v532, %v536
        %v541 = vsel %vm540, 1, 0
        %v542 = vadd.s32 %v532, %v536
        %v543 = vadd.s32 %v535, %v541
        %vm544 = vc.u32 %v542, %v538
        %v545 = vsel %vm544, 1, 0
        %v546 = vadd.s32 %v542, %v538
        %v547 = vadd.s32 %v543, %v545
        %v548 = vadd.s32 %v547, %v537
        %v549 = vadd.s32 %v548, %v539
        %v550 = vand.u32 %v527, 65535
        %v551 = vshrl.u32 %v527, 16
        %v552 = vand.u32 %v522, 65535
        %v553 = vshrl.u32 %v522, 16
        %v554 = vmul.u32 %v550, %v552
        %v555 = vmul.u32 %v550, %v553
        %v556 = vmul.u32 %v551, %v552
        %v557 = vmul.u32 %v551, %v553
        %v558 = vshll.u32 %v555, 16
        %v559 = vshrl.u32 %v555, 16
        %v560 = vshll.u32 %v556, 16
        %v561 = vshrl.u32 %v556, 16
        %vm562 = vc.u32 %v554, %v558
        %v563 = vsel %vm562, 1, 0
        %v564 = vadd.s32 %v554, %v558
        %v565 = vadd.s32 %v557, %v563
        %vm566 = vc.u32 %v564, %v560
        %v567 = vsel %vm566, 1, 0
        %v568 = vadd.s32 %v564, %v560
        %v569 = vadd.s32 %v565, %v567
        %v570 = vadd.s32 %v569, %v559
        %v571 = vadd.s32 %v570, %v561
        %v572 = vmul.u32 %v527, %v518
        %v573 = vadd.s32 %v549, %v568
        %vm574 = vc.u32 %v549, %v568
        %v575 = vadd.s32 %v571, 1
        %v576 = vsel %vm574, %v575, %v571
        %v577 = vadd.s32 %v572, %v576
        %v578 = vadd.s32 %v577, 536870912
        %v579 = vshrl.u32 %v578, 30
        %v580 = vshll.u32 %v579, 30
        %v581 = vsub.s32 %v577, %v580
        %vm582 = vcmp.lt.s32.totalorder %v581, 0
        %v583 = vsub.s32 0, %v581
        %v584 = vsel %vm582, %v583, %v581
        %v585 = vclz %v584
        %v586 = vsub.s32 %v585, 2
        %vm587 = vcmp.gt.s32.totalorder 0, %v586
        %v588 = vsel %vm587, 0, %v586
        %v589 = vsub.s32 32, %v588
        %v590 = vshll.u32 %v581, %v588
        %v591 = vshrl.u32 %v573, %v589
        %v592 = vor.u32 %v590, %v591
        %v593 = vsub.s32 4294967266, %v588
        %v594 = vadd.s32 %v593, 127
        %v595 = vshll.u32 %v594, 23
        %v596 = vor.u32 4788187, %v595
        %v597 = vand.u32 2147483647, %v596
        %v599 = vcvt.s32.f32 %v592
        %v600 = vmul.f32 %v599, %v597
        %v601 = vxor.u32 %v600, 2147483648
        %v602 = vsel %vm481, %v601, %v600
        %v603 = vsub.s32 4, %v579
        %v604 = vsel %vm481, %v603, %v579
        %v605 = vsel %vm480, %v293, %v602
        %v606 = vsel %vm480, 0, %v604
        %v607 = vmul.f32 %v605, %v605
        %v608 = vmul.f32 %v607, -0.001358992
        %v609 = vadd.f32 %v608, 0.041655596
        %v610 = vmul.f32 %v607, %v609
        %v611 = vadd.f32 %v610, -0.4999988
        %v612 = vmul.f32 %v607, %v611
        %v613 = vadd.f32 1.0, %v612
        %v614 = vmul.f32 %v605, %v605
        %v615 = vmul.f32 %v614, -0.00019511016
        %v616 = vadd.f32 %v615, 0.008332121
        %v617 = vmul.f32 %v614, %v616
        %v618 = vadd.f32 %v617, -0.16666654
        %v619 = vmul.f32 %v614, %v618
        %v620 = vadd.f32 %v619, 1.0
        %v621 = vmul.f32 %v620, %v605
        %vm622 = vweird.f32 %v293
        %v623 = vadd.s32 %v606, 3
        %v624 = vand.u32 %v623, 3
        %vm625 = vcmp.lt.s32.totalorder %v624, 2
        %vm626 = vcmp.eq.s32.totalorder %v624, 0
        %v627 = vxor.u32 %v621, 2147483648
        %v628 = vsel %vm626, %v613, %v627
        %vm629 = vcmp.eq.s32.totalorder %v624, 2
        %v630 = vxor.u32 %v613, 2147483648
        %v631 = vsel %vm629, %v630, %v621
        %v632 = vsel %vm625, %v628, %v631
        %v633 = vsel %vm622, nan, %v632
        %v634 = vand.u32 2147483647, %v294
        %vm635 = vcmp.le.f32.partialorder %v634, 0.7853982
        %vm636 = vcmp.lt.s32.totalorder %v294, 0
        %v637 = vand.u32 %v294, 2139095040
        %v638 = vshrl.u32 %v637, 23
        %v639 = vsub.s32 %v638, 127
        %v640 = vand.u32 2147483647, %v294
        %v641 = vand.u32 %v640, 8388607
        %v642 = vor.u32 %v641, 8388608
        %v643 = vsub.s32 0, %v642
        %v644 = vadd.s32 %v639, 1
        %vm645 = vcmp.gt.s32.totalorder %v644, 0
        %v646 = vsel %vm645, %v644, 0
        %v647 = vshrl.u32 %v646, 5
        %v648 = vand.u32 %v646, 31
        %v649 = vsub.s32 32, %v648
        %v650 = vshrl.u32 683565275, %v649
        %v651 = vshll.u32 683565275, %v648
        %v652 = vshrl.u32 2475754826, %v649
        %v653 = vor.u32 %v651, %v652
        %v654 = vshll.u32 2475754826, %v648
        %v655 = vshrl.u32 2131351028, %v649
        %v656 = vor.u32 %v654, %v655
        %v657 = vshll.u32 2131351028, %v648
        %v658 = vshrl.u32 2102212464, %v649
        %v659 = vor.u32 %v657, %v658
        %v660 = vshll.u32 2102212464, %v648
        %v661 = vshrl.u32 920167782, %v649
        %v662 = vor.u32 %v660, %v661
        %v663 = vshll.u32 920167782, %v648
        %v664 = vshrl.u32 1326507024, %v649
        %v665 = vor.u32 %v663, %v664
        %vm666 = vcmp.lt.s32.totalorder %v647, 1
        %vm667 = vcmp.lt.s32.totalorder %v647, 2
        %vm668 = vcmp.lt.s32.totalorder %v647, 3
        %vm669 = vcmp.lt.s32.totalorder %v647, 4
        %v670 = vsel %vm666, %v650, %v653
        %v671 = vsel %vm669, %v659, 2102212464
        %v672 = vsel %vm668, %v656, %v671
        %v673 = vsel %vm667, %v670, %v672
        %v674 = vsel %vm666, %v653, %v656
        %v675 = vsel %vm669, %v662, 920167782
        %v676 = vsel %vm668, %v659, %v675
        %v677 = vsel %vm667, %v674, %v676
        %v678 = vsel %vm666, %v656, %v659
        %v679 = vsel %vm669, %v665, 1326507024
        %v680 = vsel %vm668, %v662, %v679
        %v681 = vsel %vm667, %v678, %v680
        %v682 = vshll.u32 %v642, 8
        %v683 = vand.u32 %v682, 65535
        %v684 = vshrl.u32 %v682, 16
        %v685 = vand.u32 %v681, 65535
        %v686 = vshrl.u32 %v681, 16
        %v687 = vmul.u32 %v683, %v685
        %v688 = vmul.u32 %v683, %v686
        %v689 = vmul.u32 %v684, %v685
        %v690 = vmul.u32 %v684, %v686
        %v691 = vshll.u32 %v688, 16
        %v692 = vshrl.u32 %v688, 16
        %v693 = vshll.u32 %v689, 16
        %v694 = vshrl.u32 %v689, 16
        %vm695 = vc.u32 %v687, %v691
        %v696 = vsel %vm695, 1, 0
        %v697 = vadd.s32 %v687, %v691
        %v698 = vadd.s32 %v690, %v696
        %vm699 = vc.u32 %v697, %v693
        %v700 = vsel %vm699, 1, 0
        %v701 = vadd.s32 %v697, %v693
        %v702 = vadd.s32 %v698, %v700
        %v703 = vadd.s32 %v702, %v692
        %v704 = vadd.s32 %v703, %v694
        %v705 = vand.u32 %v682, 65535
        %v706 = vshrl.u32 %v682, 16
        %v707 = vand.u32 %v677, 65535
        %v708 = vshrl.u32 %v677, 16
        %v709 = vmul.u32 %v705, %v707
        %v710 = vmul.u32 %v705, %v708
        %v711 = vmul.u32 %v706, %v707
        %v712 = vmul.u32 %v706, %v708
        %v713 = vshll.u32 %v710, 16
        %v714 = vshrl.u32 %v710, 16
        %v715 = vshll.u32 %v711, 16
        %v716 = vshrl.u32 %v711, 16
        %vm717 = vc.u32 %v709, %v713
        %v718 = vsel %vm717, 1, 0
        %v719 = vadd.s32 %v709, %v713
        %v720 = vadd.s32 %v712, %v718
        %vm721 = vc.u32 %v719, %v715
        %v722 = vsel %vm721, 1, 0
        %v723 = vadd.s32 %v719, %v715
        %v724 = vadd.s32 %v720, %v722
        %v725 = vadd.s32 %v724, %v714
        %v726 = vadd.s32 %v725, %v716
        %v727 = vmul.u32 %v682, %v673
        %v728 = vadd.s32 %v704, %v723
        %vm729 = vc.u32 %v704, %v723
        %v730 = vadd.s32 %v726, 1
        %v731 = vsel %vm729, %v730, %v726
        %v732 = vadd.s32 %v727, %v731
        %v733 = vadd.s32 %v732, 536870912
        %v734 = vshrl.u32 %v733, 30
        %v735 = vshll.u32 %v734, 30
        %v736 = vsub.s32 %v732, %v735
        %vm737 = vcmp.lt.s32.totalorder %v736, 0
        %v738 = vsub.s32 0, %v736
        %v739 = vsel %vm737, %v738, %v736
        %v740 = vclz %v739
        %v741 = vsub.s32 %v740, 2
        %vm742 = vcmp.gt.s32.totalorder 0, %v741
        %v743 = vsel %vm742, 0, %v741
        %v744 = vsub.s32 32, %v743
        %v745 = vshll.u32 %v736, %v743
        %v746 = vshrl.u32 %v728, %v744
        %v747 = vor.u32 %v745, %v746
        %v748 = vsub.s32 4294967266, %v743
        %v749 = vadd.s32 %v748, 127
        %v750 = vshll.u32 %v749, 23
        %v751 = vor.u32 4788187, %v750
        %v752 = vand.u32 2147483647, %v751
        %v754 = vcvt.s32.f32 %v747
        %v755 = vmul.f32 %v754, %v752
        %v756 = vxor.u32 %v755, 2147483648
        %v757 = vsel %vm636, %v756, %v755
        %v758 = vsub.s32 4, %v734
        %v759 = vsel %vm636, %v758, %v734
        %v760 = vsel %vm635, %v294, %v757
        %v761 = vsel %vm635, 0, %v759
        %v762 = vmul.f32 %v760, %v760
        %v763 = vmul.f32 %v762, -0.001358992
        %v764 = vadd.f32 %v763, 0.041655596
        %v765 = vmul.f32 %v762, %v764
        %v766 = vadd.f32 %v765, -0.4999988
        %v767 = vmul.f32 %v762, %v766
        %v768 = vadd.f32 1.0, %v767
        %v769 = vmul.f32 %v760, %v760
        %v770 = vmul.f32 %v769, -0.00019511016
        %v771 = vadd.f32 %v770, 0.008332121
        %v772 = vmul.f32 %v769, %v771
        %v773 = vadd.f32 %v772, -0.16666654
        %v774 = vmul.f32 %v769, %v773
        %v775 = vadd.f32 %v774, 1.0
        %v776 = vmul.f32 %v775, %v760
        %vm777 = vweird.f32 %v294
        %v778 = vadd.s32 %v761, 3
        %v779 = vand.u32 %v778, 3
        %vm780 = vcmp.lt.s32.totalorder %v779, 2
        %vm781 = vcmp.eq.s32.totalorder %v779, 0
        %v782 = vxor.u32 %v776, 2147483648
        %v783 = vsel %vm781, %v768, %v782
        %vm784 = vcmp.eq.s32.totalorder %v779, 2
        %v785 = vxor.u32 %v768, 2147483648
        %v786 = vsel %vm784, %v785, %v776
        %v787 = vsel %vm780, %v783, %v786
        %v788 = vsel %vm777, nan, %v787
        %v789 = vand.u32 2147483647, %v295
        %vm790 = vcmp.le.f32.partialorder %v789, 0.7853982
        %vm791 = vcmp.lt.s32.totalorder %v295, 0
        %v792 = vand.u32 %v295, 2139095040
        %v793 = vshrl.u32 %v792, 23
        %v794 = vsub.s32 %v793, 127
        %v795 = vand.u32 2147483647, %v295
        %v796 = vand.u32 %v795, 8388607
        %v797 = vor.u32 %v796, 8388608
        %v798 = vsub.s32 0, %v797
        %v799 = vadd.s32 %v794, 1
        %vm800 = vcmp.gt.s32.totalorder %v799, 0
        %v801 = vsel %vm800, %v799, 0
        %v802 = vshrl.u32 %v801, 5
        %v803 = vand.u32 %v801, 31
        %v804 = vsub.s32 32, %v803
        %v805 = vshrl.u32 683565275, %v804
        %v806 = vshll.u32 683565275, %v803
        %v807 = vshrl.u32 2475754826, %v804
        %v808 = vor.u32 %v806, %v807
        %v809 = vshll.u32 2475754826, %v803
        %v810 = vshrl.u32 2131351028, %v804
        %v811 = vor.u32 %v809, %v810
        %v812 = vshll.u32 2131351028, %v803
        %v813 = vshrl.u32 2102212464, %v804
        %v814 = vor.u32 %v812, %v813
        %v815 = vshll.u32 2102212464, %v803
        %v816 = vshrl.u32 920167782, %v804
        %v817 = vor.u32 %v815, %v816
        %v818 = vshll.u32 920167782, %v803
        %v819 = vshrl.u32 1326507024, %v804
        %v820 = vor.u32 %v818, %v819
        %vm821 = vcmp.lt.s32.totalorder %v802, 1
        %vm822 = vcmp.lt.s32.totalorder %v802, 2
        %vm823 = vcmp.lt.s32.totalorder %v802, 3
        %vm824 = vcmp.lt.s32.totalorder %v802, 4
        %v825 = vsel %vm821, %v805, %v808
        %v826 = vsel %vm824, %v814, 2102212464
        %v827 = vsel %vm823, %v811, %v826
        %v828 = vsel %vm822, %v825, %v827
        %v829 = vsel %vm821, %v808, %v811
        %v830 = vsel %vm824, %v817, 920167782
        %v831 = vsel %vm823, %v814, %v830
        %v832 = vsel %vm822, %v829, %v831
        %v833 = vsel %vm821, %v811, %v814
        %v834 = vsel %vm824, %v820, 1326507024
        %v835 = vsel %vm823, %v817, %v834
        %v836 = vsel %vm822, %v833, %v835
        %v837 = vshll.u32 %v797, 8
        %v838 = vand.u32 %v837, 65535
        %v839 = vshrl.u32 %v837, 16
        %v840 = vand.u32 %v836, 65535
        %v841 = vshrl.u32 %v836, 16
        %v842 = vmul.u32 %v838, %v840
        %v843 = vmul.u32 %v838, %v841
        %v844 = vmul.u32 %v839, %v840
        %v845 = vmul.u32 %v839, %v841
        %v846 = vshll.u32 %v843, 16
        %v847 = vshrl.u32 %v843, 16
        %v848 = vshll.u32 %v844, 16
        %v849 = vshrl.u32 %v844, 16
        %vm850 = vc.u32 %v842, %v846
        %v851 = vsel %vm850, 1, 0
        %v852 = vadd.s32 %v842, %v846
        %v853 = vadd.s32 %v845, %v851
        %vm854 = vc.u32 %v852, %v848
        %v855 = vsel %vm854, 1, 0
        %v856 = vadd.s32 %v852, %v848
        %v857 = vadd.s32 %v853, %v855
        %v858 = vadd.s32 %v857, %v847
        %v859 = vadd.s32 %v858, %v849
        %v860 = vand.u32 %v837, 65535
        %v861 = vshrl.u32 %v837, 16
        %v862 = vand.u32 %v832, 65535
        %v863 = vshrl.u32 %v832, 16
        %v864 = vmul.u32 %v860, %v862
        %v865 = vmul.u32 %v860, %v863
        %v866 = vmul.u32 %v861, %v862
        %v867 = vmul.u32 %v861, %v863
        %v868 = vshll.u32 %v865, 16
        %v869 = vshrl.u32 %v865, 16
        %v870 = vshll.u32 %v866, 16
        %v871 = vshrl.u32 %v866, 16
        %vm872 = vc.u32 %v864, %v868
        %v873 = vsel %vm872, 1, 0
        %v874 = vadd.s32 %v864, %v868
        %v875 = vadd.s32 %v867, %v873
        %vm876 = vc.u32 %v874, %v870
        %v877 = vsel %vm876, 1, 0
        %v878 = vadd.s32 %v874, %v870
        %v879 = vadd.s32 %v875, %v877
        %v880 = vadd.s32 %v879, %v869
        %v881 = vadd.s32 %v880, %v871
        %v882 = vmul.u32 %v837, %v828
        %v883 = vadd.s32 %v859, %v878
        %vm884 = vc.u32 %v859, %v878
        %v885 = vadd.s32 %v881, 1
        %v886 = vsel %vm884, %v885, %v881
        %v887 = vadd.s32 %v882, %v886
        %v888 = vadd.s32 %v887, 536870912
        %v889 = vshrl.u32 %v888, 30
        %v890 = vshll.u32 %v889, 30
        %v891 = vsub.s32 %v887, %v890
        %vm892 = vcmp.lt.s32.totalorder %v891, 0
        %v893 = vsub.s32 0, %v891
        %v894 = vsel %vm892, %v893, %v891
        %v895 = vclz %v894
        %v896 = vsub.s32 %v895, 2
        %vm897 = vcmp.gt.s32.totalorder 0, %v896
        %v898 = vsel %vm897, 0, %v896
        %v899 = vsub.s32 32, %v898
        %v900 = vshll.u32 %v891, %v898
        %v901 = vshrl.u32 %v883, %v899
        %v902 = vor.u32 %v900, %v901
        %v903 = vsub.s32 4294967266, %v898
        %v904 = vadd.s32 %v903, 127
        %v905 = vshll.u32 %v904, 23
        %v906 = vor.u32 4788187, %v905
        %v907 = vand.u32 2147483647, %v906
        %v909 = vcvt.s32.f32 %v902
        %v910 = vmul.f32 %v909, %v907
        %v911 = vxor.u32 %v910, 2147483648
        %v912 = vsel %vm791, %v911, %v910
        %v913 = vsub.s32 4, %v889
        %v914 = vsel %vm791, %v913, %v889
        %v915 = vsel %vm790, %v295, %v912
        %v916 = vsel %vm790, 0, %v914
        %v917 = vmul.f32 %v915, %v915
        %v918 = vmul.f32 %v917, -0.001358992
        %v919 = vadd.f32 %v918, 0.041655596
        %v920 = vmul.f32 %v917, %v919
        %v921 = vadd.f32 %v920, -0.4999988
        %v922 = vmul.f32 %v917, %v921
        %v923 = vadd.f32 1.0, %v922
        %v924 = vmul.f32 %v915, %v915
        %v925 = vmul.f32 %v924, -0.00019511016
        %v926 = vadd.f32 %v925, 0.008332121
        %v927 = vmul.f32 %v924, %v926
        %v928 = vadd.f32 %v927, -0.16666654
        %v929 = vmul.f32 %v924, %v928
        %v930 = vadd.f32 %v929, 1.0
        %v931 = vmul.f32 %v930, %v915
        %vm932 = vweird.f32 %v295
        %v933 = vadd.s32 %v916, 3
        %v934 = vand.u32 %v933, 3
        %vm935 = vcmp.lt.s32.totalorder %v934, 2
        %vm936 = vcmp.eq.s32.totalorder %v934, 0
        %v937 = vxor.u32 %v931, 2147483648
        %v938 = vsel %vm936, %v923, %v937
        %vm939 = vcmp.eq.s32.totalorder %v934, 2
        %v940 = vxor.u32 %v923, 2147483648
        %v941 = vsel %vm939, %v940, %v931
        %v942 = vsel %vm935, %v938, %v941
        %v943 = vsel %vm932, nan, %v942
        %v944 = vand.u32 2147483647, %v296
        %vm945 = vcmp.le.f32.partialorder %v944, 0.7853982
        %vm946 = vcmp.lt.s32.totalorder %v296, 0
        %v947 = vand.u32 %v296, 2139095040
        %v948 = vshrl.u32 %v947, 23
        %v949 = vsub.s32 %v948, 127
        %v950 = vand.u32 2147483647, %v296
        %v951 = vand.u32 %v950, 8388607
        %v952 = vor.u32 %v951, 8388608
        %v953 = vsub.s32 0, %v952
        %v954 = vadd.s32 %v949, 1
        %vm955 = vcmp.gt.s32.totalorder %v954, 0
        %v956 = vsel %vm955, %v954, 0
        %v957 = vshrl.u32 %v956, 5
        %v958 = vand.u32 %v956, 31
        %v959 = vsub.s32 32, %v958
        %v960 = vshrl.u32 683565275, %v959
        %v961 = vshll.u32 683565275, %v958
        %v962 = vshrl.u32 2475754826, %v959
        %v963 = vor.u32 %v961, %v962
        %v964 = vshll.u32 2475754826, %v958
        %v965 = vshrl.u32 2131351028, %v959
        %v966 = vor.u32 %v964, %v965
        %v967 = vshll.u32 2131351028, %v958
        %v968 = vshrl.u32 2102212464, %v959
        %v969 = vor.u32 %v967, %v968
        %v970 = vshll.u32 2102212464, %v958
        %v971 = vshrl.u32 920167782, %v959
        %v972 = vor.u32 %v970, %v971
        %v973 = vshll.u32 920167782, %v958
        %v974 = vshrl.u32 1326507024, %v959
        %v975 = vor.u32 %v973, %v974
        %vm976 = vcmp.lt.s32.totalorder %v957, 1
        %vm977 = vcmp.lt.s32.totalorder %v957, 2
        %vm978 = vcmp.lt.s32.totalorder %v957, 3
        %vm979 = vcmp.lt.s32.totalorder %v957, 4
        %v980 = vsel %vm976, %v960, %v963
        %v981 = vsel %vm979, %v969, 2102212464
        %v982 = vsel %vm978, %v966, %v981
        %v983 = vsel %vm977, %v980, %v982
        %v984 = vsel %vm976, %v963, %v966
        %v985 = vsel %vm979, %v972, 920167782
        %v986 = vsel %vm978, %v969, %v985
        %v987 = vsel %vm977, %v984, %v986
        %v988 = vsel %vm976, %v966, %v969
        %v989 = vsel %vm979, %v975, 1326507024
        %v990 = vsel %vm978, %v972, %v989
        %v991 = vsel %vm977, %v988, %v990
        %v992 = vshll.u32 %v952, 8
        %v993 = vand.u32 %v992, 65535
        %v994 = vshrl.u32 %v992, 16
        %v995 = vand.u32 %v991, 65535
        %v996 = vshrl.u32 %v991, 16
        %v997 = vmul.u32 %v993, %v995
        %v998 = vmul.u32 %v993, %v996
        %v999 = vmul.u32 %v994, %v995
        %v1000 = vmul.u32 %v994, %v996
        %v1001 = vshll.u32 %v998, 16
        %v1002 = vshrl.u32 %v998, 16
        %v1003 = vshll.u32 %v999, 16
        %v1004 = vshrl.u32 %v999, 16
        %vm1005 = vc.u32 %v997, %v1001
        %v1006 = vsel %vm1005, 1, 0
        %v1007 = vadd.s32 %v997, %v1001
        %v1008 = vadd.s32 %v1000, %v1006
        %vm1009 = vc.u32 %v1007, %v1003
        %v1010 = vsel %vm1009, 1, 0
        %v1011 = vadd.s32 %v1007, %v1003
        %v1012 = vadd.s32 %v1008, %v1010
        %v1013 = vadd.s32 %v1012, %v1002
        %v1014 = vadd.s32 %v1013, %v1004
        %v1015 = vand.u32 %v992, 65535
        %v1016 = vshrl.u32 %v992, 16
        %v1017 = vand.u32 %v987, 65535
        %v1018 = vshrl.u32 %v987, 16
        %v1019 = vmul.u32 %v1015, %v1017
        %v1020 = vmul.u32 %v1015, %v1018
        %v1021 = vmul.u32 %v1016, %v1017
        %v1022 = vmul.u32 %v1016, %v1018
        %v1023 = vshll.u32 %v1020, 16
        %v1024 = vshrl.u32 %v1020, 16
        %v1025 = vshll.u32 %v1021, 16
        %v1026 = vshrl.u32 %v1021, 16
        %vm1027 = vc.u32 %v1019, %v1023
        %v1028 = vsel %vm1027, 1, 0
        %v1029 = vadd.s32 %v1019, %v1023
        %v1030 = vadd.s32 %v1022, %v1028
        %vm1031 = vc.u32 %v1029, %v1025
        %v1032 = vsel %vm1031, 1, 0
        %v1033 = vadd.s32 %v1029, %v1025
        %v1034 = vadd.s32 %v1030, %v1032
        %v1035 = vadd.s32 %v1034, %v1024
        %v1036 = vadd.s32 %v1035, %v1026
        %v1037 = vmul.u32 %v992, %v983
        %v1038 = vadd.s32 %v1014, %v1033
        %vm1039 = vc.u32 %v1014, %v1033
        %v1040 = vadd.s32 %v1036, 1
        %v1041 = vsel %vm1039, %v1040, %v1036
        %v1042 = vadd.s32 %v1037, %v1041
        %v1043 = vadd.s32 %v1042, 536870912
        %v1044 = vshrl.u32 %v1043, 30
        %v1045 = vshll.u32 %v1044, 30
        %v1046 = vsub.s32 %v1042, %v1045
        %vm1047 = vcmp.lt.s32.totalorder %v1046, 0
        %v1048 = vsub.s32 0, %v1046
        %v1049 = vsel %vm1047, %v1048, %v1046
        %v1050 = vclz %v1049
        %v1051 = vsub.s32 %v1050, 2
        %vm1052 = vcmp.gt.s32.totalorder 0, %v1051
        %v1053 = vsel %vm1052, 0, %v1051
        %v1054 = vsub.s32 32, %v1053
        %v1055 = vshll.u32 %v1046, %v1053
        %v1056 = vshrl.u32 %v1038, %v1054
        %v1057 = vor.u32 %v1055, %v1056
        %v1058 = vsub.s32 4294967266, %v1053
        %v1059 = vadd.s32 %v1058, 127
        %v1060 = vshll.u32 %v1059, 23
        %v1061 = vor.u32 4788187, %v1060
        %v1062 = vand.u32 2147483647, %v1061
        %v1064 = vcvt.s32.f32 %v1057
        %v1065 = vmul.f32 %v1064, %v1062
        %v1066 = vxor.u32 %v1065, 2147483648
        %v1067 = vsel %vm946, %v1066, %v1065
        %v1068 = vsub.s32 4, %v1044
        %v1069 = vsel %vm946, %v1068, %v1044
        %v1070 = vsel %vm945, %v296, %v1067
        %v1071 = vsel %vm945, 0, %v1069
        %v1072 = vmul.f32 %v1070, %v1070
        %v1073 = vmul.f32 %v1072, -0.001358992
        %v1074 = vadd.f32 %v1073, 0.041655596
        %v1075 = vmul.f32 %v1072, %v1074
        %v1076 = vadd.f32 %v1075, -0.4999988
        %v1077 = vmul.f32 %v1072, %v1076
        %v1078 = vadd.f32 1.0, %v1077
        %v1079 = vmul.f32 %v1070, %v1070
        %v1080 = vmul.f32 %v1079, -0.00019511016
        %v1081 = vadd.f32 %v1080, 0.008332121
        %v1082 = vmul.f32 %v1079, %v1081
        %v1083 = vadd.f32 %v1082, -0.16666654
        %v1084 = vmul.f32 %v1079, %v1083
        %v1085 = vadd.f32 %v1084, 1.0
        %v1086 = vmul.f32 %v1085, %v1070
        %vm1087 = vweird.f32 %v296
        %v1088 = vadd.s32 %v1071, 3
        %v1089 = vand.u32 %v1088, 3
        %vm1090 = vcmp.lt.s32.totalorder %v1089, 2
        %vm1091 = vcmp.eq.s32.totalorder %v1089, 0
        %v1092 = vxor.u32 %v1086, 2147483648
        %v1093 = vsel %vm1091, %v1078, %v1092
        %vm1094 = vcmp.eq.s32.totalorder %v1089, 2
        %v1095 = vxor.u32 %v1078, 2147483648
        %v1096 = vsel %vm1094, %v1095, %v1086
        %v1097 = vsel %vm1090, %v1093, %v1096
        %v1098 = vsel %vm1087, nan, %v1097
        %v1099 = vand.u32 2147483647, %v297
        %vm1100 = vcmp.le.f32.partialorder %v1099, 0.7853982
        %vm1101 = vcmp.lt.s32.totalorder %v297, 0
        %v1102 = vand.u32 %v297, 2139095040
        %v1103 = vshrl.u32 %v1102, 23
        %v1104 = vsub.s32 %v1103, 127
        %v1105 = vand.u32 2147483647, %v297
        %v1106 = vand.u32 %v1105, 8388607
        %v1107 = vor.u32 %v1106, 8388608
        %v1108 = vsub.s32 0, %v1107
        %v1109 = vadd.s32 %v1104, 1
        %vm1110 = vcmp.gt.s32.totalorder %v1109, 0
        %v1111 = vsel %vm1110, %v1109, 0
        %v1112 = vshrl.u32 %v1111, 5
        %v1113 = vand.u32 %v1111, 31
        %v1114 = vsub.s32 32, %v1113
        %v1115 = vshrl.u32 683565275, %v1114
        %v1116 = vshll.u32 683565275, %v1113
        %v1117 = vshrl.u32 2475754826, %v1114
        %v1118 = vor.u32 %v1116, %v1117
        %v1119 = vshll.u32 2475754826, %v1113
        %v1120 = vshrl.u32 2131351028, %v1114
        %v1121 = vor.u32 %v1119, %v1120
        %v1122 = vshll.u32 2131351028, %v1113
        %v1123 = vshrl.u32 2102212464, %v1114
        %v1124 = vor.u32 %v1122, %v1123
        %v1125 = vshll.u32 2102212464, %v1113
        %v1126 = vshrl.u32 920167782, %v1114
        %v1127 = vor.u32 %v1125, %v1126
        %v1128 = vshll.u32 920167782, %v1113
        %v1129 = vshrl.u32 1326507024, %v1114
        %v1130 = vor.u32 %v1128, %v1129
        %vm1131 = vcmp.lt.s32.totalorder %v1112, 1
        %vm1132 = vcmp.lt.s32.totalorder %v1112, 2
        %vm1133 = vcmp.lt.s32.totalorder %v1112, 3
        %vm1134 = vcmp.lt.s32.totalorder %v1112, 4
        %v1135 = vsel %vm1131, %v1115, %v1118
        %v1136 = vsel %vm1134, %v1124, 2102212464
        %v1137 = vsel %vm1133, %v1121, %v1136
        %v1138 = vsel %vm1132, %v1135, %v1137
        %v1139 = vsel %vm1131, %v1118, %v1121
        %v1140 = vsel %vm1134, %v1127, 920167782
        %v1141 = vsel %vm1133, %v1124, %v1140
        %v1142 = vsel %vm1132, %v1139, %v1141
        %v1143 = vsel %vm1131, %v1121, %v1124
        %v1144 = vsel %vm1134, %v1130, 1326507024
        %v1145 = vsel %vm1133, %v1127, %v1144
        %v1146 = vsel %vm1132, %v1143, %v1145
        %v1147 = vshll.u32 %v1107, 8
        %v1148 = vand.u32 %v1147, 65535
        %v1149 = vshrl.u32 %v1147, 16
        %v1150 = vand.u32 %v1146, 65535
        %v1151 = vshrl.u32 %v1146, 16
        %v1152 = vmul.u32 %v1148, %v1150
        %v1153 = vmul.u32 %v1148, %v1151
        %v1154 = vmul.u32 %v1149, %v1150
        %v1155 = vmul.u32 %v1149, %v1151
        %v1156 = vshll.u32 %v1153, 16
        %v1157 = vshrl.u32 %v1153, 16
        %v1158 = vshll.u32 %v1154, 16
        %v1159 = vshrl.u32 %v1154, 16
        %vm1160 = vc.u32 %v1152, %v1156
        %v1161 = vsel %vm1160, 1, 0
        %v1162 = vadd.s32 %v1152, %v1156
        %v1163 = vadd.s32 %v1155, %v1161
        %vm1164 = vc.u32 %v1162, %v1158
        %v1165 = vsel %vm1164, 1, 0
        %v1166 = vadd.s32 %v1162, %v1158
        %v1167 = vadd.s32 %v1163, %v1165
        %v1168 = vadd.s32 %v1167, %v1157
        %v1169 = vadd.s32 %v1168, %v1159
        %v1170 = vand.u32 %v1147, 65535
        %v1171 = vshrl.u32 %v1147, 16
        %v1172 = vand.u32 %v1142, 65535
        %v1173 = vshrl.u32 %v1142, 16
        %v1174 = vmul.u32 %v1170, %v1172
        %v1175 = vmul.u32 %v1170, %v1173
        %v1176 = vmul.u32 %v1171, %v1172
        %v1177 = vmul.u32 %v1171, %v1173
        %v1178 = vshll.u32 %v1175, 16
        %v1179 = vshrl.u32 %v1175, 16
        %v1180 = vshll.u32 %v1176, 16
        %v1181 = vshrl.u32 %v1176, 16
        %vm1182 = vc.u32 %v1174, %v1178
        %v1183 = vsel %vm1182, 1, 0
        %v1184 = vadd.s32 %v1174, %v1178
        %v1185 = vadd.s32 %v1177, %v1183
        %vm1186 = vc.u32 %v1184, %v1180
        %v1187 = vsel %vm1186, 1, 0
        %v1188 = vadd.s32 %v1184, %v1180
        %v1189 = vadd.s32 %v1185, %v1187
        %v1190 = vadd.s32 %v1189, %v1179
        %v1191 = vadd.s32 %v1190, %v1181
        %v1192 = vmul.u32 %v1147, %v1138
        %v1193 = vadd.s32 %v1169, %v1188
        %vm1194 = vc.u32 %v1169, %v1188
        %v1195 = vadd.s32 %v1191, 1
        %v1196 = vsel %vm1194, %v1195, %v1191
        %v1197 = vadd.s32 %v1192, %v1196
        %v1198 = vadd.s32 %v1197, 536870912
        %v1199 = vshrl.u32 %v1198, 30
        %v1200 = vshll.u32 %v1199, 30
        %v1201 = vsub.s32 %v1197, %v1200
        %vm1202 = vcmp.lt.s32.totalorder %v1201, 0
        %v1203 = vsub.s32 0, %v1201
        %v1204 = vsel %vm1202, %v1203, %v1201
        %v1205 = vclz %v1204
        %v1206 = vsub.s32 %v1205, 2
        %vm1207 = vcmp.gt.s32.totalorder 0, %v1206
        %v1208 = vsel %vm1207, 0, %v1206
        %v1209 = vsub.s32 32, %v1208
        %v1210 = vshll.u32 %v1201, %v1208
        %v1211 = vshrl.u32 %v1193, %v1209
        %v1212 = vor.u32 %v1210, %v1211
        %v1213 = vsub.s32 4294967266, %v1208
        %v1214 = vadd.s32 %v1213, 127
        %v1215 = vshll.u32 %v1214, 23
        %v1216 = vor.u32 4788187, %v1215
        %v1217 = vand.u32 2147483647, %v1216
        %v1219 = vcvt.s32.f32 %v1212
        %v1220 = vmul.f32 %v1219, %v1217
        %v1221 = vxor.u32 %v1220, 2147483648
        %v1222 = vsel %vm1101, %v1221, %v1220
        %v1223 = vsub.s32 4, %v1199
        %v1224 = vsel %vm1101, %v1223, %v1199
        %v1225 = vsel %vm1100, %v297, %v1222
        %v1226 = vsel %vm1100, 0, %v1224
        %v1227 = vmul.f32 %v1225, %v1225
        %v1228 = vmul.f32 %v1227, -0.001358992
        %v1229 = vadd.f32 %v1228, 0.041655596
        %v1230 = vmul.f32 %v1227, %v1229
        %v1231 = vadd.f32 %v1230, -0.4999988
        %v1232 = vmul.f32 %v1227, %v1231
        %v1233 = vadd.f32 1.0, %v1232
        %v1234 = vmul.f32 %v1225, %v1225
        %v1235 = vmul.f32 %v1234, -0.00019511016
        %v1236 = vadd.f32 %v1235, 0.008332121
        %v1237 = vmul.f32 %v1234, %v1236
        %v1238 = vadd.f32 %v1237, -0.16666654
        %v1239 = vmul.f32 %v1234, %v1238
        %v1240 = vadd.f32 %v1239, 1.0
        %v1241 = vmul.f32 %v1240, %v1225
        %vm1242 = vweird.f32 %v297
        %v1243 = vadd.s32 %v1226, 3
        %v1244 = vand.u32 %v1243, 3
        %vm1245 = vcmp.lt.s32.totalorder %v1244, 2
        %vm1246 = vcmp.eq.s32.totalorder %v1244, 0
        %v1247 = vxor.u32 %v1241, 2147483648
        %v1248 = vsel %vm1246, %v1233, %v1247
        %vm1249 = vcmp.eq.s32.totalorder %v1244, 2
        %v1250 = vxor.u32 %v1233, 2147483648
        %v1251 = vsel %vm1249, %v1250, %v1241
        %v1252 = vsel %vm1245, %v1248, %v1251
        %v1253 = vsel %vm1242, nan, %v1252
        %v1254 = vand.u32 2147483647, %v298
        %vm1255 = vcmp.le.f32.partialorder %v1254, 0.7853982
        %vm1256 = vcmp.lt.s32.totalorder %v298, 0
        %v1257 = vand.u32 %v298, 2139095040
        %v1258 = vshrl.u32 %v1257, 23
        %v1259 = vsub.s32 %v1258, 127
        %v1260 = vand.u32 2147483647, %v298
        %v1261 = vand.u32 %v1260, 8388607
        %v1262 = vor.u32 %v1261, 8388608
        %v1263 = vsub.s32 0, %v1262
        %v1264 = vadd.s32 %v1259, 1
        %vm1265 = vcmp.gt.s32.totalorder %v1264, 0
        %v1266 = vsel %vm1265, %v1264, 0
        %v1267 = vshrl.u32 %v1266, 5
        %v1268 = vand.u32 %v1266, 31
        %v1269 = vsub.s32 32, %v1268
        %v1270 = vshrl.u32 683565275, %v1269
        %v1271 = vshll.u32 683565275, %v1268
        %v1272 = vshrl.u32 2475754826, %v1269
        %v1273 = vor.u32 %v1271, %v1272
        %v1274 = vshll.u32 2475754826, %v1268
        %v1275 = vshrl.u32 2131351028, %v1269
        %v1276 = vor.u32 %v1274, %v1275
        %v1277 = vshll.u32 2131351028, %v1268
        %v1278 = vshrl.u32 2102212464, %v1269
        %v1279 = vor.u32 %v1277, %v1278
        %v1280 = vshll.u32 2102212464, %v1268
        %v1281 = vshrl.u32 920167782, %v1269
        %v1282 = vor.u32 %v1280, %v1281
        %v1283 = vshll.u32 920167782, %v1268
        %v1284 = vshrl.u32 1326507024, %v1269
        %v1285 = vor.u32 %v1283, %v1284
        %vm1286 = vcmp.lt.s32.totalorder %v1267, 1
        %vm1287 = vcmp.lt.s32.totalorder %v1267, 2
        %vm1288 = vcmp.lt.s32.totalorder %v1267, 3
        %vm1289 = vcmp.lt.s32.totalorder %v1267, 4
        %v1290 = vsel %vm1286, %v1270, %v1273
        %v1291 = vsel %vm1289, %v1279, 2102212464
        %v1292 = vsel %vm1288, %v1276, %v1291
        %v1293 = vsel %vm1287, %v1290, %v1292
        %v1294 = vsel %vm1286, %v1273, %v1276
        %v1295 = vsel %vm1289, %v1282, 920167782
        %v1296 = vsel %vm1288, %v1279, %v1295
        %v1297 = vsel %vm1287, %v1294, %v1296
        %v1298 = vsel %vm1286, %v1276, %v1279
        %v1299 = vsel %vm1289, %v1285, 1326507024
        %v1300 = vsel %vm1288, %v1282, %v1299
        %v1301 = vsel %vm1287, %v1298, %v1300
        %v1302 = vshll.u32 %v1262, 8
        %v1303 = vand.u32 %v1302, 65535
        %v1304 = vshrl.u32 %v1302, 16
        %v1305 = vand.u32 %v1301, 65535
        %v1306 = vshrl.u32 %v1301, 16
        %v1307 = vmul.u32 %v1303, %v1305
        %v1308 = vmul.u32 %v1303, %v1306
        %v1309 = vmul.u32 %v1304, %v1305
        %v1310 = vmul.u32 %v1304, %v1306
        %v1311 = vshll.u32 %v1308, 16
        %v1312 = vshrl.u32 %v1308, 16
        %v1313 = vshll.u32 %v1309, 16
        %v1314 = vshrl.u32 %v1309, 16
        %vm1315 = vc.u32 %v1307, %v1311
        %v1316 = vsel %vm1315, 1, 0
        %v1317 = vadd.s32 %v1307, %v1311
        %v1318 = vadd.s32 %v1310, %v1316
        %vm1319 = vc.u32 %v1317, %v1313
        %v1320 = vsel %vm1319, 1, 0
        %v1321 = vadd.s32 %v1317, %v1313
        %v1322 = vadd.s32 %v1318, %v1320
        %v1323 = vadd.s32 %v1322, %v1312
        %v1324 = vadd.s32 %v1323, %v1314
        %v1325 = vand.u32 %v1302, 65535
        %v1326 = vshrl.u32 %v1302, 16
        %v1327 = vand.u32 %v1297, 65535
        %v1328 = vshrl.u32 %v1297, 16
        %v1329 = vmul.u32 %v1325, %v1327
        %v1330 = vmul.u32 %v1325, %v1328
        %v1331 = vmul.u32 %v1326, %v1327
        %v1332 = vmul.u32 %v1326, %v1328
        %v1333 = vshll.u32 %v1330, 16
        %v1334 = vshrl.u32 %v1330, 16
        %v1335 = vshll.u32 %v1331, 16
        %v1336 = vshrl.u32 %v1331, 16
        %vm1337 = vc.u32 %v1329, %v1333
        %v1338 = vsel %vm1337, 1, 0
        %v1339 = vadd.s32 %v1329, %v1333
        %v1340 = vadd.s32 %v1332, %v1338
        %vm1341 = vc.u32 %v1339, %v1335
        %v1342 = vsel %vm1341, 1, 0
        %v1343 = vadd.s32 %v1339, %v1335
        %v1344 = vadd.s32 %v1340, %v1342
        %v1345 = vadd.s32 %v1344, %v1334
        %v1346 = vadd.s32 %v1345, %v1336
        %v1347 = vmul.u32 %v1302, %v1293
        %v1348 = vadd.s32 %v1324, %v1343
        %vm1349 = vc.u32 %v1324, %v1343
        %v1350 = vadd.s32 %v1346, 1
        %v1351 = vsel %vm1349, %v1350, %v1346
        %v1352 = vadd.s32 %v1347, %v1351
        %v1353 = vadd.s32 %v1352, 536870912
        %v1354 = vshrl.u32 %v1353, 30
        %v1355 = vshll.u32 %v1354, 30
        %v1356 = vsub.s32 %v1352, %v1355
        %vm1357 = vcmp.lt.s32.totalorder %v1356, 0
        %v1358 = vsub.s32 0, %v1356
        %v1359 = vsel %vm1357, %v1358, %v1356
        %v1360 = vclz %v1359
        %v1361 = vsub.s32 %v1360, 2
        %vm1362 = vcmp.gt.s32.totalorder 0, %v1361
        %v1363 = vsel %vm1362, 0, %v1361
        %v1364 = vsub.s32 32, %v1363
        %v1365 = vshll.u32 %v1356, %v1363
        %v1366 = vshrl.u32 %v1348, %v1364
        %v1367 = vor.u32 %v1365, %v1366
        %v1368 = vsub.s32 4294967266, %v1363
        %v1369 = vadd.s32 %v1368, 127
        %v1370 = vshll.u32 %v1369, 23
        %v1371 = vor.u32 4788187, %v1370
        %v1372 = vand.u32 2147483647, %v1371
        %v1374 = vcvt.s32.f32 %v1367
        %v1375 = vmul.f32 %v1374, %v1372
        %v1376 = vxor.u32 %v1375, 2147483648
        %v1377 = vsel %vm1256, %v1376, %v1375
        %v1378 = vsub.s32 4, %v1354
        %v1379 = vsel %vm1256, %v1378, %v1354
        %v1380 = vsel %vm1255, %v298, %v1377
        %v1381 = vsel %vm1255, 0, %v1379
        %v1382 = vmul.f32 %v1380, %v1380
        %v1383 = vmul.f32 %v1382, -0.001358992
        %v1384 = vadd.f32 %v1383, 0.041655596
        %v1385 = vmul.f32 %v1382, %v1384
        %v1386 = vadd.f32 %v1385, -0.4999988
        %v1387 = vmul.f32 %v1382, %v1386
        %v1388 = vadd.f32 1.0, %v1387
        %v1389 = vmul.f32 %v1380, %v1380
        %v1390 = vmul.f32 %v1389, -0.00019511016
        %v1391 = vadd.f32 %v1390, 0.008332121
        %v1392 = vmul.f32 %v1389, %v1391
        %v1393 = vadd.f32 %v1392, -0.16666654
        %v1394 = vmul.f32 %v1389, %v1393
        %v1395 = vadd.f32 %v1394, 1.0
        %v1396 = vmul.f32 %v1395, %v1380
        %vm1397 = vweird.f32 %v298
        %v1398 = vadd.s32 %v1381, 3
        %v1399 = vand.u32 %v1398, 3
        %vm1400 = vcmp.lt.s32.totalorder %v1399, 2
        %vm1401 = vcmp.eq.s32.totalorder %v1399, 0
        %v1402 = vxor.u32 %v1396, 2147483648
        %v1403 = vsel %vm1401, %v1388, %v1402
        %vm1404 = vcmp.eq.s32.totalorder %v1399, 2
        %v1405 = vxor.u32 %v1388, 2147483648
        %v1406 = vsel %vm1404, %v1405, %v1396
        %v1407 = vsel %vm1400, %v1403, %v1406
        %v1408 = vsel %vm1397, nan, %v1407
        %v1409 = vand.u32 2147483647, %v299
        %vm1410 = vcmp.le.f32.partialorder %v1409, 0.7853982
        %vm1411 = vcmp.lt.s32.totalorder %v299, 0
        %v1412 = vand.u32 %v299, 2139095040
        %v1413 = vshrl.u32 %v1412, 23
        %v1414 = vsub.s32 %v1413, 127
        %v1415 = vand.u32 2147483647, %v299
        %v1416 = vand.u32 %v1415, 8388607
        %v1417 = vor.u32 %v1416, 8388608
        %v1418 = vsub.s32 0, %v1417
        %v1419 = vadd.s32 %v1414, 1
        %vm1420 = vcmp.gt.s32.totalorder %v1419, 0
        %v1421 = vsel %vm1420, %v1419, 0
        %v1422 = vshrl.u32 %v1421, 5
        %v1423 = vand.u32 %v1421, 31
        %v1424 = vsub.s32 32, %v1423
        %v1425 = vshrl.u32 683565275, %v1424
        %v1426 = vshll.u32 683565275, %v1423
        %v1427 = vshrl.u32 2475754826, %v1424
        %v1428 = vor.u32 %v1426, %v1427
        %v1429 = vshll.u32 2475754826, %v1423
        %v1430 = vshrl.u32 2131351028, %v1424
        %v1431 = vor.u32 %v1429, %v1430
        %v1432 = vshll.u32 2131351028, %v1423
        %v1433 = vshrl.u32 2102212464, %v1424
        %v1434 = vor.u32 %v1432, %v1433
        %v1435 = vshll.u32 2102212464, %v1423
        %v1436 = vshrl.u32 920167782, %v1424
        %v1437 = vor.u32 %v1435, %v1436
        %v1438 = vshll.u32 920167782, %v1423
        %v1439 = vshrl.u32 1326507024, %v1424
        %v1440 = vor.u32 %v1438, %v1439
        %vm1441 = vcmp.lt.s32.totalorder %v1422, 1
        %vm1442 = vcmp.lt.s32.totalorder %v1422, 2
        %vm1443 = vcmp.lt.s32.totalorder %v1422, 3
        %vm1444 = vcmp.lt.s32.totalorder %v1422, 4
        %v1445 = vsel %vm1441, %v1425, %v1428
        %v1446 = vsel %vm1444, %v1434, 2102212464
        %v1447 = vsel %vm1443, %v1431, %v1446
        %v1448 = vsel %vm1442, %v1445, %v1447
        %v1449 = vsel %vm1441, %v1428, %v1431
        %v1450 = vsel %vm1444, %v1437, 920167782
        %v1451 = vsel %vm1443, %v1434, %v1450
        %v1452 = vsel %vm1442, %v1449, %v1451
        %v1453 = vsel %vm1441, %v1431, %v1434
        %v1454 = vsel %vm1444, %v1440, 1326507024
        %v1455 = vsel %vm1443, %v1437, %v1454
        %v1456 = vsel %vm1442, %v1453, %v1455
        %v1457 = vshll.u32 %v1417, 8
        %v1458 = vand.u32 %v1457, 65535
        %v1459 = vshrl.u32 %v1457, 16
        %v1460 = vand.u32 %v1456, 65535
        %v1461 = vshrl.u32 %v1456, 16
        %v1462 = vmul.u32 %v1458, %v1460
        %v1463 = vmul.u32 %v1458, %v1461
        %v1464 = vmul.u32 %v1459, %v1460
        %v1465 = vmul.u32 %v1459, %v1461
        %v1466 = vshll.u32 %v1463, 16
        %v1467 = vshrl.u32 %v1463, 16
        %v1468 = vshll.u32 %v1464, 16
        %v1469 = vshrl.u32 %v1464, 16
        %vm1470 = vc.u32 %v1462, %v1466
        %v1471 = vsel %vm1470, 1, 0
        %v1472 = vadd.s32 %v1462, %v1466
        %v1473 = vadd.s32 %v1465, %v1471
        %vm1474 = vc.u32 %v1472, %v1468
        %v1475 = vsel %vm1474, 1, 0
        %v1476 = vadd.s32 %v1472, %v1468
        %v1477 = vadd.s32 %v1473, %v1475
        %v1478 = vadd.s32 %v1477, %v1467
        %v1479 = vadd.s32 %v1478, %v1469
        %v1480 = vand.u32 %v1457, 65535
        %v1481 = vshrl.u32 %v1457, 16
        %v1482 = vand.u32 %v1452, 65535
        %v1483 = vshrl.u32 %v1452, 16
        %v1484 = vmul.u32 %v1480, %v1482
        %v1485 = vmul.u32 %v1480, %v1483
        %v1486 = vmul.u32 %v1481, %v1482
        %v1487 = vmul.u32 %v1481, %v1483
        %v1488 = vshll.u32 %v1485, 16
        %v1489 = vshrl.u32 %v1485, 16
        %v1490 = vshll.u32 %v1486, 16
        %v1491 = vshrl.u32 %v1486, 16
        %vm1492 = vc.u32 %v1484, %v1488
        %v1493 = vsel %vm1492, 1, 0
        %v1494 = vadd.s32 %v1484, %v1488
        %v1495 = vadd.s32 %v1487, %v1493
        %vm1496 = vc.u32 %v1494, %v1490
        %v1497 = vsel %vm1496, 1, 0
        %v1498 = vadd.s32 %v1494, %v1490
        %v1499 = vadd.s32 %v1495, %v1497
        %v1500 = vadd.s32 %v1499, %v1489
        %v1501 = vadd.s32 %v1500, %v1491
        %v1502 = vmul.u32 %v1457, %v1448
        %v1503 = vadd.s32 %v1479, %v1498
        %vm1504 = vc.u32 %v1479, %v1498
        %v1505 = vadd.s32 %v1501, 1
        %v1506 = vsel %vm1504, %v1505, %v1501
        %v1507 = vadd.s32 %v1502, %v1506
        %v1508 = vadd.s32 %v1507, 536870912
        %v1509 = vshrl.u32 %v1508, 30
        %v1510 = vshll.u32 %v1509, 30
        %v1511 = vsub.s32 %v1507, %v1510
        %vm1512 = vcmp.lt.s32.totalorder %v1511, 0
        %v1513 = vsub.s32 0, %v1511
        %v1514 = vsel %vm1512, %v1513, %v1511
        %v1515 = vclz %v1514
        %v1516 = vsub.s32 %v1515, 2
        %vm1517 = vcmp.gt.s32.totalorder 0, %v1516
        %v1518 = vsel %vm1517, 0, %v1516
        %v1519 = vsub.s32 32, %v1518
        %v1520 = vshll.u32 %v1511, %v1518
        %v1521 = vshrl.u32 %v1503, %v1519
        %v1522 = vor.u32 %v1520, %v1521
        %v1523 = vsub.s32 4294967266, %v1518
        %v1524 = vadd.s32 %v1523, 127
        %v1525 = vshll.u32 %v1524, 23
        %v1526 = vor.u32 4788187, %v1525
        %v1527 = vand.u32 2147483647, %v1526
        %v1529 = vcvt.s32.f32 %v1522
        %v1530 = vmul.f32 %v1529, %v1527
        %v1531 = vxor.u32 %v1530, 2147483648
        %v1532 = vsel %vm1411, %v1531, %v1530
        %v1533 = vsub.s32 4, %v1509
        %v1534 = vsel %vm1411, %v1533, %v1509
        %v1535 = vsel %vm1410, %v299, %v1532
        %v1536 = vsel %vm1410, 0, %v1534
        %v1537 = vmul.f32 %v1535, %v1535
        %v1538 = vmul.f32 %v1537, -0.001358992
        %v1539 = vadd.f32 %v1538, 0.041655596
        %v1540 = vmul.f32 %v1537, %v1539
        %v1541 = vadd.f32 %v1540, -0.4999988
        %v1542 = vmul.f32 %v1537, %v1541
        %v1543 = vadd.f32 1.0, %v1542
        %v1544 = vmul.f32 %v1535, %v1535
        %v1545 = vmul.f32 %v1544, -0.00019511016
        %v1546 = vadd.f32 %v1545, 0.008332121
        %v1547 = vmul.f32 %v1544, %v1546
        %v1548 = vadd.f32 %v1547, -0.16666654
        %v1549 = vmul.f32 %v1544, %v1548
        %v1550 = vadd.f32 %v1549, 1.0
        %v1551 = vmul.f32 %v1550, %v1535
        %vm1552 = vweird.f32 %v299
        %v1553 = vadd.s32 %v1536, 3
        %v1554 = vand.u32 %v1553, 3
        %vm1555 = vcmp.lt.s32.totalorder %v1554, 2
        %vm1556 = vcmp.eq.s32.totalorder %v1554, 0
        %v1557 = vxor.u32 %v1551, 2147483648
        %v1558 = vsel %vm1556, %v1543, %v1557
        %vm1559 = vcmp.eq.s32.totalorder %v1554, 2
        %v1560 = vxor.u32 %v1543, 2147483648
        %v1561 = vsel %vm1559, %v1560, %v1551
        %v1562 = vsel %vm1555, %v1558, %v1561
        %v1563 = vsel %vm1552, nan, %v1562
        %v1564 = vand.u32 2147483647, %v300
        %vm1565 = vcmp.le.f32.partialorder %v1564, 0.7853982
        %vm1566 = vcmp.lt.s32.totalorder %v300, 0
        %v1567 = vand.u32 %v300, 2139095040
        %v1568 = vshrl.u32 %v1567, 23
        %v1569 = vsub.s32 %v1568, 127
        %v1570 = vand.u32 2147483647, %v300
        %v1571 = vand.u32 %v1570, 8388607
        %v1572 = vor.u32 %v1571, 8388608
        %v1573 = vsub.s32 0, %v1572
        %v1574 = vadd.s32 %v1569, 1
        %vm1575 = vcmp.gt.s32.totalorder %v1574, 0
        %v1576 = vsel %vm1575, %v1574, 0
        %v1577 = vshrl.u32 %v1576, 5
        %v1578 = vand.u32 %v1576, 31
        %v1579 = vsub.s32 32, %v1578
        %v1580 = vshrl.u32 683565275, %v1579
        %v1581 = vshll.u32 683565275, %v1578
        %v1582 = vshrl.u32 2475754826, %v1579
        %v1583 = vor.u32 %v1581, %v1582
        %v1584 = vshll.u32 2475754826, %v1578
        %v1585 = vshrl.u32 2131351028, %v1579
        %v1586 = vor.u32 %v1584, %v1585
        %v1587 = vshll.u32 2131351028, %v1578
        %v1588 = vshrl.u32 2102212464, %v1579
        %v1589 = vor.u32 %v1587, %v1588
        %v1590 = vshll.u32 2102212464, %v1578
        %v1591 = vshrl.u32 920167782, %v1579
        %v1592 = vor.u32 %v1590, %v1591
        %v1593 = vshll.u32 920167782, %v1578
        %v1594 = vshrl.u32 1326507024, %v1579
        %v1595 = vor.u32 %v1593, %v1594
        %vm1596 = vcmp.lt.s32.totalorder %v1577, 1
        %vm1597 = vcmp.lt.s32.totalorder %v1577, 2
        %vm1598 = vcmp.lt.s32.totalorder %v1577, 3
        %vm1599 = vcmp.lt.s32.totalorder %v1577, 4
        %v1600 = vsel %vm1596, %v1580, %v1583
        %v1601 = vsel %vm1599, %v1589, 2102212464
        %v1602 = vsel %vm1598, %v1586, %v1601
        %v1603 = vsel %vm1597, %v1600, %v1602
        %v1604 = vsel %vm1596, %v1583, %v1586
        %v1605 = vsel %vm1599, %v1592, 920167782
        %v1606 = vsel %vm1598, %v1589, %v1605
        %v1607 = vsel %vm1597, %v1604, %v1606
        %v1608 = vsel %vm1596, %v1586, %v1589
        %v1609 = vsel %vm1599, %v1595, 1326507024
        %v1610 = vsel %vm1598, %v1592, %v1609
        %v1611 = vsel %vm1597, %v1608, %v1610
        %v1612 = vshll.u32 %v1572, 8
        %v1613 = vand.u32 %v1612, 65535
        %v1614 = vshrl.u32 %v1612, 16
        %v1615 = vand.u32 %v1611, 65535
        %v1616 = vshrl.u32 %v1611, 16
        %v1617 = vmul.u32 %v1613, %v1615
        %v1618 = vmul.u32 %v1613, %v1616
        %v1619 = vmul.u32 %v1614, %v1615
        %v1620 = vmul.u32 %v1614, %v1616
        %v1621 = vshll.u32 %v1618, 16
        %v1622 = vshrl.u32 %v1618, 16
        %v1623 = vshll.u32 %v1619, 16
        %v1624 = vshrl.u32 %v1619, 16
        %vm1625 = vc.u32 %v1617, %v1621
        %v1626 = vsel %vm1625, 1, 0
        %v1627 = vadd.s32 %v1617, %v1621
        %v1628 = vadd.s32 %v1620, %v1626
        %vm1629 = vc.u32 %v1627, %v1623
        %v1630 = vsel %vm1629, 1, 0
        %v1631 = vadd.s32 %v1627, %v1623
        %v1632 = vadd.s32 %v1628, %v1630
        %v1633 = vadd.s32 %v1632, %v1622
        %v1634 = vadd.s32 %v1633, %v1624
        %v1635 = vand.u32 %v1612, 65535
        %v1636 = vshrl.u32 %v1612, 16
        %v1637 = vand.u32 %v1607, 65535
        %v1638 = vshrl.u32 %v1607, 16
        %v1639 = vmul.u32 %v1635, %v1637
        %v1640 = vmul.u32 %v1635, %v1638
        %v1641 = vmul.u32 %v1636, %v1637
        %v1642 = vmul.u32 %v1636, %v1638
        %v1643 = vshll.u32 %v1640, 16
        %v1644 = vshrl.u32 %v1640, 16
        %v1645 = vshll.u32 %v1641, 16
        %v1646 = vshrl.u32 %v1641, 16
        %vm1647 = vc.u32 %v1639, %v1643
        %v1648 = vsel %vm1647, 1, 0
        %v1649 = vadd.s32 %v1639, %v1643
        %v1650 = vadd.s32 %v1642, %v1648
        %vm1651 = vc.u32 %v1649, %v1645
        %v1652 = vsel %vm1651, 1, 0
        %v1653 = vadd.s32 %v1649, %v1645
        %v1654 = vadd.s32 %v1650, %v1652
        %v1655 = vadd.s32 %v1654, %v1644
        %v1656 = vadd.s32 %v1655, %v1646
        %v1657 = vmul.u32 %v1612, %v1603
        %v1658 = vadd.s32 %v1634, %v1653
        %vm1659 = vc.u32 %v1634, %v1653
        %v1660 = vadd.s32 %v1656, 1
        %v1661 = vsel %vm1659, %v1660, %v1656
        %v1662 = vadd.s32 %v1657, %v1661
        %v1663 = vadd.s32 %v1662, 536870912
        %v1664 = vshrl.u32 %v1663, 30
        %v1665 = vshll.u32 %v1664, 30
        %v1666 = vsub.s32 %v1662, %v1665
        %vm1667 = vcmp.lt.s32.totalorder %v1666, 0
        %v1668 = vsub.s32 0, %v1666
        %v1669 = vsel %vm1667, %v1668, %v1666
        %v1670 = vclz %v1669
        %v1671 = vsub.s32 %v1670, 2
        %vm1672 = vcmp.gt.s32.totalorder 0, %v1671
        %v1673 = vsel %vm1672, 0, %v1671
        %v1674 = vsub.s32 32, %v1673
        %v1675 = vshll.u32 %v1666, %v1673
        %v1676 = vshrl.u32 %v1658, %v1674
        %v1677 = vor.u32 %v1675, %v1676
        %v1678 = vsub.s32 4294967266, %v1673
        %v1679 = vadd.s32 %v1678, 127
        %v1680 = vshll.u32 %v1679, 23
        %v1681 = vor.u32 4788187, %v1680
        %v1682 = vand.u32 2147483647, %v1681
        %v1684 = vcvt.s32.f32 %v1677
        %v1685 = vmul.f32 %v1684, %v1682
        %v1686 = vxor.u32 %v1685, 2147483648
        %v1687 = vsel %vm1566, %v1686, %v1685
        %v1688 = vsub.s32 4, %v1664
        %v1689 = vsel %vm1566, %v1688, %v1664
        %v1690 = vsel %vm1565, %v300, %v1687
        %v1691 = vsel %vm1565, 0, %v1689
        %v1692 = vmul.f32 %v1690, %v1690
        %v1693 = vmul.f32 %v1692, -0.001358992
        %v1694 = vadd.f32 %v1693, 0.041655596
        %v1695 = vmul.f32 %v1692, %v1694
        %v1696 = vadd.f32 %v1695, -0.4999988
        %v1697 = vmul.f32 %v1692, %v1696
        %v1698 = vadd.f32 1.0, %v1697
        %v1699 = vmul.f32 %v1690, %v1690
        %v1700 = vmul.f32 %v1699, -0.00019511016
        %v1701 = vadd.f32 %v1700, 0.008332121
        %v1702 = vmul.f32 %v1699, %v1701
        %v1703 = vadd.f32 %v1702, -0.16666654
        %v1704 = vmul.f32 %v1699, %v1703
        %v1705 = vadd.f32 %v1704, 1.0
        %v1706 = vmul.f32 %v1705, %v1690
        %vm1707 = vweird.f32 %v300
        %v1708 = vadd.s32 %v1691, 3
        %v1709 = vand.u32 %v1708, 3
        %vm1710 = vcmp.lt.s32.totalorder %v1709, 2
        %vm1711 = vcmp.eq.s32.totalorder %v1709, 0
        %v1712 = vxor.u32 %v1706, 2147483648
        %v1713 = vsel %vm1711, %v1698, %v1712
        %vm1714 = vcmp.eq.s32.totalorder %v1709, 2
        %v1715 = vxor.u32 %v1698, 2147483648
        %v1716 = vsel %vm1714, %v1715, %v1706
        %v1717 = vsel %vm1710, %v1713, %v1716
        %v1718 = vsel %vm1707, nan, %v1717
        %v1719 = vand.u32 2147483647, %v301
        %vm1720 = vcmp.le.f32.partialorder %v1719, 0.7853982
        %vm1721 = vcmp.lt.s32.totalorder %v301, 0
        %v1722 = vand.u32 %v301, 2139095040
        %v1723 = vshrl.u32 %v1722, 23
        %v1724 = vsub.s32 %v1723, 127
        %v1725 = vand.u32 2147483647, %v301
        %v1726 = vand.u32 %v1725, 8388607
        %v1727 = vor.u32 %v1726, 8388608
        %v1728 = vsub.s32 0, %v1727
        %v1729 = vadd.s32 %v1724, 1
        %vm1730 = vcmp.gt.s32.totalorder %v1729, 0
        %v1731 = vsel %vm1730, %v1729, 0
        %v1732 = vshrl.u32 %v1731, 5
        %v1733 = vand.u32 %v1731, 31
        %v1734 = vsub.s32 32, %v1733
        %v1735 = vshrl.u32 683565275, %v1734
        %v1736 = vshll.u32 683565275, %v1733
        %v1737 = vshrl.u32 2475754826, %v1734
        %v1738 = vor.u32 %v1736, %v1737
        %v1739 = vshll.u32 2475754826, %v1733
        %v1740 = vshrl.u32 2131351028, %v1734
        %v1741 = vor.u32 %v1739, %v1740
        %v1742 = vshll.u32 2131351028, %v1733
        %v1743 = vshrl.u32 2102212464, %v1734
        %v1744 = vor.u32 %v1742, %v1743
        %v1745 = vshll.u32 2102212464, %v1733
        %v1746 = vshrl.u32 920167782, %v1734
        %v1747 = vor.u32 %v1745, %v1746
        %v1748 = vshll.u32 920167782, %v1733
        %v1749 = vshrl.u32 1326507024, %v1734
        %v1750 = vor.u32 %v1748, %v1749
        %vm1751 = vcmp.lt.s32.totalorder %v1732, 1
        %vm1752 = vcmp.lt.s32.totalorder %v1732, 2
        %vm1753 = vcmp.lt.s32.totalorder %v1732, 3
        %vm1754 = vcmp.lt.s32.totalorder %v1732, 4
        %v1755 = vsel %vm1751, %v1735, %v1738
        %v1756 = vsel %vm1754, %v1744, 2102212464
        %v1757 = vsel %vm1753, %v1741, %v1756
        %v1758 = vsel %vm1752, %v1755, %v1757
        %v1759 = vsel %vm1751, %v1738, %v1741
        %v1760 = vsel %vm1754, %v1747, 920167782
        %v1761 = vsel %vm1753, %v1744, %v1760
        %v1762 = vsel %vm1752, %v1759, %v1761
        %v1763 = vsel %vm1751, %v1741, %v1744
        %v1764 = vsel %vm1754, %v1750, 1326507024
        %v1765 = vsel %vm1753, %v1747, %v1764
        %v1766 = vsel %vm1752, %v1763, %v1765
        %v1767 = vshll.u32 %v1727, 8
        %v1768 = vand.u32 %v1767, 65535
        %v1769 = vshrl.u32 %v1767, 16
        %v1770 = vand.u32 %v1766, 65535
        %v1771 = vshrl.u32 %v1766, 16
        %v1772 = vmul.u32 %v1768, %v1770
        %v1773 = vmul.u32 %v1768, %v1771
        %v1774 = vmul.u32 %v1769, %v1770
        %v1775 = vmul.u32 %v1769, %v1771
        %v1776 = vshll.u32 %v1773, 16
        %v1777 = vshrl.u32 %v1773, 16
        %v1778 = vshll.u32 %v1774, 16
        %v1779 = vshrl.u32 %v1774, 16
        %vm1780 = vc.u32 %v1772, %v1776
        %v1781 = vsel %vm1780, 1, 0
        %v1782 = vadd.s32 %v1772, %v1776
        %v1783 = vadd.s32 %v1775, %v1781
        %vm1784 = vc.u32 %v1782, %v1778
        %v1785 = vsel %vm1784, 1, 0
        %v1786 = vadd.s32 %v1782, %v1778
        %v1787 = vadd.s32 %v1783, %v1785
        %v1788 = vadd.s32 %v1787, %v1777
        %v1789 = vadd.s32 %v1788, %v1779
        %v1790 = vand.u32 %v1767, 65535
        %v1791 = vshrl.u32 %v1767, 16
        %v1792 = vand.u32 %v1762, 65535
        %v1793 = vshrl.u32 %v1762, 16
        %v1794 = vmul.u32 %v1790, %v1792
        %v1795 = vmul.u32 %v1790, %v1793
        %v1796 = vmul.u32 %v1791, %v1792
        %v1797 = vmul.u32 %v1791, %v1793
        %v1798 = vshll.u32 %v1795, 16
        %v1799 = vshrl.u32 %v1795, 16
        %v1800 = vshll.u32 %v1796, 16
        %v1801 = vshrl.u32 %v1796, 16
        %vm1802 = vc.u32 %v1794, %v1798
        %v1803 = vsel %vm1802, 1, 0
        %v1804 = vadd.s32 %v1794, %v1798
        %v1805 = vadd.s32 %v1797, %v1803
        %vm1806 = vc.u32 %v1804, %v1800
        %v1807 = vsel %vm1806, 1, 0
        %v1808 = vadd.s32 %v1804, %v1800
        %v1809 = vadd.s32 %v1805, %v1807
        %v1810 = vadd.s32 %v1809, %v1799
        %v1811 = vadd.s32 %v1810, %v1801
        %v1812 = vmul.u32 %v1767, %v1758
        %v1813 = vadd.s32 %v1789, %v1808
        %vm1814 = vc.u32 %v1789, %v1808
        %v1815 = vadd.s32 %v1811, 1
        %v1816 = vsel %vm1814, %v1815, %v1811
        %v1817 = vadd.s32 %v1812, %v1816
        %v1818 = vadd.s32 %v1817, 536870912
        %v1819 = vshrl.u32 %v1818, 30
        %v1820 = vshll.u32 %v1819, 30
        %v1821 = vsub.s32 %v1817, %v1820
        %vm1822 = vcmp.lt.s32.totalorder %v1821, 0
        %v1823 = vsub.s32 0, %v1821
        %v1824 = vsel %vm1822, %v1823, %v1821
        %v1825 = vclz %v1824
        %v1826 = vsub.s32 %v1825, 2
        %vm1827 = vcmp.gt.s32.totalorder 0, %v1826
        %v1828 = vsel %vm1827, 0, %v1826
        %v1829 = vsub.s32 32, %v1828
        %v1830 = vshll.u32 %v1821, %v1828
        %v1831 = vshrl.u32 %v1813, %v1829
        %v1832 = vor.u32 %v1830, %v1831
        %v1833 = vsub.s32 4294967266, %v1828
        %v1834 = vadd.s32 %v1833, 127
        %v1835 = vshll.u32 %v1834, 23
        %v1836 = vor.u32 4788187, %v1835
        %v1837 = vand.u32 2147483647, %v1836
        %v1839 = vcvt.s32.f32 %v1832
        %v1840 = vmul.f32 %v1839, %v1837
        %v1841 = vxor.u32 %v1840, 2147483648
        %v1842 = vsel %vm1721, %v1841, %v1840
        %v1843 = vsub.s32 4, %v1819
        %v1844 = vsel %vm1721, %v1843, %v1819
        %v1845 = vsel %vm1720, %v301, %v1842
        %v1846 = vsel %vm1720, 0, %v1844
        %v1847 = vmul.f32 %v1845, %v1845
        %v1848 = vmul.f32 %v1847, -0.001358992
        %v1849 = vadd.f32 %v1848, 0.041655596
        %v1850 = vmul.f32 %v1847, %v1849
        %v1851 = vadd.f32 %v1850, -0.4999988
        %v1852 = vmul.f32 %v1847, %v1851
        %v1853 = vadd.f32 1.0, %v1852
        %v1854 = vmul.f32 %v1845, %v1845
        %v1855 = vmul.f32 %v1854, -0.00019511016
        %v1856 = vadd.f32 %v1855, 0.008332121
        %v1857 = vmul.f32 %v1854, %v1856
        %v1858 = vadd.f32 %v1857, -0.16666654
        %v1859 = vmul.f32 %v1854, %v1858
        %v1860 = vadd.f32 %v1859, 1.0
        %v1861 = vmul.f32 %v1860, %v1845
        %vm1862 = vweird.f32 %v301
        %v1863 = vadd.s32 %v1846, 3
        %v1864 = vand.u32 %v1863, 3
        %vm1865 = vcmp.lt.s32.totalorder %v1864, 2
        %vm1866 = vcmp.eq.s32.totalorder %v1864, 0
        %v1867 = vxor.u32 %v1861, 2147483648
        %v1868 = vsel %vm1866, %v1853, %v1867
        %vm1869 = vcmp.eq.s32.totalorder %v1864, 2
        %v1870 = vxor.u32 %v1853, 2147483648
        %v1871 = vsel %vm1869, %v1870, %v1861
        %v1872 = vsel %vm1865, %v1868, %v1871
        %v1873 = vsel %vm1862, nan, %v1872
        %v1874 = vand.u32 2147483647, %v302
        %vm1875 = vcmp.le.f32.partialorder %v1874, 0.7853982
        %vm1876 = vcmp.lt.s32.totalorder %v302, 0
        %v1877 = vand.u32 %v302, 2139095040
        %v1878 = vshrl.u32 %v1877, 23
        %v1879 = vsub.s32 %v1878, 127
        %v1880 = vand.u32 2147483647, %v302
        %v1881 = vand.u32 %v1880, 8388607
        %v1882 = vor.u32 %v1881, 8388608
        %v1883 = vsub.s32 0, %v1882
        %v1884 = vadd.s32 %v1879, 1
        %vm1885 = vcmp.gt.s32.totalorder %v1884, 0
        %v1886 = vsel %vm1885, %v1884, 0
        %v1887 = vshrl.u32 %v1886, 5
        %v1888 = vand.u32 %v1886, 31
        %v1889 = vsub.s32 32, %v1888
        %v1890 = vshrl.u32 683565275, %v1889
        %v1891 = vshll.u32 683565275, %v1888
        %v1892 = vshrl.u32 2475754826, %v1889
        %v1893 = vor.u32 %v1891, %v1892
        %v1894 = vshll.u32 2475754826, %v1888
        %v1895 = vshrl.u32 2131351028, %v1889
        %v1896 = vor.u32 %v1894, %v1895
        %v1897 = vshll.u32 2131351028, %v1888
        %v1898 = vshrl.u32 2102212464, %v1889
        %v1899 = vor.u32 %v1897, %v1898
        %v1900 = vshll.u32 2102212464, %v1888
        %v1901 = vshrl.u32 920167782, %v1889
        %v1902 = vor.u32 %v1900, %v1901
        %v1903 = vshll.u32 920167782, %v1888
        %v1904 = vshrl.u32 1326507024, %v1889
        %v1905 = vor.u32 %v1903, %v1904
        %vm1906 = vcmp.lt.s32.totalorder %v1887, 1
        %vm1907 = vcmp.lt.s32.totalorder %v1887, 2
        %vm1908 = vcmp.lt.s32.totalorder %v1887, 3
        %vm1909 = vcmp.lt.s32.totalorder %v1887, 4
        %v1910 = vsel %vm1906, %v1890, %v1893
        %v1911 = vsel %vm1909, %v1899, 2102212464
        %v1912 = vsel %vm1908, %v1896, %v1911
        %v1913 = vsel %vm1907, %v1910, %v1912
        %v1914 = vsel %vm1906, %v1893, %v1896
        %v1915 = vsel %vm1909, %v1902, 920167782
        %v1916 = vsel %vm1908, %v1899, %v1915
        %v1917 = vsel %vm1907, %v1914, %v1916
        %v1918 = vsel %vm1906, %v1896, %v1899
        %v1919 = vsel %vm1909, %v1905, 1326507024
        %v1920 = vsel %vm1908, %v1902, %v1919
        %v1921 = vsel %vm1907, %v1918, %v1920
        %v1922 = vshll.u32 %v1882, 8
        %v1923 = vand.u32 %v1922, 65535
        %v1924 = vshrl.u32 %v1922, 16
        %v1925 = vand.u32 %v1921, 65535
        %v1926 = vshrl.u32 %v1921, 16
        %v1927 = vmul.u32 %v1923, %v1925
        %v1928 = vmul.u32 %v1923, %v1926
        %v1929 = vmul.u32 %v1924, %v1925
        %v1930 = vmul.u32 %v1924, %v1926
        %v1931 = vshll.u32 %v1928, 16
        %v1932 = vshrl.u32 %v1928, 16
        %v1933 = vshll.u32 %v1929, 16
        %v1934 = vshrl.u32 %v1929, 16
        %vm1935 = vc.u32 %v1927, %v1931
        %v1936 = vsel %vm1935, 1, 0
        %v1937 = vadd.s32 %v1927, %v1931
        %v1938 = vadd.s32 %v1930, %v1936
        %vm1939 = vc.u32 %v1937, %v1933
        %v1940 = vsel %vm1939, 1, 0
        %v1941 = vadd.s32 %v1937, %v1933
        %v1942 = vadd.s32 %v1938, %v1940
        %v1943 = vadd.s32 %v1942, %v1932
        %v1944 = vadd.s32 %v1943, %v1934
        %v1945 = vand.u32 %v1922, 65535
        %v1946 = vshrl.u32 %v1922, 16
        %v1947 = vand.u32 %v1917, 65535
        %v1948 = vshrl.u32 %v1917, 16
        %v1949 = vmul.u32 %v1945, %v1947
        %v1950 = vmul.u32 %v1945, %v1948
        %v1951 = vmul.u32 %v1946, %v1947
        %v1952 = vmul.u32 %v1946, %v1948
        %v1953 = vshll.u32 %v1950, 16
        %v1954 = vshrl.u32 %v1950, 16
        %v1955 = vshll.u32 %v1951, 16
        %v1956 = vshrl.u32 %v1951, 16
        %vm1957 = vc.u32 %v1949, %v1953
        %v1958 = vsel %vm1957, 1, 0
        %v1959 = vadd.s32 %v1949, %v1953
        %v1960 = vadd.s32 %v1952, %v1958
        %vm1961 = vc.u32 %v1959, %v1955
        %v1962 = vsel %vm1961, 1, 0
        %v1963 = vadd.s32 %v1959, %v1955
        %v1964 = vadd.s32 %v1960, %v1962
        %v1965 = vadd.s32 %v1964, %v1954
        %v1966 = vadd.s32 %v1965, %v1956
        %v1967 = vmul.u32 %v1922, %v1913
        %v1968 = vadd.s32 %v1944, %v1963
        %vm1969 = vc.u32 %v1944, %v1963
        %v1970 = vadd.s32 %v1966, 1
        %v1971 = vsel %vm1969, %v1970, %v1966
        %v1972 = vadd.s32 %v1967, %v1971
        %v1973 = vadd.s32 %v1972, 536870912
        %v1974 = vshrl.u32 %v1973, 30
        %v1975 = vshll.u32 %v1974, 30
        %v1976 = vsub.s32 %v1972, %v1975
        %vm1977 = vcmp.lt.s32.totalorder %v1976, 0
        %v1978 = vsub.s32 0, %v1976
        %v1979 = vsel %vm1977, %v1978, %v1976
        %v1980 = vclz %v1979
        %v1981 = vsub.s32 %v1980, 2
        %vm1982 = vcmp.gt.s32.totalorder 0, %v1981
        %v1983 = vsel %vm1982, 0, %v1981
        %v1984 = vsub.s32 32, %v1983
        %v1985 = vshll.u32 %v1976, %v1983
        %v1986 = vshrl.u32 %v1968, %v1984
        %v1987 = vor.u32 %v1985, %v1986
        %v1988 = vsub.s32 4294967266, %v1983
        %v1989 = vadd.s32 %v1988, 127
        %v1990 = vshll.u32 %v1989, 23
        %v1991 = vor.u32 4788187, %v1990
        %v1992 = vand.u32 2147483647, %v1991
        %v1994 = vcvt.s32.f32 %v1987
        %v1995 = vmul.f32 %v1994, %v1992
        %v1996 = vxor.u32 %v1995, 2147483648
        %v1997 = vsel %vm1876, %v1996, %v1995
        %v1998 = vsub.s32 4, %v1974
        %v1999 = vsel %vm1876, %v1998, %v1974
        %v2000 = vsel %vm1875, %v302, %v1997
        %v2001 = vsel %vm1875, 0, %v1999
        %v2002 = vmul.f32 %v2000, %v2000
        %v2003 = vmul.f32 %v2002, -0.001358992
        %v2004 = vadd.f32 %v2003, 0.041655596
        %v2005 = vmul.f32 %v2002, %v2004
        %v2006 = vadd.f32 %v2005, -0.4999988
        %v2007 = vmul.f32 %v2002, %v2006
        %v2008 = vadd.f32 1.0, %v2007
        %v2009 = vmul.f32 %v2000, %v2000
        %v2010 = vmul.f32 %v2009, -0.00019511016
        %v2011 = vadd.f32 %v2010, 0.008332121
        %v2012 = vmul.f32 %v2009, %v2011
        %v2013 = vadd.f32 %v2012, -0.16666654
        %v2014 = vmul.f32 %v2009, %v2013
        %v2015 = vadd.f32 %v2014, 1.0
        %v2016 = vmul.f32 %v2015, %v2000
        %vm2017 = vweird.f32 %v302
        %v2018 = vadd.s32 %v2001, 3
        %v2019 = vand.u32 %v2018, 3
        %vm2020 = vcmp.lt.s32.totalorder %v2019, 2
        %vm2021 = vcmp.eq.s32.totalorder %v2019, 0
        %v2022 = vxor.u32 %v2016, 2147483648
        %v2023 = vsel %vm2021, %v2008, %v2022
        %vm2024 = vcmp.eq.s32.totalorder %v2019, 2
        %v2025 = vxor.u32 %v2008, 2147483648
        %v2026 = vsel %vm2024, %v2025, %v2016
        %v2027 = vsel %vm2020, %v2023, %v2026
        %v2028 = vsel %vm2017, nan, %v2027
        %v2029 = vand.u32 2147483647, %v303
        %vm2030 = vcmp.le.f32.partialorder %v2029, 0.7853982
        %vm2031 = vcmp.lt.s32.totalorder %v303, 0
        %v2032 = vand.u32 %v303, 2139095040
        %v2033 = vshrl.u32 %v2032, 23
        %v2034 = vsub.s32 %v2033, 127
        %v2035 = vand.u32 2147483647, %v303
        %v2036 = vand.u32 %v2035, 8388607
        %v2037 = vor.u32 %v2036, 8388608
        %v2038 = vsub.s32 0, %v2037
        %v2039 = vadd.s32 %v2034, 1
        %vm2040 = vcmp.gt.s32.totalorder %v2039, 0
        %v2041 = vsel %vm2040, %v2039, 0
        %v2042 = vshrl.u32 %v2041, 5
        %v2043 = vand.u32 %v2041, 31
        %v2044 = vsub.s32 32, %v2043
        %v2045 = vshrl.u32 683565275, %v2044
        %v2046 = vshll.u32 683565275, %v2043
        %v2047 = vshrl.u32 2475754826, %v2044
        %v2048 = vor.u32 %v2046, %v2047
        %v2049 = vshll.u32 2475754826, %v2043
        %v2050 = vshrl.u32 2131351028, %v2044
        %v2051 = vor.u32 %v2049, %v2050
        %v2052 = vshll.u32 2131351028, %v2043
        %v2053 = vshrl.u32 2102212464, %v2044
        %v2054 = vor.u32 %v2052, %v2053
        %v2055 = vshll.u32 2102212464, %v2043
        %v2056 = vshrl.u32 920167782, %v2044
        %v2057 = vor.u32 %v2055, %v2056
        %v2058 = vshll.u32 920167782, %v2043
        %v2059 = vshrl.u32 1326507024, %v2044
        %v2060 = vor.u32 %v2058, %v2059
        %vm2061 = vcmp.lt.s32.totalorder %v2042, 1
        %vm2062 = vcmp.lt.s32.totalorder %v2042, 2
        %vm2063 = vcmp.lt.s32.totalorder %v2042, 3
        %vm2064 = vcmp.lt.s32.totalorder %v2042, 4
        %v2065 = vsel %vm2061, %v2045, %v2048
        %v2066 = vsel %vm2064, %v2054, 2102212464
        %v2067 = vsel %vm2063, %v2051, %v2066
        %v2068 = vsel %vm2062, %v2065, %v2067
        %v2069 = vsel %vm2061, %v2048, %v2051
        %v2070 = vsel %vm2064, %v2057, 920167782
        %v2071 = vsel %vm2063, %v2054, %v2070
        %v2072 = vsel %vm2062, %v2069, %v2071
        %v2073 = vsel %vm2061, %v2051, %v2054
        %v2074 = vsel %vm2064, %v2060, 1326507024
        %v2075 = vsel %vm2063, %v2057, %v2074
        %v2076 = vsel %vm2062, %v2073, %v2075
        %v2077 = vshll.u32 %v2037, 8
        %v2078 = vand.u32 %v2077, 65535
        %v2079 = vshrl.u32 %v2077, 16
        %v2080 = vand.u32 %v2076, 65535
        %v2081 = vshrl.u32 %v2076, 16
        %v2082 = vmul.u32 %v2078, %v2080
        %v2083 = vmul.u32 %v2078, %v2081
        %v2084 = vmul.u32 %v2079, %v2080
        %v2085 = vmul.u32 %v2079, %v2081
        %v2086 = vshll.u32 %v2083, 16
        %v2087 = vshrl.u32 %v2083, 16
        %v2088 = vshll.u32 %v2084, 16
        %v2089 = vshrl.u32 %v2084, 16
        %vm2090 = vc.u32 %v2082, %v2086
        %v2091 = vsel %vm2090, 1, 0
        %v2092 = vadd.s32 %v2082, %v2086
        %v2093 = vadd.s32 %v2085, %v2091
        %vm2094 = vc.u32 %v2092, %v2088
        %v2095 = vsel %vm2094, 1, 0
        %v2096 = vadd.s32 %v2092, %v2088
        %v2097 = vadd.s32 %v2093, %v2095
        %v2098 = vadd.s32 %v2097, %v2087
        %v2099 = vadd.s32 %v2098, %v2089
        %v2100 = vand.u32 %v2077, 65535
        %v2101 = vshrl.u32 %v2077, 16
        %v2102 = vand.u32 %v2072, 65535
        %v2103 = vshrl.u32 %v2072, 16
        %v2104 = vmul.u32 %v2100, %v2102
        %v2105 = vmul.u32 %v2100, %v2103
        %v2106 = vmul.u32 %v2101, %v2102
        %v2107 = vmul.u32 %v2101, %v2103
        %v2108 = vshll.u32 %v2105, 16
        %v2109 = vshrl.u32 %v2105, 16
        %v2110 = vshll.u32 %v2106, 16
        %v2111 = vshrl.u32 %v2106, 16
        %vm2112 = vc.u32 %v2104, %v2108
        %v2113 = vsel %vm2112, 1, 0
        %v2114 = vadd.s32 %v2104, %v2108
        %v2115 = vadd.s32 %v2107, %v2113
        %vm2116 = vc.u32 %v2114, %v2110
        %v2117 = vsel %vm2116, 1, 0
        %v2118 = vadd.s32 %v2114, %v2110
        %v2119 = vadd.s32 %v2115, %v2117
        %v2120 = vadd.s32 %v2119, %v2109
        %v2121 = vadd.s32 %v2120, %v2111
        %v2122 = vmul.u32 %v2077, %v2068
        %v2123 = vadd.s32 %v2099, %v2118
        %vm2124 = vc.u32 %v2099, %v2118
        %v2125 = vadd.s32 %v2121, 1
        %v2126 = vsel %vm2124, %v2125, %v2121
        %v2127 = vadd.s32 %v2122, %v2126
        %v2128 = vadd.s32 %v2127, 536870912
        %v2129 = vshrl.u32 %v2128, 30
        %v2130 = vshll.u32 %v2129, 30
        %v2131 = vsub.s32 %v2127, %v2130
        %vm2132 = vcmp.lt.s32.totalorder %v2131, 0
        %v2133 = vsub.s32 0, %v2131
        %v2134 = vsel %vm2132, %v2133, %v2131
        %v2135 = vclz %v2134
        %v2136 = vsub.s32 %v2135, 2
        %vm2137 = vcmp.gt.s32.totalorder 0, %v2136
        %v2138 = vsel %vm2137, 0, %v2136
        %v2139 = vsub.s32 32, %v2138
        %v2140 = vshll.u32 %v2131, %v2138
        %v2141 = vshrl.u32 %v2123, %v2139
        %v2142 = vor.u32 %v2140, %v2141
        %v2143 = vsub.s32 4294967266, %v2138
        %v2144 = vadd.s32 %v2143, 127
        %v2145 = vshll.u32 %v2144, 23
        %v2146 = vor.u32 4788187, %v2145
        %v2147 = vand.u32 2147483647, %v2146
        %v2149 = vcvt.s32.f32 %v2142
        %v2150 = vmul.f32 %v2149, %v2147
        %v2151 = vxor.u32 %v2150, 2147483648
        %v2152 = vsel %vm2031, %v2151, %v2150
        %v2153 = vsub.s32 4, %v2129
        %v2154 = vsel %vm2031, %v2153, %v2129
        %v2155 = vsel %vm2030, %v303, %v2152
        %v2156 = vsel %vm2030, 0, %v2154
        %v2157 = vmul.f32 %v2155, %v2155
        %v2158 = vmul.f32 %v2157, -0.001358992
        %v2159 = vadd.f32 %v2158, 0.041655596
        %v2160 = vmul.f32 %v2157, %v2159
        %v2161 = vadd.f32 %v2160, -0.4999988
        %v2162 = vmul.f32 %v2157, %v2161
        %v2163 = vadd.f32 1.0, %v2162
        %v2164 = vmul.f32 %v2155, %v2155
        %v2165 = vmul.f32 %v2164, -0.00019511016
        %v2166 = vadd.f32 %v2165, 0.008332121
        %v2167 = vmul.f32 %v2164, %v2166
        %v2168 = vadd.f32 %v2167, -0.16666654
        %v2169 = vmul.f32 %v2164, %v2168
        %v2170 = vadd.f32 %v2169, 1.0
        %v2171 = vmul.f32 %v2170, %v2155
        %vm2172 = vweird.f32 %v303
        %v2173 = vadd.s32 %v2156, 3
        %v2174 = vand.u32 %v2173, 3
        %vm2175 = vcmp.lt.s32.totalorder %v2174, 2
        %vm2176 = vcmp.eq.s32.totalorder %v2174, 0
        %v2177 = vxor.u32 %v2171, 2147483648
        %v2178 = vsel %vm2176, %v2163, %v2177
        %vm2179 = vcmp.eq.s32.totalorder %v2174, 2
        %v2180 = vxor.u32 %v2163, 2147483648
        %v2181 = vsel %vm2179, %v2180, %v2171
        %v2182 = vsel %vm2175, %v2178, %v2181
        %v2183 = vsel %vm2172, nan, %v2182
        %v2184 = vand.u32 2147483647, %v304
        %vm2185 = vcmp.le.f32.partialorder %v2184, 0.7853982
        %vm2186 = vcmp.lt.s32.totalorder %v304, 0
        %v2187 = vand.u32 %v304, 2139095040
        %v2188 = vshrl.u32 %v2187, 23
        %v2189 = vsub.s32 %v2188, 127
        %v2190 = vand.u32 2147483647, %v304
        %v2191 = vand.u32 %v2190, 8388607
        %v2192 = vor.u32 %v2191, 8388608
        %v2193 = vsub.s32 0, %v2192
        %v2194 = vadd.s32 %v2189, 1
        %vm2195 = vcmp.gt.s32.totalorder %v2194, 0
        %v2196 = vsel %vm2195, %v2194, 0
        %v2197 = vshrl.u32 %v2196, 5
        %v2198 = vand.u32 %v2196, 31
        %v2199 = vsub.s32 32, %v2198
        %v2200 = vshrl.u32 683565275, %v2199
        %v2201 = vshll.u32 683565275, %v2198
        %v2202 = vshrl.u32 2475754826, %v2199
        %v2203 = vor.u32 %v2201, %v2202
        %v2204 = vshll.u32 2475754826, %v2198
        %v2205 = vshrl.u32 2131351028, %v2199
        %v2206 = vor.u32 %v2204, %v2205
        %v2207 = vshll.u32 2131351028, %v2198
        %v2208 = vshrl.u32 2102212464, %v2199
        %v2209 = vor.u32 %v2207, %v2208
        %v2210 = vshll.u32 2102212464, %v2198
        %v2211 = vshrl.u32 920167782, %v2199
        %v2212 = vor.u32 %v2210, %v2211
        %v2213 = vshll.u32 920167782, %v2198
        %v2214 = vshrl.u32 1326507024, %v2199
        %v2215 = vor.u32 %v2213, %v2214
        %vm2216 = vcmp.lt.s32.totalorder %v2197, 1
        %vm2217 = vcmp.lt.s32.totalorder %v2197, 2
        %vm2218 = vcmp.lt.s32.totalorder %v2197, 3
        %vm2219 = vcmp.lt.s32.totalorder %v2197, 4
        %v2220 = vsel %vm2216, %v2200, %v2203
        %v2221 = vsel %vm2219, %v2209, 2102212464
        %v2222 = vsel %vm2218, %v2206, %v2221
        %v2223 = vsel %vm2217, %v2220, %v2222
        %v2224 = vsel %vm2216, %v2203, %v2206
        %v2225 = vsel %vm2219, %v2212, 920167782
        %v2226 = vsel %vm2218, %v2209, %v2225
        %v2227 = vsel %vm2217, %v2224, %v2226
        %v2228 = vsel %vm2216, %v2206, %v2209
        %v2229 = vsel %vm2219, %v2215, 1326507024
        %v2230 = vsel %vm2218, %v2212, %v2229
        %v2231 = vsel %vm2217, %v2228, %v2230
        %v2232 = vshll.u32 %v2192, 8
        %v2233 = vand.u32 %v2232, 65535
        %v2234 = vshrl.u32 %v2232, 16
        %v2235 = vand.u32 %v2231, 65535
        %v2236 = vshrl.u32 %v2231, 16
        %v2237 = vmul.u32 %v2233, %v2235
        %v2238 = vmul.u32 %v2233, %v2236
        %v2239 = vmul.u32 %v2234, %v2235
        %v2240 = vmul.u32 %v2234, %v2236
        %v2241 = vshll.u32 %v2238, 16
        %v2242 = vshrl.u32 %v2238, 16
        %v2243 = vshll.u32 %v2239, 16
        %v2244 = vshrl.u32 %v2239, 16
        %vm2245 = vc.u32 %v2237, %v2241
        %v2246 = vsel %vm2245, 1, 0
        %v2247 = vadd.s32 %v2237, %v2241
        %v2248 = vadd.s32 %v2240, %v2246
        %vm2249 = vc.u32 %v2247, %v2243
        %v2250 = vsel %vm2249, 1, 0
        %v2251 = vadd.s32 %v2247, %v2243
        %v2252 = vadd.s32 %v2248, %v2250
        %v2253 = vadd.s32 %v2252, %v2242
        %v2254 = vadd.s32 %v2253, %v2244
        %v2255 = vand.u32 %v2232, 65535
        %v2256 = vshrl.u32 %v2232, 16
        %v2257 = vand.u32 %v2227, 65535
        %v2258 = vshrl.u32 %v2227, 16
        %v2259 = vmul.u32 %v2255, %v2257
        %v2260 = vmul.u32 %v2255, %v2258
        %v2261 = vmul.u32 %v2256, %v2257
        %v2262 = vmul.u32 %v2256, %v2258
        %v2263 = vshll.u32 %v2260, 16
        %v2264 = vshrl.u32 %v2260, 16
        %v2265 = vshll.u32 %v2261, 16
        %v2266 = vshrl.u32 %v2261, 16
        %vm2267 = vc.u32 %v2259, %v2263
        %v2268 = vsel %vm2267, 1, 0
        %v2269 = vadd.s32 %v2259, %v2263
        %v2270 = vadd.s32 %v2262, %v2268
        %vm2271 = vc.u32 %v2269, %v2265
        %v2272 = vsel %vm2271, 1, 0
        %v2273 = vadd.s32 %v2269, %v2265
        %v2274 = vadd.s32 %v2270, %v2272
        %v2275 = vadd.s32 %v2274, %v2264
        %v2276 = vadd.s32 %v2275, %v2266
        %v2277 = vmul.u32 %v2232, %v2223
        %v2278 = vadd.s32 %v2254, %v2273
        %vm2279 = vc.u32 %v2254, %v2273
        %v2280 = vadd.s32 %v2276, 1
        %v2281 = vsel %vm2279, %v2280, %v2276
        %v2282 = vadd.s32 %v2277, %v2281
        %v2283 = vadd.s32 %v2282, 536870912
        %v2284 = vshrl.u32 %v2283, 30
        %v2285 = vshll.u32 %v2284, 30
        %v2286 = vsub.s32 %v2282, %v2285
        %vm2287 = vcmp.lt.s32.totalorder %v2286, 0
        %v2288 = vsub.s32 0, %v2286
        %v2289 = vsel %vm2287, %v2288, %v2286
        %v2290 = vclz %v2289
        %v2291 = vsub.s32 %v2290, 2
        %vm2292 = vcmp.gt.s32.totalorder 0, %v2291
        %v2293 = vsel %vm2292, 0, %v2291
        %v2294 = vsub.s32 32, %v2293
        %v2295 = vshll.u32 %v2286, %v2293
        %v2296 = vshrl.u32 %v2278, %v2294
        %v2297 = vor.u32 %v2295, %v2296
        %v2298 = vsub.s32 4294967266, %v2293
        %v2299 = vadd.s32 %v2298, 127
        %v2300 = vshll.u32 %v2299, 23
        %v2301 = vor.u32 4788187, %v2300
        %v2302 = vand.u32 2147483647, %v2301
        %v2304 = vcvt.s32.f32 %v2297
        %v2305 = vmul.f32 %v2304, %v2302
        %v2306 = vxor.u32 %v2305, 2147483648
        %v2307 = vsel %vm2186, %v2306, %v2305
        %v2308 = vsub.s32 4, %v2284
        %v2309 = vsel %vm2186, %v2308, %v2284
        %v2310 = vsel %vm2185, %v304, %v2307
        %v2311 = vsel %vm2185, 0, %v2309
        %v2312 = vmul.f32 %v2310, %v2310
        %v2313 = vmul.f32 %v2312, -0.001358992
        %v2314 = vadd.f32 %v2313, 0.041655596
        %v2315 = vmul.f32 %v2312, %v2314
        %v2316 = vadd.f32 %v2315, -0.4999988
        %v2317 = vmul.f32 %v2312, %v2316
        %v2318 = vadd.f32 1.0, %v2317
        %v2319 = vmul.f32 %v2310, %v2310
        %v2320 = vmul.f32 %v2319, -0.00019511016
        %v2321 = vadd.f32 %v2320, 0.008332121
        %v2322 = vmul.f32 %v2319, %v2321
        %v2323 = vadd.f32 %v2322, -0.16666654
        %v2324 = vmul.f32 %v2319, %v2323
        %v2325 = vadd.f32 %v2324, 1.0
        %v2326 = vmul.f32 %v2325, %v2310
        %vm2327 = vweird.f32 %v304
        %v2328 = vadd.s32 %v2311, 3
        %v2329 = vand.u32 %v2328, 3
        %vm2330 = vcmp.lt.s32.totalorder %v2329, 2
        %vm2331 = vcmp.eq.s32.totalorder %v2329, 0
        %v2332 = vxor.u32 %v2326, 2147483648
        %v2333 = vsel %vm2331, %v2318, %v2332
        %vm2334 = vcmp.eq.s32.totalorder %v2329, 2
        %v2335 = vxor.u32 %v2318, 2147483648
        %v2336 = vsel %vm2334, %v2335, %v2326
        %v2337 = vsel %vm2330, %v2333, %v2336
        %v2338 = vsel %vm2327, nan, %v2337
        %v2339 = vand.u32 2147483647, %v305
        %vm2340 = vcmp.le.f32.partialorder %v2339, 0.7853982
        %vm2341 = vcmp.lt.s32.totalorder %v305, 0
        %v2342 = vand.u32 %v305, 2139095040
        %v2343 = vshrl.u32 %v2342, 23
        %v2344 = vsub.s32 %v2343, 127
        %v2345 = vand.u32 2147483647, %v305
        %v2346 = vand.u32 %v2345, 8388607
        %v2347 = vor.u32 %v2346, 8388608
        %v2348 = vsub.s32 0, %v2347
        %v2349 = vadd.s32 %v2344, 1
        %vm2350 = vcmp.gt.s32.totalorder %v2349, 0
        %v2351 = vsel %vm2350, %v2349, 0
        %v2352 = vshrl.u32 %v2351, 5
        %v2353 = vand.u32 %v2351, 31
        %v2354 = vsub.s32 32, %v2353
        %v2355 = vshrl.u32 683565275, %v2354
        %v2356 = vshll.u32 683565275, %v2353
        %v2357 = vshrl.u32 2475754826, %v2354
        %v2358 = vor.u32 %v2356, %v2357
        %v2359 = vshll.u32 2475754826, %v2353
        %v2360 = vshrl.u32 2131351028, %v2354
        %v2361 = vor.u32 %v2359, %v2360
        %v2362 = vshll.u32 2131351028, %v2353
        %v2363 = vshrl.u32 2102212464, %v2354
        %v2364 = vor.u32 %v2362, %v2363
        %v2365 = vshll.u32 2102212464, %v2353
        %v2366 = vshrl.u32 920167782, %v2354
        %v2367 = vor.u32 %v2365, %v2366
        %v2368 = vshll.u32 920167782, %v2353
        %v2369 = vshrl.u32 1326507024, %v2354
        %v2370 = vor.u32 %v2368, %v2369
        %vm2371 = vcmp.lt.s32.totalorder %v2352, 1
        %vm2372 = vcmp.lt.s32.totalorder %v2352, 2
        %vm2373 = vcmp.lt.s32.totalorder %v2352, 3
        %vm2374 = vcmp.lt.s32.totalorder %v2352, 4
        %v2375 = vsel %vm2371, %v2355, %v2358
        %v2376 = vsel %vm2374, %v2364, 2102212464
        %v2377 = vsel %vm2373, %v2361, %v2376
        %v2378 = vsel %vm2372, %v2375, %v2377
        %v2379 = vsel %vm2371, %v2358, %v2361
        %v2380 = vsel %vm2374, %v2367, 920167782
        %v2381 = vsel %vm2373, %v2364, %v2380
        %v2382 = vsel %vm2372, %v2379, %v2381
        %v2383 = vsel %vm2371, %v2361, %v2364
        %v2384 = vsel %vm2374, %v2370, 1326507024
        %v2385 = vsel %vm2373, %v2367, %v2384
        %v2386 = vsel %vm2372, %v2383, %v2385
        %v2387 = vshll.u32 %v2347, 8
        %v2388 = vand.u32 %v2387, 65535
        %v2389 = vshrl.u32 %v2387, 16
        %v2390 = vand.u32 %v2386, 65535
        %v2391 = vshrl.u32 %v2386, 16
        %v2392 = vmul.u32 %v2388, %v2390
        %v2393 = vmul.u32 %v2388, %v2391
        %v2394 = vmul.u32 %v2389, %v2390
        %v2395 = vmul.u32 %v2389, %v2391
        %v2396 = vshll.u32 %v2393, 16
        %v2397 = vshrl.u32 %v2393, 16
        %v2398 = vshll.u32 %v2394, 16
        %v2399 = vshrl.u32 %v2394, 16
        %vm2400 = vc.u32 %v2392, %v2396
        %v2401 = vsel %vm2400, 1, 0
        %v2402 = vadd.s32 %v2392, %v2396
        %v2403 = vadd.s32 %v2395, %v2401
        %vm2404 = vc.u32 %v2402, %v2398
        %v2405 = vsel %vm2404, 1, 0
        %v2406 = vadd.s32 %v2402, %v2398
        %v2407 = vadd.s32 %v2403, %v2405
        %v2408 = vadd.s32 %v2407, %v2397
        %v2409 = vadd.s32 %v2408, %v2399
        %v2410 = vand.u32 %v2387, 65535
        %v2411 = vshrl.u32 %v2387, 16
        %v2412 = vand.u32 %v2382, 65535
        %v2413 = vshrl.u32 %v2382, 16
        %v2414 = vmul.u32 %v2410, %v2412
        %v2415 = vmul.u32 %v2410, %v2413
        %v2416 = vmul.u32 %v2411, %v2412
        %v2417 = vmul.u32 %v2411, %v2413
        %v2418 = vshll.u32 %v2415, 16
        %v2419 = vshrl.u32 %v2415, 16
        %v2420 = vshll.u32 %v2416, 16
        %v2421 = vshrl.u32 %v2416, 16
        %vm2422 = vc.u32 %v2414, %v2418
        %v2423 = vsel %vm2422, 1, 0
        %v2424 = vadd.s32 %v2414, %v2418
        %v2425 = vadd.s32 %v2417, %v2423
        %vm2426 = vc.u32 %v2424, %v2420
        %v2427 = vsel %vm2426, 1, 0
        %v2428 = vadd.s32 %v2424, %v2420
        %v2429 = vadd.s32 %v2425, %v2427
        %v2430 = vadd.s32 %v2429, %v2419
        %v2431 = vadd.s32 %v2430, %v2421
        %v2432 = vmul.u32 %v2387, %v2378
        %v2433 = vadd.s32 %v2409, %v2428
        %vm2434 = vc.u32 %v2409, %v2428
        %v2435 = vadd.s32 %v2431, 1
        %v2436 = vsel %vm2434, %v2435, %v2431
        %v2437 = vadd.s32 %v2432, %v2436
        %v2438 = vadd.s32 %v2437, 536870912
        %v2439 = vshrl.u32 %v2438, 30
        %v2440 = vshll.u32 %v2439, 30
        %v2441 = vsub.s32 %v2437, %v2440
        %vm2442 = vcmp.lt.s32.totalorder %v2441, 0
        %v2443 = vsub.s32 0, %v2441
        %v2444 = vsel %vm2442, %v2443, %v2441
        %v2445 = vclz %v2444
        %v2446 = vsub.s32 %v2445, 2
        %vm2447 = vcmp.gt.s32.totalorder 0, %v2446
        %v2448 = vsel %vm2447, 0, %v2446
        %v2449 = vsub.s32 32, %v2448
        %v2450 = vshll.u32 %v2441, %v2448
        %v2451 = vshrl.u32 %v2433, %v2449
        %v2452 = vor.u32 %v2450, %v2451
        %v2453 = vsub.s32 4294967266, %v2448
        %v2454 = vadd.s32 %v2453, 127
        %v2455 = vshll.u32 %v2454, 23
        %v2456 = vor.u32 4788187, %v2455
        %v2457 = vand.u32 2147483647, %v2456
        %v2459 = vcvt.s32.f32 %v2452
        %v2460 = vmul.f32 %v2459, %v2457
        %v2461 = vxor.u32 %v2460, 2147483648
        %v2462 = vsel %vm2341, %v2461, %v2460
        %v2463 = vsub.s32 4, %v2439
        %v2464 = vsel %vm2341, %v2463, %v2439
        %v2465 = vsel %vm2340, %v305, %v2462
        %v2466 = vsel %vm2340, 0, %v2464
        %v2467 = vmul.f32 %v2465, %v2465
        %v2468 = vmul.f32 %v2467, -0.001358992
        %v2469 = vadd.f32 %v2468, 0.041655596
        %v2470 = vmul.f32 %v2467, %v2469
        %v2471 = vadd.f32 %v2470, -0.4999988
        %v2472 = vmul.f32 %v2467, %v2471
        %v2473 = vadd.f32 1.0, %v2472
        %v2474 = vmul.f32 %v2465, %v2465
        %v2475 = vmul.f32 %v2474, -0.00019511016
        %v2476 = vadd.f32 %v2475, 0.008332121
        %v2477 = vmul.f32 %v2474, %v2476
        %v2478 = vadd.f32 %v2477, -0.16666654
        %v2479 = vmul.f32 %v2474, %v2478
        %v2480 = vadd.f32 %v2479, 1.0
        %v2481 = vmul.f32 %v2480, %v2465
        %vm2482 = vweird.f32 %v305
        %v2483 = vadd.s32 %v2466, 3
        %v2484 = vand.u32 %v2483, 3
        %vm2485 = vcmp.lt.s32.totalorder %v2484, 2
        %vm2486 = vcmp.eq.s32.totalorder %v2484, 0
        %v2487 = vxor.u32 %v2481, 2147483648
        %v2488 = vsel %vm2486, %v2473, %v2487
        %vm2489 = vcmp.eq.s32.totalorder %v2484, 2
        %v2490 = vxor.u32 %v2473, 2147483648
        %v2491 = vsel %vm2489, %v2490, %v2481
        %v2492 = vsel %vm2485, %v2488, %v2491
        %v2493 = vsel %vm2482, nan, %v2492
        %v2494 = vand.u32 2147483647, %v306
        %vm2495 = vcmp.le.f32.partialorder %v2494, 0.7853982
        %vm2496 = vcmp.lt.s32.totalorder %v306, 0
        %v2497 = vand.u32 %v306, 2139095040
        %v2498 = vshrl.u32 %v2497, 23
        %v2499 = vsub.s32 %v2498, 127
        %v2500 = vand.u32 2147483647, %v306
        %v2501 = vand.u32 %v2500, 8388607
        %v2502 = vor.u32 %v2501, 8388608
        %v2503 = vsub.s32 0, %v2502
        %v2504 = vadd.s32 %v2499, 1
        %vm2505 = vcmp.gt.s32.totalorder %v2504, 0
        %v2506 = vsel %vm2505, %v2504, 0
        %v2507 = vshrl.u32 %v2506, 5
        %v2508 = vand.u32 %v2506, 31
        %v2509 = vsub.s32 32, %v2508
        %v2510 = vshrl.u32 683565275, %v2509
        %v2511 = vshll.u32 683565275, %v2508
        %v2512 = vshrl.u32 2475754826, %v2509
        %v2513 = vor.u32 %v2511, %v2512
        %v2514 = vshll.u32 2475754826, %v2508
        %v2515 = vshrl.u32 2131351028, %v2509
        %v2516 = vor.u32 %v2514, %v2515
        %v2517 = vshll.u32 2131351028, %v2508
        %v2518 = vshrl.u32 2102212464, %v2509
        %v2519 = vor.u32 %v2517, %v2518
        %v2520 = vshll.u32 2102212464, %v2508
        %v2521 = vshrl.u32 920167782, %v2509
        %v2522 = vor.u32 %v2520, %v2521
        %v2523 = vshll.u32 920167782, %v2508
        %v2524 = vshrl.u32 1326507024, %v2509
        %v2525 = vor.u32 %v2523, %v2524
        %vm2526 = vcmp.lt.s32.totalorder %v2507, 1
        %vm2527 = vcmp.lt.s32.totalorder %v2507, 2
        %vm2528 = vcmp.lt.s32.totalorder %v2507, 3
        %vm2529 = vcmp.lt.s32.totalorder %v2507, 4
        %v2530 = vsel %vm2526, %v2510, %v2513
        %v2531 = vsel %vm2529, %v2519, 2102212464
        %v2532 = vsel %vm2528, %v2516, %v2531
        %v2533 = vsel %vm2527, %v2530, %v2532
        %v2534 = vsel %vm2526, %v2513, %v2516
        %v2535 = vsel %vm2529, %v2522, 920167782
        %v2536 = vsel %vm2528, %v2519, %v2535
        %v2537 = vsel %vm2527, %v2534, %v2536
        %v2538 = vsel %vm2526, %v2516, %v2519
        %v2539 = vsel %vm2529, %v2525, 1326507024
        %v2540 = vsel %vm2528, %v2522, %v2539
        %v2541 = vsel %vm2527, %v2538, %v2540
        %v2542 = vshll.u32 %v2502, 8
        %v2543 = vand.u32 %v2542, 65535
        %v2544 = vshrl.u32 %v2542, 16
        %v2545 = vand.u32 %v2541, 65535
        %v2546 = vshrl.u32 %v2541, 16
        %v2547 = vmul.u32 %v2543, %v2545
        %v2548 = vmul.u32 %v2543, %v2546
        %v2549 = vmul.u32 %v2544, %v2545
        %v2550 = vmul.u32 %v2544, %v2546
        %v2551 = vshll.u32 %v2548, 16
        %v2552 = vshrl.u32 %v2548, 16
        %v2553 = vshll.u32 %v2549, 16
        %v2554 = vshrl.u32 %v2549, 16
        %vm2555 = vc.u32 %v2547, %v2551
        %v2556 = vsel %vm2555, 1, 0
        %v2557 = vadd.s32 %v2547, %v2551
        %v2558 = vadd.s32 %v2550, %v2556
        %vm2559 = vc.u32 %v2557, %v2553
        %v2560 = vsel %vm2559, 1, 0
        %v2561 = vadd.s32 %v2557, %v2553
        %v2562 = vadd.s32 %v2558, %v2560
        %v2563 = vadd.s32 %v2562, %v2552
        %v2564 = vadd.s32 %v2563, %v2554
        %v2565 = vand.u32 %v2542, 65535
        %v2566 = vshrl.u32 %v2542, 16
        %v2567 = vand.u32 %v2537, 65535
        %v2568 = vshrl.u32 %v2537, 16
        %v2569 = vmul.u32 %v2565, %v2567
        %v2570 = vmul.u32 %v2565, %v2568
        %v2571 = vmul.u32 %v2566, %v2567
        %v2572 = vmul.u32 %v2566, %v2568
        %v2573 = vshll.u32 %v2570, 16
        %v2574 = vshrl.u32 %v2570, 16
        %v2575 = vshll.u32 %v2571, 16
        %v2576 = vshrl.u32 %v2571, 16
        %vm2577 = vc.u32 %v2569, %v2573
        %v2578 = vsel %vm2577, 1, 0
        %v2579 = vadd.s32 %v2569, %v2573
        %v2580 = vadd.s32 %v2572, %v2578
        %vm2581 = vc.u32 %v2579, %v2575
        %v2582 = vsel %vm2581, 1, 0
        %v2583 = vadd.s32 %v2579, %v2575
        %v2584 = vadd.s32 %v2580, %v2582
        %v2585 = vadd.s32 %v2584, %v2574
        %v2586 = vadd.s32 %v2585, %v2576
        %v2587 = vmul.u32 %v2542, %v2533
        %v2588 = vadd.s32 %v2564, %v2583
        %vm2589 = vc.u32 %v2564, %v2583
        %v2590 = vadd.s32 %v2586, 1
        %v2591 = vsel %vm2589, %v2590, %v2586
        %v2592 = vadd.s32 %v2587, %v2591
        %v2593 = vadd.s32 %v2592, 536870912
        %v2594 = vshrl.u32 %v2593, 30
        %v2595 = vshll.u32 %v2594, 30
        %v2596 = vsub.s32 %v2592, %v2595
        %vm2597 = vcmp.lt.s32.totalorder %v2596, 0
        %v2598 = vsub.s32 0, %v2596
        %v2599 = vsel %vm2597, %v2598, %v2596
        %v2600 = vclz %v2599
        %v2601 = vsub.s32 %v2600, 2
        %vm2602 = vcmp.gt.s32.totalorder 0, %v2601
        %v2603 = vsel %vm2602, 0, %v2601
        %v2604 = vsub.s32 32, %v2603
        %v2605 = vshll.u32 %v2596, %v2603
        %v2606 = vshrl.u32 %v2588, %v2604
        %v2607 = vor.u32 %v2605, %v2606
        %v2608 = vsub.s32 4294967266, %v2603
        %v2609 = vadd.s32 %v2608, 127
        %v2610 = vshll.u32 %v2609, 23
        %v2611 = vor.u32 4788187, %v2610
        %v2612 = vand.u32 2147483647, %v2611
        %v2614 = vcvt.s32.f32 %v2607
        %v2615 = vmul.f32 %v2614, %v2612
        %v2616 = vxor.u32 %v2615, 2147483648
        %v2617 = vsel %vm2496, %v2616, %v2615
        %v2618 = vsub.s32 4, %v2594
        %v2619 = vsel %vm2496, %v2618, %v2594
        %v2620 = vsel %vm2495, %v306, %v2617
        %v2621 = vsel %vm2495, 0, %v2619
        %v2622 = vmul.f32 %v2620, %v2620
        %v2623 = vmul.f32 %v2622, -0.001358992
        %v2624 = vadd.f32 %v2623, 0.041655596
        %v2625 = vmul.f32 %v2622, %v2624
        %v2626 = vadd.f32 %v2625, -0.4999988
        %v2627 = vmul.f32 %v2622, %v2626
        %v2628 = vadd.f32 1.0, %v2627
        %v2629 = vmul.f32 %v2620, %v2620
        %v2630 = vmul.f32 %v2629, -0.00019511016
        %v2631 = vadd.f32 %v2630, 0.008332121
        %v2632 = vmul.f32 %v2629, %v2631
        %v2633 = vadd.f32 %v2632, -0.16666654
        %v2634 = vmul.f32 %v2629, %v2633
        %v2635 = vadd.f32 %v2634, 1.0
        %v2636 = vmul.f32 %v2635, %v2620
        %vm2637 = vweird.f32 %v306
        %v2638 = vadd.s32 %v2621, 3
        %v2639 = vand.u32 %v2638, 3
        %vm2640 = vcmp.lt.s32.totalorder %v2639, 2
        %vm2641 = vcmp.eq.s32.totalorder %v2639, 0
        %v2642 = vxor.u32 %v2636, 2147483648
        %v2643 = vsel %vm2641, %v2628, %v2642
        %vm2644 = vcmp.eq.s32.totalorder %v2639, 2
        %v2645 = vxor.u32 %v2628, 2147483648
        %v2646 = vsel %vm2644, %v2645, %v2636
        %v2647 = vsel %vm2640, %v2643, %v2646
        %v2648 = vsel %vm2637, nan, %v2647
        %v2649 = vand.u32 2147483647, %v307
        %vm2650 = vcmp.le.f32.partialorder %v2649, 0.7853982
        %vm2651 = vcmp.lt.s32.totalorder %v307, 0
        %v2652 = vand.u32 %v307, 2139095040
        %v2653 = vshrl.u32 %v2652, 23
        %v2654 = vsub.s32 %v2653, 127
        %v2655 = vand.u32 2147483647, %v307
        %v2656 = vand.u32 %v2655, 8388607
        %v2657 = vor.u32 %v2656, 8388608
        %v2658 = vsub.s32 0, %v2657
        %v2659 = vadd.s32 %v2654, 1
        %vm2660 = vcmp.gt.s32.totalorder %v2659, 0
        %v2661 = vsel %vm2660, %v2659, 0
        %v2662 = vshrl.u32 %v2661, 5
        %v2663 = vand.u32 %v2661, 31
        %v2664 = vsub.s32 32, %v2663
        %v2665 = vshrl.u32 683565275, %v2664
        %v2666 = vshll.u32 683565275, %v2663
        %v2667 = vshrl.u32 2475754826, %v2664
        %v2668 = vor.u32 %v2666, %v2667
        %v2669 = vshll.u32 2475754826, %v2663
        %v2670 = vshrl.u32 2131351028, %v2664
        %v2671 = vor.u32 %v2669, %v2670
        %v2672 = vshll.u32 2131351028, %v2663
        %v2673 = vshrl.u32 2102212464, %v2664
        %v2674 = vor.u32 %v2672, %v2673
        %v2675 = vshll.u32 2102212464, %v2663
        %v2676 = vshrl.u32 920167782, %v2664
        %v2677 = vor.u32 %v2675, %v2676
        %v2678 = vshll.u32 920167782, %v2663
        %v2679 = vshrl.u32 1326507024, %v2664
        %v2680 = vor.u32 %v2678, %v2679
        %vm2681 = vcmp.lt.s32.totalorder %v2662, 1
        %vm2682 = vcmp.lt.s32.totalorder %v2662, 2
        %vm2683 = vcmp.lt.s32.totalorder %v2662, 3
        %vm2684 = vcmp.lt.s32.totalorder %v2662, 4
        %v2685 = vsel %vm2681, %v2665, %v2668
        %v2686 = vsel %vm2684, %v2674, 2102212464
        %v2687 = vsel %vm2683, %v2671, %v2686
        %v2688 = vsel %vm2682, %v2685, %v2687
        %v2689 = vsel %vm2681, %v2668, %v2671
        %v2690 = vsel %vm2684, %v2677, 920167782
        %v2691 = vsel %vm2683, %v2674, %v2690
        %v2692 = vsel %vm2682, %v2689, %v2691
        %v2693 = vsel %vm2681, %v2671, %v2674
        %v2694 = vsel %vm2684, %v2680, 1326507024
        %v2695 = vsel %vm2683, %v2677, %v2694
        %v2696 = vsel %vm2682, %v2693, %v2695
        %v2697 = vshll.u32 %v2657, 8
        %v2698 = vand.u32 %v2697, 65535
        %v2699 = vshrl.u32 %v2697, 16
        %v2700 = vand.u32 %v2696, 65535
        %v2701 = vshrl.u32 %v2696, 16
        %v2702 = vmul.u32 %v2698, %v2700
        %v2703 = vmul.u32 %v2698, %v2701
        %v2704 = vmul.u32 %v2699, %v2700
        %v2705 = vmul.u32 %v2699, %v2701
        %v2706 = vshll.u32 %v2703, 16
        %v2707 = vshrl.u32 %v2703, 16
        %v2708 = vshll.u32 %v2704, 16
        %v2709 = vshrl.u32 %v2704, 16
        %vm2710 = vc.u32 %v2702, %v2706
        %v2711 = vsel %vm2710, 1, 0
        %v2712 = vadd.s32 %v2702, %v2706
        %v2713 = vadd.s32 %v2705, %v2711
        %vm2714 = vc.u32 %v2712, %v2708
        %v2715 = vsel %vm2714, 1, 0
        %v2716 = vadd.s32 %v2712, %v2708
        %v2717 = vadd.s32 %v2713, %v2715
        %v2718 = vadd.s32 %v2717, %v2707
        %v2719 = vadd.s32 %v2718, %v2709
        %v2720 = vand.u32 %v2697, 65535
        %v2721 = vshrl.u32 %v2697, 16
        %v2722 = vand.u32 %v2692, 65535
        %v2723 = vshrl.u32 %v2692, 16
        %v2724 = vmul.u32 %v2720, %v2722
        %v2725 = vmul.u32 %v2720, %v2723
        %v2726 = vmul.u32 %v2721, %v2722
        %v2727 = vmul.u32 %v2721, %v2723
        %v2728 = vshll.u32 %v2725, 16
        %v2729 = vshrl.u32 %v2725, 16
        %v2730 = vshll.u32 %v2726, 16
        %v2731 = vshrl.u32 %v2726, 16
        %vm2732 = vc.u32 %v2724, %v2728
        %v2733 = vsel %vm2732, 1, 0
        %v2734 = vadd.s32 %v2724, %v2728
        %v2735 = vadd.s32 %v2727, %v2733
        %vm2736 = vc.u32 %v2734, %v2730
        %v2737 = vsel %vm2736, 1, 0
        %v2738 = vadd.s32 %v2734, %v2730
        %v2739 = vadd.s32 %v2735, %v2737
        %v2740 = vadd.s32 %v2739, %v2729
        %v2741 = vadd.s32 %v2740, %v2731
        %v2742 = vmul.u32 %v2697, %v2688
        %v2743 = vadd.s32 %v2719, %v2738
        %vm2744 = vc.u32 %v2719, %v2738
        %v2745 = vadd.s32 %v2741, 1
        %v2746 = vsel %vm2744, %v2745, %v2741
        %v2747 = vadd.s32 %v2742, %v2746
        %v2748 = vadd.s32 %v2747, 536870912
        %v2749 = vshrl.u32 %v2748, 30
        %v2750 = vshll.u32 %v2749, 30
        %v2751 = vsub.s32 %v2747, %v2750
        %vm2752 = vcmp.lt.s32.totalorder %v2751, 0
        %v2753 = vsub.s32 0, %v2751
        %v2754 = vsel %vm2752, %v2753, %v2751
        %v2755 = vclz %v2754
        %v2756 = vsub.s32 %v2755, 2
        %vm2757 = vcmp.gt.s32.totalorder 0, %v2756
        %v2758 = vsel %vm2757, 0, %v2756
        %v2759 = vsub.s32 32, %v2758
        %v2760 = vshll.u32 %v2751, %v2758
        %v2761 = vshrl.u32 %v2743, %v2759
        %v2762 = vor.u32 %v2760, %v2761
        %v2763 = vsub.s32 4294967266, %v2758
        %v2764 = vadd.s32 %v2763, 127
        %v2765 = vshll.u32 %v2764, 23
        %v2766 = vor.u32 4788187, %v2765
        %v2767 = vand.u32 2147483647, %v2766
        %v2769 = vcvt.s32.f32 %v2762
        %v2770 = vmul.f32 %v2769, %v2767
        %v2771 = vxor.u32 %v2770, 2147483648
        %v2772 = vsel %vm2651, %v2771, %v2770
        %v2773 = vsub.s32 4, %v2749
        %v2774 = vsel %vm2651, %v2773, %v2749
        %v2775 = vsel %vm2650, %v307, %v2772
        %v2776 = vsel %vm2650, 0, %v2774
        %v2777 = vmul.f32 %v2775, %v2775
        %v2778 = vmul.f32 %v2777, -0.001358992
        %v2779 = vadd.f32 %v2778, 0.041655596
        %v2780 = vmul.f32 %v2777, %v2779
        %v2781 = vadd.f32 %v2780, -0.4999988
        %v2782 = vmul.f32 %v2777, %v2781
        %v2783 = vadd.f32 1.0, %v2782
        %v2784 = vmul.f32 %v2775, %v2775
        %v2785 = vmul.f32 %v2784, -0.00019511016
        %v2786 = vadd.f32 %v2785, 0.008332121
        %v2787 = vmul.f32 %v2784, %v2786
        %v2788 = vadd.f32 %v2787, -0.16666654
        %v2789 = vmul.f32 %v2784, %v2788
        %v2790 = vadd.f32 %v2789, 1.0
        %v2791 = vmul.f32 %v2790, %v2775
        %vm2792 = vweird.f32 %v307
        %v2793 = vadd.s32 %v2776, 3
        %v2794 = vand.u32 %v2793, 3
        %vm2795 = vcmp.lt.s32.totalorder %v2794, 2
        %vm2796 = vcmp.eq.s32.totalorder %v2794, 0
        %v2797 = vxor.u32 %v2791, 2147483648
        %v2798 = vsel %vm2796, %v2783, %v2797
        %vm2799 = vcmp.eq.s32.totalorder %v2794, 2
        %v2800 = vxor.u32 %v2783, 2147483648
        %v2801 = vsel %vm2799, %v2800, %v2791
        %v2802 = vsel %vm2795, %v2798, %v2801
        %v2803 = vsel %vm2792, nan, %v2802
        %v2804 = vand.u32 2147483647, %v308
        %vm2805 = vcmp.le.f32.partialorder %v2804, 0.7853982
        %vm2806 = vcmp.lt.s32.totalorder %v308, 0
        %v2807 = vand.u32 %v308, 2139095040
        %v2808 = vshrl.u32 %v2807, 23
        %v2809 = vsub.s32 %v2808, 127
        %v2810 = vand.u32 2147483647, %v308
        %v2811 = vand.u32 %v2810, 8388607
        %v2812 = vor.u32 %v2811, 8388608
        %v2813 = vsub.s32 0, %v2812
        %v2814 = vadd.s32 %v2809, 1
        %vm2815 = vcmp.gt.s32.totalorder %v2814, 0
        %v2816 = vsel %vm2815, %v2814, 0
        %v2817 = vshrl.u32 %v2816, 5
        %v2818 = vand.u32 %v2816, 31
        %v2819 = vsub.s32 32, %v2818
        %v2820 = vshrl.u32 683565275, %v2819
        %v2821 = vshll.u32 683565275, %v2818
        %v2822 = vshrl.u32 2475754826, %v2819
        %v2823 = vor.u32 %v2821, %v2822
        %v2824 = vshll.u32 2475754826, %v2818
        %v2825 = vshrl.u32 2131351028, %v2819
        %v2826 = vor.u32 %v2824, %v2825
        %v2827 = vshll.u32 2131351028, %v2818
        %v2828 = vshrl.u32 2102212464, %v2819
        %v2829 = vor.u32 %v2827, %v2828
        %v2830 = vshll.u32 2102212464, %v2818
        %v2831 = vshrl.u32 920167782, %v2819
        %v2832 = vor.u32 %v2830, %v2831
        %v2833 = vshll.u32 920167782, %v2818
        %v2834 = vshrl.u32 1326507024, %v2819
        %v2835 = vor.u32 %v2833, %v2834
        %vm2836 = vcmp.lt.s32.totalorder %v2817, 1
        %vm2837 = vcmp.lt.s32.totalorder %v2817, 2
        %vm2838 = vcmp.lt.s32.totalorder %v2817, 3
        %vm2839 = vcmp.lt.s32.totalorder %v2817, 4
        %v2840 = vsel %vm2836, %v2820, %v2823
        %v2841 = vsel %vm2839, %v2829, 2102212464
        %v2842 = vsel %vm2838, %v2826, %v2841
        %v2843 = vsel %vm2837, %v2840, %v2842
        %v2844 = vsel %vm2836, %v2823, %v2826
        %v2845 = vsel %vm2839, %v2832, 920167782
        %v2846 = vsel %vm2838, %v2829, %v2845
        %v2847 = vsel %vm2837, %v2844, %v2846
        %v2848 = vsel %vm2836, %v2826, %v2829
        %v2849 = vsel %vm2839, %v2835, 1326507024
        %v2850 = vsel %vm2838, %v2832, %v2849
        %v2851 = vsel %vm2837, %v2848, %v2850
        %v2852 = vshll.u32 %v2812, 8
        %v2853 = vand.u32 %v2852, 65535
        %v2854 = vshrl.u32 %v2852, 16
        %v2855 = vand.u32 %v2851, 65535
        %v2856 = vshrl.u32 %v2851, 16
        %v2857 = vmul.u32 %v2853, %v2855
        %v2858 = vmul.u32 %v2853, %v2856
        %v2859 = vmul.u32 %v2854, %v2855
        %v2860 = vmul.u32 %v2854, %v2856
        %v2861 = vshll.u32 %v2858, 16
        %v2862 = vshrl.u32 %v2858, 16
        %v2863 = vshll.u32 %v2859, 16
        %v2864 = vshrl.u32 %v2859, 16
        %vm2865 = vc.u32 %v2857, %v2861
        %v2866 = vsel %vm2865, 1, 0
        %v2867 = vadd.s32 %v2857, %v2861
        %v2868 = vadd.s32 %v2860, %v2866
        %vm2869 = vc.u32 %v2867, %v2863
        %v2870 = vsel %vm2869, 1, 0
        %v2871 = vadd.s32 %v2867, %v2863
        %v2872 = vadd.s32 %v2868, %v2870
        %v2873 = vadd.s32 %v2872, %v2862
        %v2874 = vadd.s32 %v2873, %v2864
        %v2875 = vand.u32 %v2852, 65535
        %v2876 = vshrl.u32 %v2852, 16
        %v2877 = vand.u32 %v2847, 65535
        %v2878 = vshrl.u32 %v2847, 16
        %v2879 = vmul.u32 %v2875, %v2877
        %v2880 = vmul.u32 %v2875, %v2878
        %v2881 = vmul.u32 %v2876, %v2877
        %v2882 = vmul.u32 %v2876, %v2878
        %v2883 = vshll.u32 %v2880, 16
        %v2884 = vshrl.u32 %v2880, 16
        %v2885 = vshll.u32 %v2881, 16
        %v2886 = vshrl.u32 %v2881, 16
        %vm2887 = vc.u32 %v2879, %v2883
        %v2888 = vsel %vm2887, 1, 0
        %v2889 = vadd.s32 %v2879, %v2883
        %v2890 = vadd.s32 %v2882, %v2888
        %vm2891 = vc.u32 %v2889, %v2885
        %v2892 = vsel %vm2891, 1, 0
        %v2893 = vadd.s32 %v2889, %v2885
        %v2894 = vadd.s32 %v2890, %v2892
        %v2895 = vadd.s32 %v2894, %v2884
        %v2896 = vadd.s32 %v2895, %v2886
        %v2897 = vmul.u32 %v2852, %v2843
        %v2898 = vadd.s32 %v2874, %v2893
        %vm2899 = vc.u32 %v2874, %v2893
        %v2900 = vadd.s32 %v2896, 1
        %v2901 = vsel %vm2899, %v2900, %v2896
        %v2902 = vadd.s32 %v2897, %v2901
        %v2903 = vadd.s32 %v2902, 536870912
        %v2904 = vshrl.u32 %v2903, 30
        %v2905 = vshll.u32 %v2904, 30
        %v2906 = vsub.s32 %v2902, %v2905
        %vm2907 = vcmp.lt.s32.totalorder %v2906, 0
        %v2908 = vsub.s32 0, %v2906
        %v2909 = vsel %vm2907, %v2908, %v2906
        %v2910 = vclz %v2909
        %v2911 = vsub.s32 %v2910, 2
        %vm2912 = vcmp.gt.s32.totalorder 0, %v2911
        %v2913 = vsel %vm2912, 0, %v2911
        %v2914 = vsub.s32 32, %v2913
        %v2915 = vshll.u32 %v2906, %v2913
        %v2916 = vshrl.u32 %v2898, %v2914
        %v2917 = vor.u32 %v2915, %v2916
        %v2918 = vsub.s32 4294967266, %v2913
        %v2919 = vadd.s32 %v2918, 127
        %v2920 = vshll.u32 %v2919, 23
        %v2921 = vor.u32 4788187, %v2920
        %v2922 = vand.u32 2147483647, %v2921
        %v2924 = vcvt.s32.f32 %v2917
        %v2925 = vmul.f32 %v2924, %v2922
        %v2926 = vxor.u32 %v2925, 2147483648
        %v2927 = vsel %vm2806, %v2926, %v2925
        %v2928 = vsub.s32 4, %v2904
        %v2929 = vsel %vm2806, %v2928, %v2904
        %v2930 = vsel %vm2805, %v308, %v2927
        %v2931 = vsel %vm2805, 0, %v2929
        %v2932 = vmul.f32 %v2930, %v2930
        %v2933 = vmul.f32 %v2932, -0.001358992
        %v2934 = vadd.f32 %v2933, 0.041655596
        %v2935 = vmul.f32 %v2932, %v2934
        %v2936 = vadd.f32 %v2935, -0.4999988
        %v2937 = vmul.f32 %v2932, %v2936
        %v2938 = vadd.f32 1.0, %v2937
        %v2939 = vmul.f32 %v2930, %v2930
        %v2940 = vmul.f32 %v2939, -0.00019511016
        %v2941 = vadd.f32 %v2940, 0.008332121
        %v2942 = vmul.f32 %v2939, %v2941
        %v2943 = vadd.f32 %v2942, -0.16666654
        %v2944 = vmul.f32 %v2939, %v2943
        %v2945 = vadd.f32 %v2944, 1.0
        %v2946 = vmul.f32 %v2945, %v2930
        %vm2947 = vweird.f32 %v308
        %v2948 = vadd.s32 %v2931, 3
        %v2949 = vand.u32 %v2948, 3
        %vm2950 = vcmp.lt.s32.totalorder %v2949, 2
        %vm2951 = vcmp.eq.s32.totalorder %v2949, 0
        %v2952 = vxor.u32 %v2946, 2147483648
        %v2953 = vsel %vm2951, %v2938, %v2952
        %vm2954 = vcmp.eq.s32.totalorder %v2949, 2
        %v2955 = vxor.u32 %v2938, 2147483648
        %v2956 = vsel %vm2954, %v2955, %v2946
        %v2957 = vsel %vm2950, %v2953, %v2956
        %v2958 = vsel %vm2947, nan, %v2957
        %v2959 = vand.u32 2147483647, %v309
        %vm2960 = vcmp.le.f32.partialorder %v2959, 0.7853982
        %vm2961 = vcmp.lt.s32.totalorder %v309, 0
        %v2962 = vand.u32 %v309, 2139095040
        %v2963 = vshrl.u32 %v2962, 23
        %v2964 = vsub.s32 %v2963, 127
        %v2965 = vand.u32 2147483647, %v309
        %v2966 = vand.u32 %v2965, 8388607
        %v2967 = vor.u32 %v2966, 8388608
        %v2968 = vsub.s32 0, %v2967
        %v2969 = vadd.s32 %v2964, 1
        %vm2970 = vcmp.gt.s32.totalorder %v2969, 0
        %v2971 = vsel %vm2970, %v2969, 0
        %v2972 = vshrl.u32 %v2971, 5
        %v2973 = vand.u32 %v2971, 31
        %v2974 = vsub.s32 32, %v2973
        %v2975 = vshrl.u32 683565275, %v2974
        %v2976 = vshll.u32 683565275, %v2973
        %v2977 = vshrl.u32 2475754826, %v2974
        %v2978 = vor.u32 %v2976, %v2977
        %v2979 = vshll.u32 2475754826, %v2973
        %v2980 = vshrl.u32 2131351028, %v2974
        %v2981 = vor.u32 %v2979, %v2980
        %v2982 = vshll.u32 2131351028, %v2973
        %v2983 = vshrl.u32 2102212464, %v2974
        %v2984 = vor.u32 %v2982, %v2983
        %v2985 = vshll.u32 2102212464, %v2973
        %v2986 = vshrl.u32 920167782, %v2974
        %v2987 = vor.u32 %v2985, %v2986
        %v2988 = vshll.u32 920167782, %v2973
        %v2989 = vshrl.u32 1326507024, %v2974
        %v2990 = vor.u32 %v2988, %v2989
        %vm2991 = vcmp.lt.s32.totalorder %v2972, 1
        %vm2992 = vcmp.lt.s32.totalorder %v2972, 2
        %vm2993 = vcmp.lt.s32.totalorder %v2972, 3
        %vm2994 = vcmp.lt.s32.totalorder %v2972, 4
        %v2995 = vsel %vm2991, %v2975, %v2978
        %v2996 = vsel %vm2994, %v2984, 2102212464
        %v2997 = vsel %vm2993, %v2981, %v2996
        %v2998 = vsel %vm2992, %v2995, %v2997
        %v2999 = vsel %vm2991, %v2978, %v2981
        %v3000 = vsel %vm2994, %v2987, 920167782
        %v3001 = vsel %vm2993, %v2984, %v3000
        %v3002 = vsel %vm2992, %v2999, %v3001
        %v3003 = vsel %vm2991, %v2981, %v2984
        %v3004 = vsel %vm2994, %v2990, 1326507024
        %v3005 = vsel %vm2993, %v2987, %v3004
        %v3006 = vsel %vm2992, %v3003, %v3005
        %v3007 = vshll.u32 %v2967, 8
        %v3008 = vand.u32 %v3007, 65535
        %v3009 = vshrl.u32 %v3007, 16
        %v3010 = vand.u32 %v3006, 65535
        %v3011 = vshrl.u32 %v3006, 16
        %v3012 = vmul.u32 %v3008, %v3010
        %v3013 = vmul.u32 %v3008, %v3011
        %v3014 = vmul.u32 %v3009, %v3010
        %v3015 = vmul.u32 %v3009, %v3011
        %v3016 = vshll.u32 %v3013, 16
        %v3017 = vshrl.u32 %v3013, 16
        %v3018 = vshll.u32 %v3014, 16
        %v3019 = vshrl.u32 %v3014, 16
        %vm3020 = vc.u32 %v3012, %v3016
        %v3021 = vsel %vm3020, 1, 0
        %v3022 = vadd.s32 %v3012, %v3016
        %v3023 = vadd.s32 %v3015, %v3021
        %vm3024 = vc.u32 %v3022, %v3018
        %v3025 = vsel %vm3024, 1, 0
        %v3026 = vadd.s32 %v3022, %v3018
        %v3027 = vadd.s32 %v3023, %v3025
        %v3028 = vadd.s32 %v3027, %v3017
        %v3029 = vadd.s32 %v3028, %v3019
        %v3030 = vand.u32 %v3007, 65535
        %v3031 = vshrl.u32 %v3007, 16
        %v3032 = vand.u32 %v3002, 65535
        %v3033 = vshrl.u32 %v3002, 16
        %v3034 = vmul.u32 %v3030, %v3032
        %v3035 = vmul.u32 %v3030, %v3033
        %v3036 = vmul.u32 %v3031, %v3032
        %v3037 = vmul.u32 %v3031, %v3033
        %v3038 = vshll.u32 %v3035, 16
        %v3039 = vshrl.u32 %v3035, 16
        %v3040 = vshll.u32 %v3036, 16
        %v3041 = vshrl.u32 %v3036, 16
        %vm3042 = vc.u32 %v3034, %v3038
        %v3043 = vsel %vm3042, 1, 0
        %v3044 = vadd.s32 %v3034, %v3038
        %v3045 = vadd.s32 %v3037, %v3043
        %vm3046 = vc.u32 %v3044, %v3040
        %v3047 = vsel %vm3046, 1, 0
        %v3048 = vadd.s32 %v3044, %v3040
        %v3049 = vadd.s32 %v3045, %v3047
        %v3050 = vadd.s32 %v3049, %v3039
        %v3051 = vadd.s32 %v3050, %v3041
        %v3052 = vmul.u32 %v3007, %v2998
        %v3053 = vadd.s32 %v3029, %v3048
        %vm3054 = vc.u32 %v3029, %v3048
        %v3055 = vadd.s32 %v3051, 1
        %v3056 = vsel %vm3054, %v3055, %v3051
        %v3057 = vadd.s32 %v3052, %v3056
        %v3058 = vadd.s32 %v3057, 536870912
        %v3059 = vshrl.u32 %v3058, 30
        %v3060 = vshll.u32 %v3059, 30
        %v3061 = vsub.s32 %v3057, %v3060
        %vm3062 = vcmp.lt.s32.totalorder %v3061, 0
        %v3063 = vsub.s32 0, %v3061
        %v3064 = vsel %vm3062, %v3063, %v3061
        %v3065 = vclz %v3064
        %v3066 = vsub.s32 %v3065, 2
        %vm3067 = vcmp.gt.s32.totalorder 0, %v3066
        %v3068 = vsel %vm3067, 0, %v3066
        %v3069 = vsub.s32 32, %v3068
        %v3070 = vshll.u32 %v3061, %v3068
        %v3071 = vshrl.u32 %v3053, %v3069
        %v3072 = vor.u32 %v3070, %v3071
        %v3073 = vsub.s32 4294967266, %v3068
        %v3074 = vadd.s32 %v3073, 127
        %v3075 = vshll.u32 %v3074, 23
        %v3076 = vor.u32 4788187, %v3075
        %v3077 = vand.u32 2147483647, %v3076
        %v3079 = vcvt.s32.f32 %v3072
        %v3080 = vmul.f32 %v3079, %v3077
        %v3081 = vxor.u32 %v3080, 2147483648
        %v3082 = vsel %vm2961, %v3081, %v3080
        %v3083 = vsub.s32 4, %v3059
        %v3084 = vsel %vm2961, %v3083, %v3059
        %v3085 = vsel %vm2960, %v309, %v3082
        %v3086 = vsel %vm2960, 0, %v3084
        %v3087 = vmul.f32 %v3085, %v3085
        %v3088 = vmul.f32 %v3087, -0.001358992
        %v3089 = vadd.f32 %v3088, 0.041655596
        %v3090 = vmul.f32 %v3087, %v3089
        %v3091 = vadd.f32 %v3090, -0.4999988
        %v3092 = vmul.f32 %v3087, %v3091
        %v3093 = vadd.f32 1.0, %v3092
        %v3094 = vmul.f32 %v3085, %v3085
        %v3095 = vmul.f32 %v3094, -0.00019511016
        %v3096 = vadd.f32 %v3095, 0.008332121
        %v3097 = vmul.f32 %v3094, %v3096
        %v3098 = vadd.f32 %v3097, -0.16666654
        %v3099 = vmul.f32 %v3094, %v3098
        %v3100 = vadd.f32 %v3099, 1.0
        %v3101 = vmul.f32 %v3100, %v3085
        %vm3102 = vweird.f32 %v309
        %v3103 = vadd.s32 %v3086, 3
        %v3104 = vand.u32 %v3103, 3
        %vm3105 = vcmp.lt.s32.totalorder %v3104, 2
        %vm3106 = vcmp.eq.s32.totalorder %v3104, 0
        %v3107 = vxor.u32 %v3101, 2147483648
        %v3108 = vsel %vm3106, %v3093, %v3107
        %vm3109 = vcmp.eq.s32.totalorder %v3104, 2
        %v3110 = vxor.u32 %v3093, 2147483648
        %v3111 = vsel %vm3109, %v3110, %v3101
        %v3112 = vsel %vm3105, %v3108, %v3111
        %v3113 = vsel %vm3102, nan, %v3112
        %v3114 = vand.u32 2147483647, %v310
        %vm3115 = vcmp.le.f32.partialorder %v3114, 0.7853982
        %vm3116 = vcmp.lt.s32.totalorder %v310, 0
        %v3117 = vand.u32 %v310, 2139095040
        %v3118 = vshrl.u32 %v3117, 23
        %v3119 = vsub.s32 %v3118, 127
        %v3120 = vand.u32 2147483647, %v310
        %v3121 = vand.u32 %v3120, 8388607
        %v3122 = vor.u32 %v3121, 8388608
        %v3123 = vsub.s32 0, %v3122
        %v3124 = vadd.s32 %v3119, 1
        %vm3125 = vcmp.gt.s32.totalorder %v3124, 0
        %v3126 = vsel %vm3125, %v3124, 0
        %v3127 = vshrl.u32 %v3126, 5
        %v3128 = vand.u32 %v3126, 31
        %v3129 = vsub.s32 32, %v3128
        %v3130 = vshrl.u32 683565275, %v3129
        %v3131 = vshll.u32 683565275, %v3128
        %v3132 = vshrl.u32 2475754826, %v3129
        %v3133 = vor.u32 %v3131, %v3132
        %v3134 = vshll.u32 2475754826, %v3128
        %v3135 = vshrl.u32 2131351028, %v3129
        %v3136 = vor.u32 %v3134, %v3135
        %v3137 = vshll.u32 2131351028, %v3128
        %v3138 = vshrl.u32 2102212464, %v3129
        %v3139 = vor.u32 %v3137, %v3138
        %v3140 = vshll.u32 2102212464, %v3128
        %v3141 = vshrl.u32 920167782, %v3129
        %v3142 = vor.u32 %v3140, %v3141
        %v3143 = vshll.u32 920167782, %v3128
        %v3144 = vshrl.u32 1326507024, %v3129
        %v3145 = vor.u32 %v3143, %v3144
        %vm3146 = vcmp.lt.s32.totalorder %v3127, 1
        %vm3147 = vcmp.lt.s32.totalorder %v3127, 2
        %vm3148 = vcmp.lt.s32.totalorder %v3127, 3
        %vm3149 = vcmp.lt.s32.totalorder %v3127, 4
        %v3150 = vsel %vm3146, %v3130, %v3133
        %v3151 = vsel %vm3149, %v3139, 2102212464
        %v3152 = vsel %vm3148, %v3136, %v3151
        %v3153 = vsel %vm3147, %v3150, %v3152
        %v3154 = vsel %vm3146, %v3133, %v3136
        %v3155 = vsel %vm3149, %v3142, 920167782
        %v3156 = vsel %vm3148, %v3139, %v3155
        %v3157 = vsel %vm3147, %v3154, %v3156
        %v3158 = vsel %vm3146, %v3136, %v3139
        %v3159 = vsel %vm3149, %v3145, 1326507024
        %v3160 = vsel %vm3148, %v3142, %v3159
        %v3161 = vsel %vm3147, %v3158, %v3160
        %v3162 = vshll.u32 %v3122, 8
        %v3163 = vand.u32 %v3162, 65535
        %v3164 = vshrl.u32 %v3162, 16
        %v3165 = vand.u32 %v3161, 65535
        %v3166 = vshrl.u32 %v3161, 16
        %v3167 = vmul.u32 %v3163, %v3165
        %v3168 = vmul.u32 %v3163, %v3166
        %v3169 = vmul.u32 %v3164, %v3165
        %v3170 = vmul.u32 %v3164, %v3166
        %v3171 = vshll.u32 %v3168, 16
        %v3172 = vshrl.u32 %v3168, 16
        %v3173 = vshll.u32 %v3169, 16
        %v3174 = vshrl.u32 %v3169, 16
        %vm3175 = vc.u32 %v3167, %v3171
        %v3176 = vsel %vm3175, 1, 0
        %v3177 = vadd.s32 %v3167, %v3171
        %v3178 = vadd.s32 %v3170, %v3176
        %vm3179 = vc.u32 %v3177, %v3173
        %v3180 = vsel %vm3179, 1, 0
        %v3181 = vadd.s32 %v3177, %v3173
        %v3182 = vadd.s32 %v3178, %v3180
        %v3183 = vadd.s32 %v3182, %v3172
        %v3184 = vadd.s32 %v3183, %v3174
        %v3185 = vand.u32 %v3162, 65535
        %v3186 = vshrl.u32 %v3162, 16
        %v3187 = vand.u32 %v3157, 65535
        %v3188 = vshrl.u32 %v3157, 16
        %v3189 = vmul.u32 %v3185, %v3187
        %v3190 = vmul.u32 %v3185, %v3188
        %v3191 = vmul.u32 %v3186, %v3187
        %v3192 = vmul.u32 %v3186, %v3188
        %v3193 = vshll.u32 %v3190, 16
        %v3194 = vshrl.u32 %v3190, 16
        %v3195 = vshll.u32 %v3191, 16
        %v3196 = vshrl.u32 %v3191, 16
        %vm3197 = vc.u32 %v3189, %v3193
        %v3198 = vsel %vm3197, 1, 0
        %v3199 = vadd.s32 %v3189, %v3193
        %v3200 = vadd.s32 %v3192, %v3198
        %vm3201 = vc.u32 %v3199, %v3195
        %v3202 = vsel %vm3201, 1, 0
        %v3203 = vadd.s32 %v3199, %v3195
        %v3204 = vadd.s32 %v3200, %v3202
        %v3205 = vadd.s32 %v3204, %v3194
        %v3206 = vadd.s32 %v3205, %v3196
        %v3207 = vmul.u32 %v3162, %v3153
        %v3208 = vadd.s32 %v3184, %v3203
        %vm3209 = vc.u32 %v3184, %v3203
        %v3210 = vadd.s32 %v3206, 1
        %v3211 = vsel %vm3209, %v3210, %v3206
        %v3212 = vadd.s32 %v3207, %v3211
        %v3213 = vadd.s32 %v3212, 536870912
        %v3214 = vshrl.u32 %v3213, 30
        %v3215 = vshll.u32 %v3214, 30
        %v3216 = vsub.s32 %v3212, %v3215
        %vm3217 = vcmp.lt.s32.totalorder %v3216, 0
        %v3218 = vsub.s32 0, %v3216
        %v3219 = vsel %vm3217, %v3218, %v3216
        %v3220 = vclz %v3219
        %v3221 = vsub.s32 %v3220, 2
        %vm3222 = vcmp.gt.s32.totalorder 0, %v3221
        %v3223 = vsel %vm3222, 0, %v3221
        %v3224 = vsub.s32 32, %v3223
        %v3225 = vshll.u32 %v3216, %v3223
        %v3226 = vshrl.u32 %v3208, %v3224
        %v3227 = vor.u32 %v3225, %v3226
        %v3228 = vsub.s32 4294967266, %v3223
        %v3229 = vadd.s32 %v3228, 127
        %v3230 = vshll.u32 %v3229, 23
        %v3231 = vor.u32 4788187, %v3230
        %v3232 = vand.u32 2147483647, %v3231
        %v3234 = vcvt.s32.f32 %v3227
        %v3235 = vmul.f32 %v3234, %v3232
        %v3236 = vxor.u32 %v3235, 2147483648
        %v3237 = vsel %vm3116, %v3236, %v3235
        %v3238 = vsub.s32 4, %v3214
        %v3239 = vsel %vm3116, %v3238, %v3214
        %v3240 = vsel %vm3115, %v310, %v3237
        %v3241 = vsel %vm3115, 0, %v3239
        %v3242 = vmul.f32 %v3240, %v3240
        %v3243 = vmul.f32 %v3242, -0.001358992
        %v3244 = vadd.f32 %v3243, 0.041655596
        %v3245 = vmul.f32 %v3242, %v3244
        %v3246 = vadd.f32 %v3245, -0.4999988
        %v3247 = vmul.f32 %v3242, %v3246
        %v3248 = vadd.f32 1.0, %v3247
        %v3249 = vmul.f32 %v3240, %v3240
        %v3250 = vmul.f32 %v3249, -0.00019511016
        %v3251 = vadd.f32 %v3250, 0.008332121
        %v3252 = vmul.f32 %v3249, %v3251
        %v3253 = vadd.f32 %v3252, -0.16666654
        %v3254 = vmul.f32 %v3249, %v3253
        %v3255 = vadd.f32 %v3254, 1.0
        %v3256 = vmul.f32 %v3255, %v3240
        %vm3257 = vweird.f32 %v310
        %v3258 = vadd.s32 %v3241, 3
        %v3259 = vand.u32 %v3258, 3
        %vm3260 = vcmp.lt.s32.totalorder %v3259, 2
        %vm3261 = vcmp.eq.s32.totalorder %v3259, 0
        %v3262 = vxor.u32 %v3256, 2147483648
        %v3263 = vsel %vm3261, %v3248, %v3262
        %vm3264 = vcmp.eq.s32.totalorder %v3259, 2
        %v3265 = vxor.u32 %v3248, 2147483648
        %v3266 = vsel %vm3264, %v3265, %v3256
        %v3267 = vsel %vm3260, %v3263, %v3266
        %v3268 = vsel %vm3257, nan, %v3267
        %v3269 = vand.u32 2147483647, %v311
        %vm3270 = vcmp.le.f32.partialorder %v3269, 0.7853982
        %vm3271 = vcmp.lt.s32.totalorder %v311, 0
        %v3272 = vand.u32 %v311, 2139095040
        %v3273 = vshrl.u32 %v3272, 23
        %v3274 = vsub.s32 %v3273, 127
        %v3275 = vand.u32 2147483647, %v311
        %v3276 = vand.u32 %v3275, 8388607
        %v3277 = vor.u32 %v3276, 8388608
        %v3278 = vsub.s32 0, %v3277
        %v3279 = vadd.s32 %v3274, 1
        %vm3280 = vcmp.gt.s32.totalorder %v3279, 0
        %v3281 = vsel %vm3280, %v3279, 0
        %v3282 = vshrl.u32 %v3281, 5
        %v3283 = vand.u32 %v3281, 31
        %v3284 = vsub.s32 32, %v3283
        %v3285 = vshrl.u32 683565275, %v3284
        %v3286 = vshll.u32 683565275, %v3283
        %v3287 = vshrl.u32 2475754826, %v3284
        %v3288 = vor.u32 %v3286, %v3287
        %v3289 = vshll.u32 2475754826, %v3283
        %v3290 = vshrl.u32 2131351028, %v3284
        %v3291 = vor.u32 %v3289, %v3290
        %v3292 = vshll.u32 2131351028, %v3283
        %v3293 = vshrl.u32 2102212464, %v3284
        %v3294 = vor.u32 %v3292, %v3293
        %v3295 = vshll.u32 2102212464, %v3283
        %v3296 = vshrl.u32 920167782, %v3284
        %v3297 = vor.u32 %v3295, %v3296
        %v3298 = vshll.u32 920167782, %v3283
        %v3299 = vshrl.u32 1326507024, %v3284
        %v3300 = vor.u32 %v3298, %v3299
        %vm3301 = vcmp.lt.s32.totalorder %v3282, 1
        %vm3302 = vcmp.lt.s32.totalorder %v3282, 2
        %vm3303 = vcmp.lt.s32.totalorder %v3282, 3
        %vm3304 = vcmp.lt.s32.totalorder %v3282, 4
        %v3305 = vsel %vm3301, %v3285, %v3288
        %v3306 = vsel %vm3304, %v3294, 2102212464
        %v3307 = vsel %vm3303, %v3291, %v3306
        %v3308 = vsel %vm3302, %v3305, %v3307
        %v3309 = vsel %vm3301, %v3288, %v3291
        %v3310 = vsel %vm3304, %v3297, 920167782
        %v3311 = vsel %vm3303, %v3294, %v3310
        %v3312 = vsel %vm3302, %v3309, %v3311
        %v3313 = vsel %vm3301, %v3291, %v3294
        %v3314 = vsel %vm3304, %v3300, 1326507024
        %v3315 = vsel %vm3303, %v3297, %v3314
        %v3316 = vsel %vm3302, %v3313, %v3315
        %v3317 = vshll.u32 %v3277, 8
        %v3318 = vand.u32 %v3317, 65535
        %v3319 = vshrl.u32 %v3317, 16
        %v3320 = vand.u32 %v3316, 65535
        %v3321 = vshrl.u32 %v3316, 16
        %v3322 = vmul.u32 %v3318, %v3320
        %v3323 = vmul.u32 %v3318, %v3321
        %v3324 = vmul.u32 %v3319, %v3320
        %v3325 = vmul.u32 %v3319, %v3321
        %v3326 = vshll.u32 %v3323, 16
        %v3327 = vshrl.u32 %v3323, 16
        %v3328 = vshll.u32 %v3324, 16
        %v3329 = vshrl.u32 %v3324, 16
        %vm3330 = vc.u32 %v3322, %v3326
        %v3331 = vsel %vm3330, 1, 0
        %v3332 = vadd.s32 %v3322, %v3326
        %v3333 = vadd.s32 %v3325, %v3331
        %vm3334 = vc.u32 %v3332, %v3328
        %v3335 = vsel %vm3334, 1, 0
        %v3336 = vadd.s32 %v3332, %v3328
        %v3337 = vadd.s32 %v3333, %v3335
        %v3338 = vadd.s32 %v3337, %v3327
        %v3339 = vadd.s32 %v3338, %v3329
        %v3340 = vand.u32 %v3317, 65535
        %v3341 = vshrl.u32 %v3317, 16
        %v3342 = vand.u32 %v3312, 65535
        %v3343 = vshrl.u32 %v3312, 16
        %v3344 = vmul.u32 %v3340, %v3342
        %v3345 = vmul.u32 %v3340, %v3343
        %v3346 = vmul.u32 %v3341, %v3342
        %v3347 = vmul.u32 %v3341, %v3343
        %v3348 = vshll.u32 %v3345, 16
        %v3349 = vshrl.u32 %v3345, 16
        %v3350 = vshll.u32 %v3346, 16
        %v3351 = vshrl.u32 %v3346, 16
        %vm3352 = vc.u32 %v3344, %v3348
        %v3353 = vsel %vm3352, 1, 0
        %v3354 = vadd.s32 %v3344, %v3348
        %v3355 = vadd.s32 %v3347, %v3353
        %vm3356 = vc.u32 %v3354, %v3350
        %v3357 = vsel %vm3356, 1, 0
        %v3358 = vadd.s32 %v3354, %v3350
        %v3359 = vadd.s32 %v3355, %v3357
        %v3360 = vadd.s32 %v3359, %v3349
        %v3361 = vadd.s32 %v3360, %v3351
        %v3362 = vmul.u32 %v3317, %v3308
        %v3363 = vadd.s32 %v3339, %v3358
        %vm3364 = vc.u32 %v3339, %v3358
        %v3365 = vadd.s32 %v3361, 1
        %v3366 = vsel %vm3364, %v3365, %v3361
        %v3367 = vadd.s32 %v3362, %v3366
        %v3368 = vadd.s32 %v3367, 536870912
        %v3369 = vshrl.u32 %v3368, 30
        %v3370 = vshll.u32 %v3369, 30
        %v3371 = vsub.s32 %v3367, %v3370
        %vm3372 = vcmp.lt.s32.totalorder %v3371, 0
        %v3373 = vsub.s32 0, %v3371
        %v3374 = vsel %vm3372, %v3373, %v3371
        %v3375 = vclz %v3374
        %v3376 = vsub.s32 %v3375, 2
        %vm3377 = vcmp.gt.s32.totalorder 0, %v3376
        %v3378 = vsel %vm3377, 0, %v3376
        %v3379 = vsub.s32 32, %v3378
        %v3380 = vshll.u32 %v3371, %v3378
        %v3381 = vshrl.u32 %v3363, %v3379
        %v3382 = vor.u32 %v3380, %v3381
        %v3383 = vsub.s32 4294967266, %v3378
        %v3384 = vadd.s32 %v3383, 127
        %v3385 = vshll.u32 %v3384, 23
        %v3386 = vor.u32 4788187, %v3385
        %v3387 = vand.u32 2147483647, %v3386
        %v3389 = vcvt.s32.f32 %v3382
        %v3390 = vmul.f32 %v3389, %v3387
        %v3391 = vxor.u32 %v3390, 2147483648
        %v3392 = vsel %vm3271, %v3391, %v3390
        %v3393 = vsub.s32 4, %v3369
        %v3394 = vsel %vm3271, %v3393, %v3369
        %v3395 = vsel %vm3270, %v311, %v3392
        %v3396 = vsel %vm3270, 0, %v3394
        %v3397 = vmul.f32 %v3395, %v3395
        %v3398 = vmul.f32 %v3397, -0.001358992
        %v3399 = vadd.f32 %v3398, 0.041655596
        %v3400 = vmul.f32 %v3397, %v3399
        %v3401 = vadd.f32 %v3400, -0.4999988
        %v3402 = vmul.f32 %v3397, %v3401
        %v3403 = vadd.f32 1.0, %v3402
        %v3404 = vmul.f32 %v3395, %v3395
        %v3405 = vmul.f32 %v3404, -0.00019511016
        %v3406 = vadd.f32 %v3405, 0.008332121
        %v3407 = vmul.f32 %v3404, %v3406
        %v3408 = vadd.f32 %v3407, -0.16666654
        %v3409 = vmul.f32 %v3404, %v3408
        %v3410 = vadd.f32 %v3409, 1.0
        %v3411 = vmul.f32 %v3410, %v3395
        %vm3412 = vweird.f32 %v311
        %v3413 = vadd.s32 %v3396, 3
        %v3414 = vand.u32 %v3413, 3
        %vm3415 = vcmp.lt.s32.totalorder %v3414, 2
        %vm3416 = vcmp.eq.s32.totalorder %v3414, 0
        %v3417 = vxor.u32 %v3411, 2147483648
        %v3418 = vsel %vm3416, %v3403, %v3417
        %vm3419 = vcmp.eq.s32.totalorder %v3414, 2
        %v3420 = vxor.u32 %v3403, 2147483648
        %v3421 = vsel %vm3419, %v3420, %v3411
        %v3422 = vsel %vm3415, %v3418, %v3421
        %v3423 = vsel %vm3412, nan, %v3422
        %v3424 = vand.u32 2147483647, %v312
        %vm3425 = vcmp.le.f32.partialorder %v3424, 0.7853982
        %vm3426 = vcmp.lt.s32.totalorder %v312, 0
        %v3427 = vand.u32 %v312, 2139095040
        %v3428 = vshrl.u32 %v3427, 23
        %v3429 = vsub.s32 %v3428, 127
        %v3430 = vand.u32 2147483647, %v312
        %v3431 = vand.u32 %v3430, 8388607
        %v3432 = vor.u32 %v3431, 8388608
        %v3433 = vsub.s32 0, %v3432
        %v3434 = vadd.s32 %v3429, 1
        %vm3435 = vcmp.gt.s32.totalorder %v3434, 0
        %v3436 = vsel %vm3435, %v3434, 0
        %v3437 = vshrl.u32 %v3436, 5
        %v3438 = vand.u32 %v3436, 31
        %v3439 = vsub.s32 32, %v3438
        %v3440 = vshrl.u32 683565275, %v3439
        %v3441 = vshll.u32 683565275, %v3438
        %v3442 = vshrl.u32 2475754826, %v3439
        %v3443 = vor.u32 %v3441, %v3442
        %v3444 = vshll.u32 2475754826, %v3438
        %v3445 = vshrl.u32 2131351028, %v3439
        %v3446 = vor.u32 %v3444, %v3445
        %v3447 = vshll.u32 2131351028, %v3438
        %v3448 = vshrl.u32 2102212464, %v3439
        %v3449 = vor.u32 %v3447, %v3448
        %v3450 = vshll.u32 2102212464, %v3438
        %v3451 = vshrl.u32 920167782, %v3439
        %v3452 = vor.u32 %v3450, %v3451
        %v3453 = vshll.u32 920167782, %v3438
        %v3454 = vshrl.u32 1326507024, %v3439
        %v3455 = vor.u32 %v3453, %v3454
        %vm3456 = vcmp.lt.s32.totalorder %v3437, 1
        %vm3457 = vcmp.lt.s32.totalorder %v3437, 2
        %vm3458 = vcmp.lt.s32.totalorder %v3437, 3
        %vm3459 = vcmp.lt.s32.totalorder %v3437, 4
        %v3460 = vsel %vm3456, %v3440, %v3443
        %v3461 = vsel %vm3459, %v3449, 2102212464
        %v3462 = vsel %vm3458, %v3446, %v3461
        %v3463 = vsel %vm3457, %v3460, %v3462
        %v3464 = vsel %vm3456, %v3443, %v3446
        %v3465 = vsel %vm3459, %v3452, 920167782
        %v3466 = vsel %vm3458, %v3449, %v3465
        %v3467 = vsel %vm3457, %v3464, %v3466
        %v3468 = vsel %vm3456, %v3446, %v3449
        %v3469 = vsel %vm3459, %v3455, 1326507024
        %v3470 = vsel %vm3458, %v3452, %v3469
        %v3471 = vsel %vm3457, %v3468, %v3470
        %v3472 = vshll.u32 %v3432, 8
        %v3473 = vand.u32 %v3472, 65535
        %v3474 = vshrl.u32 %v3472, 16
        %v3475 = vand.u32 %v3471, 65535
        %v3476 = vshrl.u32 %v3471, 16
        %v3477 = vmul.u32 %v3473, %v3475
        %v3478 = vmul.u32 %v3473, %v3476
        %v3479 = vmul.u32 %v3474, %v3475
        %v3480 = vmul.u32 %v3474, %v3476
        %v3481 = vshll.u32 %v3478, 16
        %v3482 = vshrl.u32 %v3478, 16
        %v3483 = vshll.u32 %v3479, 16
        %v3484 = vshrl.u32 %v3479, 16
        %vm3485 = vc.u32 %v3477, %v3481
        %v3486 = vsel %vm3485, 1, 0
        %v3487 = vadd.s32 %v3477, %v3481
        %v3488 = vadd.s32 %v3480, %v3486
        %vm3489 = vc.u32 %v3487, %v3483
        %v3490 = vsel %vm3489, 1, 0
        %v3491 = vadd.s32 %v3487, %v3483
        %v3492 = vadd.s32 %v3488, %v3490
        %v3493 = vadd.s32 %v3492, %v3482
        %v3494 = vadd.s32 %v3493, %v3484
        %v3495 = vand.u32 %v3472, 65535
        %v3496 = vshrl.u32 %v3472, 16
        %v3497 = vand.u32 %v3467, 65535
        %v3498 = vshrl.u32 %v3467, 16
        %v3499 = vmul.u32 %v3495, %v3497
        %v3500 = vmul.u32 %v3495, %v3498
        %v3501 = vmul.u32 %v3496, %v3497
        %v3502 = vmul.u32 %v3496, %v3498
        %v3503 = vshll.u32 %v3500, 16
        %v3504 = vshrl.u32 %v3500, 16
        %v3505 = vshll.u32 %v3501, 16
        %v3506 = vshrl.u32 %v3501, 16
        %vm3507 = vc.u32 %v3499, %v3503
        %v3508 = vsel %vm3507, 1, 0
        %v3509 = vadd.s32 %v3499, %v3503
        %v3510 = vadd.s32 %v3502, %v3508
        %vm3511 = vc.u32 %v3509, %v3505
        %v3512 = vsel %vm3511, 1, 0
        %v3513 = vadd.s32 %v3509, %v3505
        %v3514 = vadd.s32 %v3510, %v3512
        %v3515 = vadd.s32 %v3514, %v3504
        %v3516 = vadd.s32 %v3515, %v3506
        %v3517 = vmul.u32 %v3472, %v3463
        %v3518 = vadd.s32 %v3494, %v3513
        %vm3519 = vc.u32 %v3494, %v3513
        %v3520 = vadd.s32 %v3516, 1
        %v3521 = vsel %vm3519, %v3520, %v3516
        %v3522 = vadd.s32 %v3517, %v3521
        %v3523 = vadd.s32 %v3522, 536870912
        %v3524 = vshrl.u32 %v3523, 30
        %v3525 = vshll.u32 %v3524, 30
        %v3526 = vsub.s32 %v3522, %v3525
        %vm3527 = vcmp.lt.s32.totalorder %v3526, 0
        %v3528 = vsub.s32 0, %v3526
        %v3529 = vsel %vm3527, %v3528, %v3526
        %v3530 = vclz %v3529
        %v3531 = vsub.s32 %v3530, 2
        %vm3532 = vcmp.gt.s32.totalorder 0, %v3531
        %v3533 = vsel %vm3532, 0, %v3531
        %v3534 = vsub.s32 32, %v3533
        %v3535 = vshll.u32 %v3526, %v3533
        %v3536 = vshrl.u32 %v3518, %v3534
        %v3537 = vor.u32 %v3535, %v3536
        %v3538 = vsub.s32 4294967266, %v3533
        %v3539 = vadd.s32 %v3538, 127
        %v3540 = vshll.u32 %v3539, 23
        %v3541 = vor.u32 4788187, %v3540
        %v3542 = vand.u32 2147483647, %v3541
        %v3544 = vcvt.s32.f32 %v3537
        %v3545 = vmul.f32 %v3544, %v3542
        %v3546 = vxor.u32 %v3545, 2147483648
        %v3547 = vsel %vm3426, %v3546, %v3545
        %v3548 = vsub.s32 4, %v3524
        %v3549 = vsel %vm3426, %v3548, %v3524
        %v3550 = vsel %vm3425, %v312, %v3547
        %v3551 = vsel %vm3425, 0, %v3549
        %v3552 = vmul.f32 %v3550, %v3550
        %v3553 = vmul.f32 %v3552, -0.001358992
        %v3554 = vadd.f32 %v3553, 0.041655596
        %v3555 = vmul.f32 %v3552, %v3554
        %v3556 = vadd.f32 %v3555, -0.4999988
        %v3557 = vmul.f32 %v3552, %v3556
        %v3558 = vadd.f32 1.0, %v3557
        %v3559 = vmul.f32 %v3550, %v3550
        %v3560 = vmul.f32 %v3559, -0.00019511016
        %v3561 = vadd.f32 %v3560, 0.008332121
        %v3562 = vmul.f32 %v3559, %v3561
        %v3563 = vadd.f32 %v3562, -0.16666654
        %v3564 = vmul.f32 %v3559, %v3563
        %v3565 = vadd.f32 %v3564, 1.0
        %v3566 = vmul.f32 %v3565, %v3550
        %vm3567 = vweird.f32 %v312
        %v3568 = vadd.s32 %v3551, 3
        %v3569 = vand.u32 %v3568, 3
        %vm3570 = vcmp.lt.s32.totalorder %v3569, 2
        %vm3571 = vcmp.eq.s32.totalorder %v3569, 0
        %v3572 = vxor.u32 %v3566, 2147483648
        %v3573 = vsel %vm3571, %v3558, %v3572
        %vm3574 = vcmp.eq.s32.totalorder %v3569, 2
        %v3575 = vxor.u32 %v3558, 2147483648
        %v3576 = vsel %vm3574, %v3575, %v3566
        %v3577 = vsel %vm3570, %v3573, %v3576
        %v3578 = vsel %vm3567, nan, %v3577
        %v3579 = vand.u32 2147483647, %v313
        %vm3580 = vcmp.le.f32.partialorder %v3579, 0.7853982
        %vm3581 = vcmp.lt.s32.totalorder %v313, 0
        %v3582 = vand.u32 %v313, 2139095040
        %v3583 = vshrl.u32 %v3582, 23
        %v3584 = vsub.s32 %v3583, 127
        %v3585 = vand.u32 2147483647, %v313
        %v3586 = vand.u32 %v3585, 8388607
        %v3587 = vor.u32 %v3586, 8388608
        %v3588 = vsub.s32 0, %v3587
        %v3589 = vadd.s32 %v3584, 1
        %vm3590 = vcmp.gt.s32.totalorder %v3589, 0
        %v3591 = vsel %vm3590, %v3589, 0
        %v3592 = vshrl.u32 %v3591, 5
        %v3593 = vand.u32 %v3591, 31
        %v3594 = vsub.s32 32, %v3593
        %v3595 = vshrl.u32 683565275, %v3594
        %v3596 = vshll.u32 683565275, %v3593
        %v3597 = vshrl.u32 2475754826, %v3594
        %v3598 = vor.u32 %v3596, %v3597
        %v3599 = vshll.u32 2475754826, %v3593
        %v3600 = vshrl.u32 2131351028, %v3594
        %v3601 = vor.u32 %v3599, %v3600
        %v3602 = vshll.u32 2131351028, %v3593
        %v3603 = vshrl.u32 2102212464, %v3594
        %v3604 = vor.u32 %v3602, %v3603
        %v3605 = vshll.u32 2102212464, %v3593
        %v3606 = vshrl.u32 920167782, %v3594
        %v3607 = vor.u32 %v3605, %v3606
        %v3608 = vshll.u32 920167782, %v3593
        %v3609 = vshrl.u32 1326507024, %v3594
        %v3610 = vor.u32 %v3608, %v3609
        %vm3611 = vcmp.lt.s32.totalorder %v3592, 1
        %vm3612 = vcmp.lt.s32.totalorder %v3592, 2
        %vm3613 = vcmp.lt.s32.totalorder %v3592, 3
        %vm3614 = vcmp.lt.s32.totalorder %v3592, 4
        %v3615 = vsel %vm3611, %v3595, %v3598
        %v3616 = vsel %vm3614, %v3604, 2102212464
        %v3617 = vsel %vm3613, %v3601, %v3616
        %v3618 = vsel %vm3612, %v3615, %v3617
        %v3619 = vsel %vm3611, %v3598, %v3601
        %v3620 = vsel %vm3614, %v3607, 920167782
        %v3621 = vsel %vm3613, %v3604, %v3620
        %v3622 = vsel %vm3612, %v3619, %v3621
        %v3623 = vsel %vm3611, %v3601, %v3604
        %v3624 = vsel %vm3614, %v3610, 1326507024
        %v3625 = vsel %vm3613, %v3607, %v3624
        %v3626 = vsel %vm3612, %v3623, %v3625
        %v3627 = vshll.u32 %v3587, 8
        %v3628 = vand.u32 %v3627, 65535
        %v3629 = vshrl.u32 %v3627, 16
        %v3630 = vand.u32 %v3626, 65535
        %v3631 = vshrl.u32 %v3626, 16
        %v3632 = vmul.u32 %v3628, %v3630
        %v3633 = vmul.u32 %v3628, %v3631
        %v3634 = vmul.u32 %v3629, %v3630
        %v3635 = vmul.u32 %v3629, %v3631
        %v3636 = vshll.u32 %v3633, 16
        %v3637 = vshrl.u32 %v3633, 16
        %v3638 = vshll.u32 %v3634, 16
        %v3639 = vshrl.u32 %v3634, 16
        %vm3640 = vc.u32 %v3632, %v3636
        %v3641 = vsel %vm3640, 1, 0
        %v3642 = vadd.s32 %v3632, %v3636
        %v3643 = vadd.s32 %v3635, %v3641
        %vm3644 = vc.u32 %v3642, %v3638
        %v3645 = vsel %vm3644, 1, 0
        %v3646 = vadd.s32 %v3642, %v3638
        %v3647 = vadd.s32 %v3643, %v3645
        %v3648 = vadd.s32 %v3647, %v3637
        %v3649 = vadd.s32 %v3648, %v3639
        %v3650 = vand.u32 %v3627, 65535
        %v3651 = vshrl.u32 %v3627, 16
        %v3652 = vand.u32 %v3622, 65535
        %v3653 = vshrl.u32 %v3622, 16
        %v3654 = vmul.u32 %v3650, %v3652
        %v3655 = vmul.u32 %v3650, %v3653
        %v3656 = vmul.u32 %v3651, %v3652
        %v3657 = vmul.u32 %v3651, %v3653
        %v3658 = vshll.u32 %v3655, 16
        %v3659 = vshrl.u32 %v3655, 16
        %v3660 = vshll.u32 %v3656, 16
        %v3661 = vshrl.u32 %v3656, 16
        %vm3662 = vc.u32 %v3654, %v3658
        %v3663 = vsel %vm3662, 1, 0
        %v3664 = vadd.s32 %v3654, %v3658
        %v3665 = vadd.s32 %v3657, %v3663
        %vm3666 = vc.u32 %v3664, %v3660
        %v3667 = vsel %vm3666, 1, 0
        %v3668 = vadd.s32 %v3664, %v3660
        %v3669 = vadd.s32 %v3665, %v3667
        %v3670 = vadd.s32 %v3669, %v3659
        %v3671 = vadd.s32 %v3670, %v3661
        %v3672 = vmul.u32 %v3627, %v3618
        %v3673 = vadd.s32 %v3649, %v3668
        %vm3674 = vc.u32 %v3649, %v3668
        %v3675 = vadd.s32 %v3671, 1
        %v3676 = vsel %vm3674, %v3675, %v3671
        %v3677 = vadd.s32 %v3672, %v3676
        %v3678 = vadd.s32 %v3677, 536870912
        %v3679 = vshrl.u32 %v3678, 30
        %v3680 = vshll.u32 %v3679, 30
        %v3681 = vsub.s32 %v3677, %v3680
        %vm3682 = vcmp.lt.s32.totalorder %v3681, 0
        %v3683 = vsub.s32 0, %v3681
        %v3684 = vsel %vm3682, %v3683, %v3681
        %v3685 = vclz %v3684
        %v3686 = vsub.s32 %v3685, 2
        %vm3687 = vcmp.gt.s32.totalorder 0, %v3686
        %v3688 = vsel %vm3687, 0, %v3686
        %v3689 = vsub.s32 32, %v3688
        %v3690 = vshll.u32 %v3681, %v3688
        %v3691 = vshrl.u32 %v3673, %v3689
        %v3692 = vor.u32 %v3690, %v3691
        %v3693 = vsub.s32 4294967266, %v3688
        %v3694 = vadd.s32 %v3693, 127
        %v3695 = vshll.u32 %v3694, 23
        %v3696 = vor.u32 4788187, %v3695
        %v3697 = vand.u32 2147483647, %v3696
        %v3699 = vcvt.s32.f32 %v3692
        %v3700 = vmul.f32 %v3699, %v3697
        %v3701 = vxor.u32 %v3700, 2147483648
        %v3702 = vsel %vm3581, %v3701, %v3700
        %v3703 = vsub.s32 4, %v3679
        %v3704 = vsel %vm3581, %v3703, %v3679
        %v3705 = vsel %vm3580, %v313, %v3702
        %v3706 = vsel %vm3580, 0, %v3704
        %v3707 = vmul.f32 %v3705, %v3705
        %v3708 = vmul.f32 %v3707, -0.001358992
        %v3709 = vadd.f32 %v3708, 0.041655596
        %v3710 = vmul.f32 %v3707, %v3709
        %v3711 = vadd.f32 %v3710, -0.4999988
        %v3712 = vmul.f32 %v3707, %v3711
        %v3713 = vadd.f32 1.0, %v3712
        %v3714 = vmul.f32 %v3705, %v3705
        %v3715 = vmul.f32 %v3714, -0.00019511016
        %v3716 = vadd.f32 %v3715, 0.008332121
        %v3717 = vmul.f32 %v3714, %v3716
        %v3718 = vadd.f32 %v3717, -0.16666654
        %v3719 = vmul.f32 %v3714, %v3718
        %v3720 = vadd.f32 %v3719, 1.0
        %v3721 = vmul.f32 %v3720, %v3705
        %vm3722 = vweird.f32 %v313
        %v3723 = vadd.s32 %v3706, 3
        %v3724 = vand.u32 %v3723, 3
        %vm3725 = vcmp.lt.s32.totalorder %v3724, 2
        %vm3726 = vcmp.eq.s32.totalorder %v3724, 0
        %v3727 = vxor.u32 %v3721, 2147483648
        %v3728 = vsel %vm3726, %v3713, %v3727
        %vm3729 = vcmp.eq.s32.totalorder %v3724, 2
        %v3730 = vxor.u32 %v3713, 2147483648
        %v3731 = vsel %vm3729, %v3730, %v3721
        %v3732 = vsel %vm3725, %v3728, %v3731
        %v3733 = vsel %vm3722, nan, %v3732
        %v3734 = vand.u32 2147483647, %v314
        %vm3735 = vcmp.le.f32.partialorder %v3734, 0.7853982
        %vm3736 = vcmp.lt.s32.totalorder %v314, 0
        %v3737 = vand.u32 %v314, 2139095040
        %v3738 = vshrl.u32 %v3737, 23
        %v3739 = vsub.s32 %v3738, 127
        %v3740 = vand.u32 2147483647, %v314
        %v3741 = vand.u32 %v3740, 8388607
        %v3742 = vor.u32 %v3741, 8388608
        %v3743 = vsub.s32 0, %v3742
        %v3744 = vadd.s32 %v3739, 1
        %vm3745 = vcmp.gt.s32.totalorder %v3744, 0
        %v3746 = vsel %vm3745, %v3744, 0
        %v3747 = vshrl.u32 %v3746, 5
        %v3748 = vand.u32 %v3746, 31
        %v3749 = vsub.s32 32, %v3748
        %v3750 = vshrl.u32 683565275, %v3749
        %v3751 = vshll.u32 683565275, %v3748
        %v3752 = vshrl.u32 2475754826, %v3749
        %v3753 = vor.u32 %v3751, %v3752
        %v3754 = vshll.u32 2475754826, %v3748
        %v3755 = vshrl.u32 2131351028, %v3749
        %v3756 = vor.u32 %v3754, %v3755
        %v3757 = vshll.u32 2131351028, %v3748
        %v3758 = vshrl.u32 2102212464, %v3749
        %v3759 = vor.u32 %v3757, %v3758
        %v3760 = vshll.u32 2102212464, %v3748
        %v3761 = vshrl.u32 920167782, %v3749
        %v3762 = vor.u32 %v3760, %v3761
        %v3763 = vshll.u32 920167782, %v3748
        %v3764 = vshrl.u32 1326507024, %v3749
        %v3765 = vor.u32 %v3763, %v3764
        %vm3766 = vcmp.lt.s32.totalorder %v3747, 1
        %vm3767 = vcmp.lt.s32.totalorder %v3747, 2
        %vm3768 = vcmp.lt.s32.totalorder %v3747, 3
        %vm3769 = vcmp.lt.s32.totalorder %v3747, 4
        %v3770 = vsel %vm3766, %v3750, %v3753
        %v3771 = vsel %vm3769, %v3759, 2102212464
        %v3772 = vsel %vm3768, %v3756, %v3771
        %v3773 = vsel %vm3767, %v3770, %v3772
        %v3774 = vsel %vm3766, %v3753, %v3756
        %v3775 = vsel %vm3769, %v3762, 920167782
        %v3776 = vsel %vm3768, %v3759, %v3775
        %v3777 = vsel %vm3767, %v3774, %v3776
        %v3778 = vsel %vm3766, %v3756, %v3759
        %v3779 = vsel %vm3769, %v3765, 1326507024
        %v3780 = vsel %vm3768, %v3762, %v3779
        %v3781 = vsel %vm3767, %v3778, %v3780
        %v3782 = vshll.u32 %v3742, 8
        %v3783 = vand.u32 %v3782, 65535
        %v3784 = vshrl.u32 %v3782, 16
        %v3785 = vand.u32 %v3781, 65535
        %v3786 = vshrl.u32 %v3781, 16
        %v3787 = vmul.u32 %v3783, %v3785
        %v3788 = vmul.u32 %v3783, %v3786
        %v3789 = vmul.u32 %v3784, %v3785
        %v3790 = vmul.u32 %v3784, %v3786
        %v3791 = vshll.u32 %v3788, 16
        %v3792 = vshrl.u32 %v3788, 16
        %v3793 = vshll.u32 %v3789, 16
        %v3794 = vshrl.u32 %v3789, 16
        %vm3795 = vc.u32 %v3787, %v3791
        %v3796 = vsel %vm3795, 1, 0
        %v3797 = vadd.s32 %v3787, %v3791
        %v3798 = vadd.s32 %v3790, %v3796
        %vm3799 = vc.u32 %v3797, %v3793
        %v3800 = vsel %vm3799, 1, 0
        %v3801 = vadd.s32 %v3797, %v3793
        %v3802 = vadd.s32 %v3798, %v3800
        %v3803 = vadd.s32 %v3802, %v3792
        %v3804 = vadd.s32 %v3803, %v3794
        %v3805 = vand.u32 %v3782, 65535
        %v3806 = vshrl.u32 %v3782, 16
        %v3807 = vand.u32 %v3777, 65535
        %v3808 = vshrl.u32 %v3777, 16
        %v3809 = vmul.u32 %v3805, %v3807
        %v3810 = vmul.u32 %v3805, %v3808
        %v3811 = vmul.u32 %v3806, %v3807
        %v3812 = vmul.u32 %v3806, %v3808
        %v3813 = vshll.u32 %v3810, 16
        %v3814 = vshrl.u32 %v3810, 16
        %v3815 = vshll.u32 %v3811, 16
        %v3816 = vshrl.u32 %v3811, 16
        %vm3817 = vc.u32 %v3809, %v3813
        %v3818 = vsel %vm3817, 1, 0
        %v3819 = vadd.s32 %v3809, %v3813
        %v3820 = vadd.s32 %v3812, %v3818
        %vm3821 = vc.u32 %v3819, %v3815
        %v3822 = vsel %vm3821, 1, 0
        %v3823 = vadd.s32 %v3819, %v3815
        %v3824 = vadd.s32 %v3820, %v3822
        %v3825 = vadd.s32 %v3824, %v3814
        %v3826 = vadd.s32 %v3825, %v3816
        %v3827 = vmul.u32 %v3782, %v3773
        %v3828 = vadd.s32 %v3804, %v3823
        %vm3829 = vc.u32 %v3804, %v3823
        %v3830 = vadd.s32 %v3826, 1
        %v3831 = vsel %vm3829, %v3830, %v3826
        %v3832 = vadd.s32 %v3827, %v3831
        %v3833 = vadd.s32 %v3832, 536870912
        %v3834 = vshrl.u32 %v3833, 30
        %v3835 = vshll.u32 %v3834, 30
        %v3836 = vsub.s32 %v3832, %v3835
        %vm3837 = vcmp.lt.s32.totalorder %v3836, 0
        %v3838 = vsub.s32 0, %v3836
        %v3839 = vsel %vm3837, %v3838, %v3836
        %v3840 = vclz %v3839
        %v3841 = vsub.s32 %v3840, 2
        %vm3842 = vcmp.gt.s32.totalorder 0, %v3841
        %v3843 = vsel %vm3842, 0, %v3841
        %v3844 = vsub.s32 32, %v3843
        %v3845 = vshll.u32 %v3836, %v3843
        %v3846 = vshrl.u32 %v3828, %v3844
        %v3847 = vor.u32 %v3845, %v3846
        %v3848 = vsub.s32 4294967266, %v3843
        %v3849 = vadd.s32 %v3848, 127
        %v3850 = vshll.u32 %v3849, 23
        %v3851 = vor.u32 4788187, %v3850
        %v3852 = vand.u32 2147483647, %v3851
        %v3854 = vcvt.s32.f32 %v3847
        %v3855 = vmul.f32 %v3854, %v3852
        %v3856 = vxor.u32 %v3855, 2147483648
        %v3857 = vsel %vm3736, %v3856, %v3855
        %v3858 = vsub.s32 4, %v3834
        %v3859 = vsel %vm3736, %v3858, %v3834
        %v3860 = vsel %vm3735, %v314, %v3857
        %v3861 = vsel %vm3735, 0, %v3859
        %v3862 = vmul.f32 %v3860, %v3860
        %v3863 = vmul.f32 %v3862, -0.001358992
        %v3864 = vadd.f32 %v3863, 0.041655596
        %v3865 = vmul.f32 %v3862, %v3864
        %v3866 = vadd.f32 %v3865, -0.4999988
        %v3867 = vmul.f32 %v3862, %v3866
        %v3868 = vadd.f32 1.0, %v3867
        %v3869 = vmul.f32 %v3860, %v3860
        %v3870 = vmul.f32 %v3869, -0.00019511016
        %v3871 = vadd.f32 %v3870, 0.008332121
        %v3872 = vmul.f32 %v3869, %v3871
        %v3873 = vadd.f32 %v3872, -0.16666654
        %v3874 = vmul.f32 %v3869, %v3873
        %v3875 = vadd.f32 %v3874, 1.0
        %v3876 = vmul.f32 %v3875, %v3860
        %vm3877 = vweird.f32 %v314
        %v3878 = vadd.s32 %v3861, 3
        %v3879 = vand.u32 %v3878, 3
        %vm3880 = vcmp.lt.s32.totalorder %v3879, 2
        %vm3881 = vcmp.eq.s32.totalorder %v3879, 0
        %v3882 = vxor.u32 %v3876, 2147483648
        %v3883 = vsel %vm3881, %v3868, %v3882
        %vm3884 = vcmp.eq.s32.totalorder %v3879, 2
        %v3885 = vxor.u32 %v3868, 2147483648
        %v3886 = vsel %vm3884, %v3885, %v3876
        %v3887 = vsel %vm3880, %v3883, %v3886
        %v3888 = vsel %vm3877, nan, %v3887
        %v3889 = vand.u32 2147483647, %v315
        %vm3890 = vcmp.le.f32.partialorder %v3889, 0.7853982
        %vm3891 = vcmp.lt.s32.totalorder %v315, 0
        %v3892 = vand.u32 %v315, 2139095040
        %v3893 = vshrl.u32 %v3892, 23
        %v3894 = vsub.s32 %v3893, 127
        %v3895 = vand.u32 2147483647, %v315
        %v3896 = vand.u32 %v3895, 8388607
        %v3897 = vor.u32 %v3896, 8388608
        %v3898 = vsub.s32 0, %v3897
        %v3899 = vadd.s32 %v3894, 1
        %vm3900 = vcmp.gt.s32.totalorder %v3899, 0
        %v3901 = vsel %vm3900, %v3899, 0
        %v3902 = vshrl.u32 %v3901, 5
        %v3903 = vand.u32 %v3901, 31
        %v3904 = vsub.s32 32, %v3903
        %v3905 = vshrl.u32 683565275, %v3904
        %v3906 = vshll.u32 683565275, %v3903
        %v3907 = vshrl.u32 2475754826, %v3904
        %v3908 = vor.u32 %v3906, %v3907
        %v3909 = vshll.u32 2475754826, %v3903
        %v3910 = vshrl.u32 2131351028, %v3904
        %v3911 = vor.u32 %v3909, %v3910
        %v3912 = vshll.u32 2131351028, %v3903
        %v3913 = vshrl.u32 2102212464, %v3904
        %v3914 = vor.u32 %v3912, %v3913
        %v3915 = vshll.u32 2102212464, %v3903
        %v3916 = vshrl.u32 920167782, %v3904
        %v3917 = vor.u32 %v3915, %v3916
        %v3918 = vshll.u32 920167782, %v3903
        %v3919 = vshrl.u32 1326507024, %v3904
        %v3920 = vor.u32 %v3918, %v3919
        %vm3921 = vcmp.lt.s32.totalorder %v3902, 1
        %vm3922 = vcmp.lt.s32.totalorder %v3902, 2
        %vm3923 = vcmp.lt.s32.totalorder %v3902, 3
        %vm3924 = vcmp.lt.s32.totalorder %v3902, 4
        %v3925 = vsel %vm3921, %v3905, %v3908
        %v3926 = vsel %vm3924, %v3914, 2102212464
        %v3927 = vsel %vm3923, %v3911, %v3926
        %v3928 = vsel %vm3922, %v3925, %v3927
        %v3929 = vsel %vm3921, %v3908, %v3911
        %v3930 = vsel %vm3924, %v3917, 920167782
        %v3931 = vsel %vm3923, %v3914, %v3930
        %v3932 = vsel %vm3922, %v3929, %v3931
        %v3933 = vsel %vm3921, %v3911, %v3914
        %v3934 = vsel %vm3924, %v3920, 1326507024
        %v3935 = vsel %vm3923, %v3917, %v3934
        %v3936 = vsel %vm3922, %v3933, %v3935
        %v3937 = vshll.u32 %v3897, 8
        %v3938 = vand.u32 %v3937, 65535
        %v3939 = vshrl.u32 %v3937, 16
        %v3940 = vand.u32 %v3936, 65535
        %v3941 = vshrl.u32 %v3936, 16
        %v3942 = vmul.u32 %v3938, %v3940
        %v3943 = vmul.u32 %v3938, %v3941
        %v3944 = vmul.u32 %v3939, %v3940
        %v3945 = vmul.u32 %v3939, %v3941
        %v3946 = vshll.u32 %v3943, 16
        %v3947 = vshrl.u32 %v3943, 16
        %v3948 = vshll.u32 %v3944, 16
        %v3949 = vshrl.u32 %v3944, 16
        %vm3950 = vc.u32 %v3942, %v3946
        %v3951 = vsel %vm3950, 1, 0
        %v3952 = vadd.s32 %v3942, %v3946
        %v3953 = vadd.s32 %v3945, %v3951
        %vm3954 = vc.u32 %v3952, %v3948
        %v3955 = vsel %vm3954, 1, 0
        %v3956 = vadd.s32 %v3952, %v3948
        %v3957 = vadd.s32 %v3953, %v3955
        %v3958 = vadd.s32 %v3957, %v3947
        %v3959 = vadd.s32 %v3958, %v3949
        %v3960 = vand.u32 %v3937, 65535
        %v3961 = vshrl.u32 %v3937, 16
        %v3962 = vand.u32 %v3932, 65535
        %v3963 = vshrl.u32 %v3932, 16
        %v3964 = vmul.u32 %v3960, %v3962
        %v3965 = vmul.u32 %v3960, %v3963
        %v3966 = vmul.u32 %v3961, %v3962
        %v3967 = vmul.u32 %v3961, %v3963
        %v3968 = vshll.u32 %v3965, 16
        %v3969 = vshrl.u32 %v3965, 16
        %v3970 = vshll.u32 %v3966, 16
        %v3971 = vshrl.u32 %v3966, 16
        %vm3972 = vc.u32 %v3964, %v3968
        %v3973 = vsel %vm3972, 1, 0
        %v3974 = vadd.s32 %v3964, %v3968
        %v3975 = vadd.s32 %v3967, %v3973
        %vm3976 = vc.u32 %v3974, %v3970
        %v3977 = vsel %vm3976, 1, 0
        %v3978 = vadd.s32 %v3974, %v3970
        %v3979 = vadd.s32 %v3975, %v3977
        %v3980 = vadd.s32 %v3979, %v3969
        %v3981 = vadd.s32 %v3980, %v3971
        %v3982 = vmul.u32 %v3937, %v3928
        %v3983 = vadd.s32 %v3959, %v3978
        %vm3984 = vc.u32 %v3959, %v3978
        %v3985 = vadd.s32 %v3981, 1
        %v3986 = vsel %vm3984, %v3985, %v3981
        %v3987 = vadd.s32 %v3982, %v3986
        %v3988 = vadd.s32 %v3987, 536870912
        %v3989 = vshrl.u32 %v3988, 30
        %v3990 = vshll.u32 %v3989, 30
        %v3991 = vsub.s32 %v3987, %v3990
        %vm3992 = vcmp.lt.s32.totalorder %v3991, 0
        %v3993 = vsub.s32 0, %v3991
        %v3994 = vsel %vm3992, %v3993, %v3991
        %v3995 = vclz %v3994
        %v3996 = vsub.s32 %v3995, 2
        %vm3997 = vcmp.gt.s32.totalorder 0, %v3996
        %v3998 = vsel %vm3997, 0, %v3996
        %v3999 = vsub.s32 32, %v3998
        %v4000 = vshll.u32 %v3991, %v3998
        %v4001 = vshrl.u32 %v3983, %v3999
        %v4002 = vor.u32 %v4000, %v4001
        %v4003 = vsub.s32 4294967266, %v3998
        %v4004 = vadd.s32 %v4003, 127
        %v4005 = vshll.u32 %v4004, 23
        %v4006 = vor.u32 4788187, %v4005
        %v4007 = vand.u32 2147483647, %v4006
        %v4009 = vcvt.s32.f32 %v4002
        %v4010 = vmul.f32 %v4009, %v4007
        %v4011 = vxor.u32 %v4010, 2147483648
        %v4012 = vsel %vm3891, %v4011, %v4010
        %v4013 = vsub.s32 4, %v3989
        %v4014 = vsel %vm3891, %v4013, %v3989
        %v4015 = vsel %vm3890, %v315, %v4012
        %v4016 = vsel %vm3890, 0, %v4014
        %v4017 = vmul.f32 %v4015, %v4015
        %v4018 = vmul.f32 %v4017, -0.001358992
        %v4019 = vadd.f32 %v4018, 0.041655596
        %v4020 = vmul.f32 %v4017, %v4019
        %v4021 = vadd.f32 %v4020, -0.4999988
        %v4022 = vmul.f32 %v4017, %v4021
        %v4023 = vadd.f32 1.0, %v4022
        %v4024 = vmul.f32 %v4015, %v4015
        %v4025 = vmul.f32 %v4024, -0.00019511016
        %v4026 = vadd.f32 %v4025, 0.008332121
        %v4027 = vmul.f32 %v4024, %v4026
        %v4028 = vadd.f32 %v4027, -0.16666654
        %v4029 = vmul.f32 %v4024, %v4028
        %v4030 = vadd.f32 %v4029, 1.0
        %v4031 = vmul.f32 %v4030, %v4015
        %vm4032 = vweird.f32 %v315
        %v4033 = vadd.s32 %v4016, 3
        %v4034 = vand.u32 %v4033, 3
        %vm4035 = vcmp.lt.s32.totalorder %v4034, 2
        %vm4036 = vcmp.eq.s32.totalorder %v4034, 0
        %v4037 = vxor.u32 %v4031, 2147483648
        %v4038 = vsel %vm4036, %v4023, %v4037
        %vm4039 = vcmp.eq.s32.totalorder %v4034, 2
        %v4040 = vxor.u32 %v4023, 2147483648
        %v4041 = vsel %vm4039, %v4040, %v4031
        %v4042 = vsel %vm4035, %v4038, %v4041
        %v4043 = vsel %vm4032, nan, %v4042
        %v4044 = vand.u32 2147483647, %v316
        %vm4045 = vcmp.le.f32.partialorder %v4044, 0.7853982
        %vm4046 = vcmp.lt.s32.totalorder %v316, 0
        %v4047 = vand.u32 %v316, 2139095040
        %v4048 = vshrl.u32 %v4047, 23
        %v4049 = vsub.s32 %v4048, 127
        %v4050 = vand.u32 2147483647, %v316
        %v4051 = vand.u32 %v4050, 8388607
        %v4052 = vor.u32 %v4051, 8388608
        %v4053 = vsub.s32 0, %v4052
        %v4054 = vadd.s32 %v4049, 1
        %vm4055 = vcmp.gt.s32.totalorder %v4054, 0
        %v4056 = vsel %vm4055, %v4054, 0
        %v4057 = vshrl.u32 %v4056, 5
        %v4058 = vand.u32 %v4056, 31
        %v4059 = vsub.s32 32, %v4058
        %v4060 = vshrl.u32 683565275, %v4059
        %v4061 = vshll.u32 683565275, %v4058
        %v4062 = vshrl.u32 2475754826, %v4059
        %v4063 = vor.u32 %v4061, %v4062
        %v4064 = vshll.u32 2475754826, %v4058
        %v4065 = vshrl.u32 2131351028, %v4059
        %v4066 = vor.u32 %v4064, %v4065
        %v4067 = vshll.u32 2131351028, %v4058
        %v4068 = vshrl.u32 2102212464, %v4059
        %v4069 = vor.u32 %v4067, %v4068
        %v4070 = vshll.u32 2102212464, %v4058
        %v4071 = vshrl.u32 920167782, %v4059
        %v4072 = vor.u32 %v4070, %v4071
        %v4073 = vshll.u32 920167782, %v4058
        %v4074 = vshrl.u32 1326507024, %v4059
        %v4075 = vor.u32 %v4073, %v4074
        %vm4076 = vcmp.lt.s32.totalorder %v4057, 1
        %vm4077 = vcmp.lt.s32.totalorder %v4057, 2
        %vm4078 = vcmp.lt.s32.totalorder %v4057, 3
        %vm4079 = vcmp.lt.s32.totalorder %v4057, 4
        %v4080 = vsel %vm4076, %v4060, %v4063
        %v4081 = vsel %vm4079, %v4069, 2102212464
        %v4082 = vsel %vm4078, %v4066, %v4081
        %v4083 = vsel %vm4077, %v4080, %v4082
        %v4084 = vsel %vm4076, %v4063, %v4066
        %v4085 = vsel %vm4079, %v4072, 920167782
        %v4086 = vsel %vm4078, %v4069, %v4085
        %v4087 = vsel %vm4077, %v4084, %v4086
        %v4088 = vsel %vm4076, %v4066, %v4069
        %v4089 = vsel %vm4079, %v4075, 1326507024
        %v4090 = vsel %vm4078, %v4072, %v4089
        %v4091 = vsel %vm4077, %v4088, %v4090
        %v4092 = vshll.u32 %v4052, 8
        %v4093 = vand.u32 %v4092, 65535
        %v4094 = vshrl.u32 %v4092, 16
        %v4095 = vand.u32 %v4091, 65535
        %v4096 = vshrl.u32 %v4091, 16
        %v4097 = vmul.u32 %v4093, %v4095
        %v4098 = vmul.u32 %v4093, %v4096
        %v4099 = vmul.u32 %v4094, %v4095
        %v4100 = vmul.u32 %v4094, %v4096
        %v4101 = vshll.u32 %v4098, 16
        %v4102 = vshrl.u32 %v4098, 16
        %v4103 = vshll.u32 %v4099, 16
        %v4104 = vshrl.u32 %v4099, 16
        %vm4105 = vc.u32 %v4097, %v4101
        %v4106 = vsel %vm4105, 1, 0
        %v4107 = vadd.s32 %v4097, %v4101
        %v4108 = vadd.s32 %v4100, %v4106
        %vm4109 = vc.u32 %v4107, %v4103
        %v4110 = vsel %vm4109, 1, 0
        %v4111 = vadd.s32 %v4107, %v4103
        %v4112 = vadd.s32 %v4108, %v4110
        %v4113 = vadd.s32 %v4112, %v4102
        %v4114 = vadd.s32 %v4113, %v4104
        %v4115 = vand.u32 %v4092, 65535
        %v4116 = vshrl.u32 %v4092, 16
        %v4117 = vand.u32 %v4087, 65535
        %v4118 = vshrl.u32 %v4087, 16
        %v4119 = vmul.u32 %v4115, %v4117
        %v4120 = vmul.u32 %v4115, %v4118
        %v4121 = vmul.u32 %v4116, %v4117
        %v4122 = vmul.u32 %v4116, %v4118
        %v4123 = vshll.u32 %v4120, 16
        %v4124 = vshrl.u32 %v4120, 16
        %v4125 = vshll.u32 %v4121, 16
        %v4126 = vshrl.u32 %v4121, 16
        %vm4127 = vc.u32 %v4119, %v4123
        %v4128 = vsel %vm4127, 1, 0
        %v4129 = vadd.s32 %v4119, %v4123
        %v4130 = vadd.s32 %v4122, %v4128
        %vm4131 = vc.u32 %v4129, %v4125
        %v4132 = vsel %vm4131, 1, 0
        %v4133 = vadd.s32 %v4129, %v4125
        %v4134 = vadd.s32 %v4130, %v4132
        %v4135 = vadd.s32 %v4134, %v4124
        %v4136 = vadd.s32 %v4135, %v4126
        %v4137 = vmul.u32 %v4092, %v4083
        %v4138 = vadd.s32 %v4114, %v4133
        %vm4139 = vc.u32 %v4114, %v4133
        %v4140 = vadd.s32 %v4136, 1
        %v4141 = vsel %vm4139, %v4140, %v4136
        %v4142 = vadd.s32 %v4137, %v4141
        %v4143 = vadd.s32 %v4142, 536870912
        %v4144 = vshrl.u32 %v4143, 30
        %v4145 = vshll.u32 %v4144, 30
        %v4146 = vsub.s32 %v4142, %v4145
        %vm4147 = vcmp.lt.s32.totalorder %v4146, 0
        %v4148 = vsub.s32 0, %v4146
        %v4149 = vsel %vm4147, %v4148, %v4146
        %v4150 = vclz %v4149
        %v4151 = vsub.s32 %v4150, 2
        %vm4152 = vcmp.gt.s32.totalorder 0, %v4151
        %v4153 = vsel %vm4152, 0, %v4151
        %v4154 = vsub.s32 32, %v4153
        %v4155 = vshll.u32 %v4146, %v4153
        %v4156 = vshrl.u32 %v4138, %v4154
        %v4157 = vor.u32 %v4155, %v4156
        %v4158 = vsub.s32 4294967266, %v4153
        %v4159 = vadd.s32 %v4158, 127
        %v4160 = vshll.u32 %v4159, 23
        %v4161 = vor.u32 4788187, %v4160
        %v4162 = vand.u32 2147483647, %v4161
        %v4164 = vcvt.s32.f32 %v4157
        %v4165 = vmul.f32 %v4164, %v4162
        %v4166 = vxor.u32 %v4165, 2147483648
        %v4167 = vsel %vm4046, %v4166, %v4165
        %v4168 = vsub.s32 4, %v4144
        %v4169 = vsel %vm4046, %v4168, %v4144
        %v4170 = vsel %vm4045, %v316, %v4167
        %v4171 = vsel %vm4045, 0, %v4169
        %v4172 = vmul.f32 %v4170, %v4170
        %v4173 = vmul.f32 %v4172, -0.001358992
        %v4174 = vadd.f32 %v4173, 0.041655596
        %v4175 = vmul.f32 %v4172, %v4174
        %v4176 = vadd.f32 %v4175, -0.4999988
        %v4177 = vmul.f32 %v4172, %v4176
        %v4178 = vadd.f32 1.0, %v4177
        %v4179 = vmul.f32 %v4170, %v4170
        %v4180 = vmul.f32 %v4179, -0.00019511016
        %v4181 = vadd.f32 %v4180, 0.008332121
        %v4182 = vmul.f32 %v4179, %v4181
        %v4183 = vadd.f32 %v4182, -0.16666654
        %v4184 = vmul.f32 %v4179, %v4183
        %v4185 = vadd.f32 %v4184, 1.0
        %v4186 = vmul.f32 %v4185, %v4170
        %vm4187 = vweird.f32 %v316
        %v4188 = vadd.s32 %v4171, 3
        %v4189 = vand.u32 %v4188, 3
        %vm4190 = vcmp.lt.s32.totalorder %v4189, 2
        %vm4191 = vcmp.eq.s32.totalorder %v4189, 0
        %v4192 = vxor.u32 %v4186, 2147483648
        %v4193 = vsel %vm4191, %v4178, %v4192
        %vm4194 = vcmp.eq.s32.totalorder %v4189, 2
        %v4195 = vxor.u32 %v4178, 2147483648
        %v4196 = vsel %vm4194, %v4195, %v4186
        %v4197 = vsel %vm4190, %v4193, %v4196
        %v4198 = vsel %vm4187, nan, %v4197
        %v4199 = vand.u32 2147483647, %v317
        %vm4200 = vcmp.le.f32.partialorder %v4199, 0.7853982
        %vm4201 = vcmp.lt.s32.totalorder %v317, 0
        %v4202 = vand.u32 %v317, 2139095040
        %v4203 = vshrl.u32 %v4202, 23
        %v4204 = vsub.s32 %v4203, 127
        %v4205 = vand.u32 2147483647, %v317
        %v4206 = vand.u32 %v4205, 8388607
        %v4207 = vor.u32 %v4206, 8388608
        %v4208 = vsub.s32 0, %v4207
        %v4209 = vadd.s32 %v4204, 1
        %vm4210 = vcmp.gt.s32.totalorder %v4209, 0
        %v4211 = vsel %vm4210, %v4209, 0
        %v4212 = vshrl.u32 %v4211, 5
        %v4213 = vand.u32 %v4211, 31
        %v4214 = vsub.s32 32, %v4213
        %v4215 = vshrl.u32 683565275, %v4214
        %v4216 = vshll.u32 683565275, %v4213
        %v4217 = vshrl.u32 2475754826, %v4214
        %v4218 = vor.u32 %v4216, %v4217
        %v4219 = vshll.u32 2475754826, %v4213
        %v4220 = vshrl.u32 2131351028, %v4214
        %v4221 = vor.u32 %v4219, %v4220
        %v4222 = vshll.u32 2131351028, %v4213
        %v4223 = vshrl.u32 2102212464, %v4214
        %v4224 = vor.u32 %v4222, %v4223
        %v4225 = vshll.u32 2102212464, %v4213
        %v4226 = vshrl.u32 920167782, %v4214
        %v4227 = vor.u32 %v4225, %v4226
        %v4228 = vshll.u32 920167782, %v4213
        %v4229 = vshrl.u32 1326507024, %v4214
        %v4230 = vor.u32 %v4228, %v4229
        %vm4231 = vcmp.lt.s32.totalorder %v4212, 1
        %vm4232 = vcmp.lt.s32.totalorder %v4212, 2
        %vm4233 = vcmp.lt.s32.totalorder %v4212, 3
        %vm4234 = vcmp.lt.s32.totalorder %v4212, 4
        %v4235 = vsel %vm4231, %v4215, %v4218
        %v4236 = vsel %vm4234, %v4224, 2102212464
        %v4237 = vsel %vm4233, %v4221, %v4236
        %v4238 = vsel %vm4232, %v4235, %v4237
        %v4239 = vsel %vm4231, %v4218, %v4221
        %v4240 = vsel %vm4234, %v4227, 920167782
        %v4241 = vsel %vm4233, %v4224, %v4240
        %v4242 = vsel %vm4232, %v4239, %v4241
        %v4243 = vsel %vm4231, %v4221, %v4224
        %v4244 = vsel %vm4234, %v4230, 1326507024
        %v4245 = vsel %vm4233, %v4227, %v4244
        %v4246 = vsel %vm4232, %v4243, %v4245
        %v4247 = vshll.u32 %v4207, 8
        %v4248 = vand.u32 %v4247, 65535
        %v4249 = vshrl.u32 %v4247, 16
        %v4250 = vand.u32 %v4246, 65535
        %v4251 = vshrl.u32 %v4246, 16
        %v4252 = vmul.u32 %v4248, %v4250
        %v4253 = vmul.u32 %v4248, %v4251
        %v4254 = vmul.u32 %v4249, %v4250
        %v4255 = vmul.u32 %v4249, %v4251
        %v4256 = vshll.u32 %v4253, 16
        %v4257 = vshrl.u32 %v4253, 16
        %v4258 = vshll.u32 %v4254, 16
        %v4259 = vshrl.u32 %v4254, 16
        %vm4260 = vc.u32 %v4252, %v4256
        %v4261 = vsel %vm4260, 1, 0
        %v4262 = vadd.s32 %v4252, %v4256
        %v4263 = vadd.s32 %v4255, %v4261
        %vm4264 = vc.u32 %v4262, %v4258
        %v4265 = vsel %vm4264, 1, 0
        %v4266 = vadd.s32 %v4262, %v4258
        %v4267 = vadd.s32 %v4263, %v4265
        %v4268 = vadd.s32 %v4267, %v4257
        %v4269 = vadd.s32 %v4268, %v4259
        %v4270 = vand.u32 %v4247, 65535
        %v4271 = vshrl.u32 %v4247, 16
        %v4272 = vand.u32 %v4242, 65535
        %v4273 = vshrl.u32 %v4242, 16
        %v4274 = vmul.u32 %v4270, %v4272
        %v4275 = vmul.u32 %v4270, %v4273
        %v4276 = vmul.u32 %v4271, %v4272
        %v4277 = vmul.u32 %v4271, %v4273
        %v4278 = vshll.u32 %v4275, 16
        %v4279 = vshrl.u32 %v4275, 16
        %v4280 = vshll.u32 %v4276, 16
        %v4281 = vshrl.u32 %v4276, 16
        %vm4282 = vc.u32 %v4274, %v4278
        %v4283 = vsel %vm4282, 1, 0
        %v4284 = vadd.s32 %v4274, %v4278
        %v4285 = vadd.s32 %v4277, %v4283
        %vm4286 = vc.u32 %v4284, %v4280
        %v4287 = vsel %vm4286, 1, 0
        %v4288 = vadd.s32 %v4284, %v4280
        %v4289 = vadd.s32 %v4285, %v4287
        %v4290 = vadd.s32 %v4289, %v4279
        %v4291 = vadd.s32 %v4290, %v4281
        %v4292 = vmul.u32 %v4247, %v4238
        %v4293 = vadd.s32 %v4269, %v4288
        %vm4294 = vc.u32 %v4269, %v4288
        %v4295 = vadd.s32 %v4291, 1
        %v4296 = vsel %vm4294, %v4295, %v4291
        %v4297 = vadd.s32 %v4292, %v4296
        %v4298 = vadd.s32 %v4297, 536870912
        %v4299 = vshrl.u32 %v4298, 30
        %v4300 = vshll.u32 %v4299, 30
        %v4301 = vsub.s32 %v4297, %v4300
        %vm4302 = vcmp.lt.s32.totalorder %v4301, 0
        %v4303 = vsub.s32 0, %v4301
        %v4304 = vsel %vm4302, %v4303, %v4301
        %v4305 = vclz %v4304
        %v4306 = vsub.s32 %v4305, 2
        %vm4307 = vcmp.gt.s32.totalorder 0, %v4306
        %v4308 = vsel %vm4307, 0, %v4306
        %v4309 = vsub.s32 32, %v4308
        %v4310 = vshll.u32 %v4301, %v4308
        %v4311 = vshrl.u32 %v4293, %v4309
        %v4312 = vor.u32 %v4310, %v4311
        %v4313 = vsub.s32 4294967266, %v4308
        %v4314 = vadd.s32 %v4313, 127
        %v4315 = vshll.u32 %v4314, 23
        %v4316 = vor.u32 4788187, %v4315
        %v4317 = vand.u32 2147483647, %v4316
        %v4319 = vcvt.s32.f32 %v4312
        %v4320 = vmul.f32 %v4319, %v4317
        %v4321 = vxor.u32 %v4320, 2147483648
        %v4322 = vsel %vm4201, %v4321, %v4320
        %v4323 = vsub.s32 4, %v4299
        %v4324 = vsel %vm4201, %v4323, %v4299
        %v4325 = vsel %vm4200, %v317, %v4322
        %v4326 = vsel %vm4200, 0, %v4324
        %v4327 = vmul.f32 %v4325, %v4325
        %v4328 = vmul.f32 %v4327, -0.001358992
        %v4329 = vadd.f32 %v4328, 0.041655596
        %v4330 = vmul.f32 %v4327, %v4329
        %v4331 = vadd.f32 %v4330, -0.4999988
        %v4332 = vmul.f32 %v4327, %v4331
        %v4333 = vadd.f32 1.0, %v4332
        %v4334 = vmul.f32 %v4325, %v4325
        %v4335 = vmul.f32 %v4334, -0.00019511016
        %v4336 = vadd.f32 %v4335, 0.008332121
        %v4337 = vmul.f32 %v4334, %v4336
        %v4338 = vadd.f32 %v4337, -0.16666654
        %v4339 = vmul.f32 %v4334, %v4338
        %v4340 = vadd.f32 %v4339, 1.0
        %v4341 = vmul.f32 %v4340, %v4325
        %vm4342 = vweird.f32 %v317
        %v4343 = vadd.s32 %v4326, 3
        %v4344 = vand.u32 %v4343, 3
        %vm4345 = vcmp.lt.s32.totalorder %v4344, 2
        %vm4346 = vcmp.eq.s32.totalorder %v4344, 0
        %v4347 = vxor.u32 %v4341, 2147483648
        %v4348 = vsel %vm4346, %v4333, %v4347
        %vm4349 = vcmp.eq.s32.totalorder %v4344, 2
        %v4350 = vxor.u32 %v4333, 2147483648
        %v4351 = vsel %vm4349, %v4350, %v4341
        %v4352 = vsel %vm4345, %v4348, %v4351
        %v4353 = vsel %vm4342, nan, %v4352
        %v4354 = vand.u32 2147483647, %v318
        %vm4355 = vcmp.le.f32.partialorder %v4354, 0.7853982
        %vm4356 = vcmp.lt.s32.totalorder %v318, 0
        %v4357 = vand.u32 %v318, 2139095040
        %v4358 = vshrl.u32 %v4357, 23
        %v4359 = vsub.s32 %v4358, 127
        %v4360 = vand.u32 2147483647, %v318
        %v4361 = vand.u32 %v4360, 8388607
        %v4362 = vor.u32 %v4361, 8388608
        %v4363 = vsub.s32 0, %v4362
        %v4364 = vadd.s32 %v4359, 1
        %vm4365 = vcmp.gt.s32.totalorder %v4364, 0
        %v4366 = vsel %vm4365, %v4364, 0
        %v4367 = vshrl.u32 %v4366, 5
        %v4368 = vand.u32 %v4366, 31
        %v4369 = vsub.s32 32, %v4368
        %v4370 = vshrl.u32 683565275, %v4369
        %v4371 = vshll.u32 683565275, %v4368
        %v4372 = vshrl.u32 2475754826, %v4369
        %v4373 = vor.u32 %v4371, %v4372
        %v4374 = vshll.u32 2475754826, %v4368
        %v4375 = vshrl.u32 2131351028, %v4369
        %v4376 = vor.u32 %v4374, %v4375
        %v4377 = vshll.u32 2131351028, %v4368
        %v4378 = vshrl.u32 2102212464, %v4369
        %v4379 = vor.u32 %v4377, %v4378
        %v4380 = vshll.u32 2102212464, %v4368
        %v4381 = vshrl.u32 920167782, %v4369
        %v4382 = vor.u32 %v4380, %v4381
        %v4383 = vshll.u32 920167782, %v4368
        %v4384 = vshrl.u32 1326507024, %v4369
        %v4385 = vor.u32 %v4383, %v4384
        %vm4386 = vcmp.lt.s32.totalorder %v4367, 1
        %vm4387 = vcmp.lt.s32.totalorder %v4367, 2
        %vm4388 = vcmp.lt.s32.totalorder %v4367, 3
        %vm4389 = vcmp.lt.s32.totalorder %v4367, 4
        %v4390 = vsel %vm4386, %v4370, %v4373
        %v4391 = vsel %vm4389, %v4379, 2102212464
        %v4392 = vsel %vm4388, %v4376, %v4391
        %v4393 = vsel %vm4387, %v4390, %v4392
        %v4394 = vsel %vm4386, %v4373, %v4376
        %v4395 = vsel %vm4389, %v4382, 920167782
        %v4396 = vsel %vm4388, %v4379, %v4395
        %v4397 = vsel %vm4387, %v4394, %v4396
        %v4398 = vsel %vm4386, %v4376, %v4379
        %v4399 = vsel %vm4389, %v4385, 1326507024
        %v4400 = vsel %vm4388, %v4382, %v4399
        %v4401 = vsel %vm4387, %v4398, %v4400
        %v4402 = vshll.u32 %v4362, 8
        %v4403 = vand.u32 %v4402, 65535
        %v4404 = vshrl.u32 %v4402, 16
        %v4405 = vand.u32 %v4401, 65535
        %v4406 = vshrl.u32 %v4401, 16
        %v4407 = vmul.u32 %v4403, %v4405
        %v4408 = vmul.u32 %v4403, %v4406
        %v4409 = vmul.u32 %v4404, %v4405
        %v4410 = vmul.u32 %v4404, %v4406
        %v4411 = vshll.u32 %v4408, 16
        %v4412 = vshrl.u32 %v4408, 16
        %v4413 = vshll.u32 %v4409, 16
        %v4414 = vshrl.u32 %v4409, 16
        %vm4415 = vc.u32 %v4407, %v4411
        %v4416 = vsel %vm4415, 1, 0
        %v4417 = vadd.s32 %v4407, %v4411
        %v4418 = vadd.s32 %v4410, %v4416
        %vm4419 = vc.u32 %v4417, %v4413
        %v4420 = vsel %vm4419, 1, 0
        %v4421 = vadd.s32 %v4417, %v4413
        %v4422 = vadd.s32 %v4418, %v4420
        %v4423 = vadd.s32 %v4422, %v4412
        %v4424 = vadd.s32 %v4423, %v4414
        %v4425 = vand.u32 %v4402, 65535
        %v4426 = vshrl.u32 %v4402, 16
        %v4427 = vand.u32 %v4397, 65535
        %v4428 = vshrl.u32 %v4397, 16
        %v4429 = vmul.u32 %v4425, %v4427
        %v4430 = vmul.u32 %v4425, %v4428
        %v4431 = vmul.u32 %v4426, %v4427
        %v4432 = vmul.u32 %v4426, %v4428
        %v4433 = vshll.u32 %v4430, 16
        %v4434 = vshrl.u32 %v4430, 16
        %v4435 = vshll.u32 %v4431, 16
        %v4436 = vshrl.u32 %v4431, 16
        %vm4437 = vc.u32 %v4429, %v4433
        %v4438 = vsel %vm4437, 1, 0
        %v4439 = vadd.s32 %v4429, %v4433
        %v4440 = vadd.s32 %v4432, %v4438
        %vm4441 = vc.u32 %v4439, %v4435
        %v4442 = vsel %vm4441, 1, 0
        %v4443 = vadd.s32 %v4439, %v4435
        %v4444 = vadd.s32 %v4440, %v4442
        %v4445 = vadd.s32 %v4444, %v4434
        %v4446 = vadd.s32 %v4445, %v4436
        %v4447 = vmul.u32 %v4402, %v4393
        %v4448 = vadd.s32 %v4424, %v4443
        %vm4449 = vc.u32 %v4424, %v4443
        %v4450 = vadd.s32 %v4446, 1
        %v4451 = vsel %vm4449, %v4450, %v4446
        %v4452 = vadd.s32 %v4447, %v4451
        %v4453 = vadd.s32 %v4452, 536870912
        %v4454 = vshrl.u32 %v4453, 30
        %v4455 = vshll.u32 %v4454, 30
        %v4456 = vsub.s32 %v4452, %v4455
        %vm4457 = vcmp.lt.s32.totalorder %v4456, 0
        %v4458 = vsub.s32 0, %v4456
        %v4459 = vsel %vm4457, %v4458, %v4456
        %v4460 = vclz %v4459
        %v4461 = vsub.s32 %v4460, 2
        %vm4462 = vcmp.gt.s32.totalorder 0, %v4461
        %v4463 = vsel %vm4462, 0, %v4461
        %v4464 = vsub.s32 32, %v4463
        %v4465 = vshll.u32 %v4456, %v4463
        %v4466 = vshrl.u32 %v4448, %v4464
        %v4467 = vor.u32 %v4465, %v4466
        %v4468 = vsub.s32 4294967266, %v4463
        %v4469 = vadd.s32 %v4468, 127
        %v4470 = vshll.u32 %v4469, 23
        %v4471 = vor.u32 4788187, %v4470
        %v4472 = vand.u32 2147483647, %v4471
        %v4474 = vcvt.s32.f32 %v4467
        %v4475 = vmul.f32 %v4474, %v4472
        %v4476 = vxor.u32 %v4475, 2147483648
        %v4477 = vsel %vm4356, %v4476, %v4475
        %v4478 = vsub.s32 4, %v4454
        %v4479 = vsel %vm4356, %v4478, %v4454
        %v4480 = vsel %vm4355, %v318, %v4477
        %v4481 = vsel %vm4355, 0, %v4479
        %v4482 = vmul.f32 %v4480, %v4480
        %v4483 = vmul.f32 %v4482, -0.001358992
        %v4484 = vadd.f32 %v4483, 0.041655596
        %v4485 = vmul.f32 %v4482, %v4484
        %v4486 = vadd.f32 %v4485, -0.4999988
        %v4487 = vmul.f32 %v4482, %v4486
        %v4488 = vadd.f32 1.0, %v4487
        %v4489 = vmul.f32 %v4480, %v4480
        %v4490 = vmul.f32 %v4489, -0.00019511016
        %v4491 = vadd.f32 %v4490, 0.008332121
        %v4492 = vmul.f32 %v4489, %v4491
        %v4493 = vadd.f32 %v4492, -0.16666654
        %v4494 = vmul.f32 %v4489, %v4493
        %v4495 = vadd.f32 %v4494, 1.0
        %v4496 = vmul.f32 %v4495, %v4480
        %vm4497 = vweird.f32 %v318
        %v4498 = vadd.s32 %v4481, 3
        %v4499 = vand.u32 %v4498, 3
        %vm4500 = vcmp.lt.s32.totalorder %v4499, 2
        %vm4501 = vcmp.eq.s32.totalorder %v4499, 0
        %v4502 = vxor.u32 %v4496, 2147483648
        %v4503 = vsel %vm4501, %v4488, %v4502
        %vm4504 = vcmp.eq.s32.totalorder %v4499, 2
        %v4505 = vxor.u32 %v4488, 2147483648
        %v4506 = vsel %vm4504, %v4505, %v4496
        %v4507 = vsel %vm4500, %v4503, %v4506
        %v4508 = vsel %vm4497, nan, %v4507
        %v4509 = vand.u32 2147483647, %v319
        %vm4510 = vcmp.le.f32.partialorder %v4509, 0.7853982
        %vm4511 = vcmp.lt.s32.totalorder %v319, 0
        %v4512 = vand.u32 %v319, 2139095040
        %v4513 = vshrl.u32 %v4512, 23
        %v4514 = vsub.s32 %v4513, 127
        %v4515 = vand.u32 2147483647, %v319
        %v4516 = vand.u32 %v4515, 8388607
        %v4517 = vor.u32 %v4516, 8388608
        %v4518 = vsub.s32 0, %v4517
        %v4519 = vadd.s32 %v4514, 1
        %vm4520 = vcmp.gt.s32.totalorder %v4519, 0
        %v4521 = vsel %vm4520, %v4519, 0
        %v4522 = vshrl.u32 %v4521, 5
        %v4523 = vand.u32 %v4521, 31
        %v4524 = vsub.s32 32, %v4523
        %v4525 = vshrl.u32 683565275, %v4524
        %v4526 = vshll.u32 683565275, %v4523
        %v4527 = vshrl.u32 2475754826, %v4524
        %v4528 = vor.u32 %v4526, %v4527
        %v4529 = vshll.u32 2475754826, %v4523
        %v4530 = vshrl.u32 2131351028, %v4524
        %v4531 = vor.u32 %v4529, %v4530
        %v4532 = vshll.u32 2131351028, %v4523
        %v4533 = vshrl.u32 2102212464, %v4524
        %v4534 = vor.u32 %v4532, %v4533
        %v4535 = vshll.u32 2102212464, %v4523
        %v4536 = vshrl.u32 920167782, %v4524
        %v4537 = vor.u32 %v4535, %v4536
        %v4538 = vshll.u32 920167782, %v4523
        %v4539 = vshrl.u32 1326507024, %v4524
        %v4540 = vor.u32 %v4538, %v4539
        %vm4541 = vcmp.lt.s32.totalorder %v4522, 1
        %vm4542 = vcmp.lt.s32.totalorder %v4522, 2
        %vm4543 = vcmp.lt.s32.totalorder %v4522, 3
        %vm4544 = vcmp.lt.s32.totalorder %v4522, 4
        %v4545 = vsel %vm4541, %v4525, %v4528
        %v4546 = vsel %vm4544, %v4534, 2102212464
        %v4547 = vsel %vm4543, %v4531, %v4546
        %v4548 = vsel %vm4542, %v4545, %v4547
        %v4549 = vsel %vm4541, %v4528, %v4531
        %v4550 = vsel %vm4544, %v4537, 920167782
        %v4551 = vsel %vm4543, %v4534, %v4550
        %v4552 = vsel %vm4542, %v4549, %v4551
        %v4553 = vsel %vm4541, %v4531, %v4534
        %v4554 = vsel %vm4544, %v4540, 1326507024
        %v4555 = vsel %vm4543, %v4537, %v4554
        %v4556 = vsel %vm4542, %v4553, %v4555
        %v4557 = vshll.u32 %v4517, 8
        %v4558 = vand.u32 %v4557, 65535
        %v4559 = vshrl.u32 %v4557, 16
        %v4560 = vand.u32 %v4556, 65535
        %v4561 = vshrl.u32 %v4556, 16
        %v4562 = vmul.u32 %v4558, %v4560
        %v4563 = vmul.u32 %v4558, %v4561
        %v4564 = vmul.u32 %v4559, %v4560
        %v4565 = vmul.u32 %v4559, %v4561
        %v4566 = vshll.u32 %v4563, 16
        %v4567 = vshrl.u32 %v4563, 16
        %v4568 = vshll.u32 %v4564, 16
        %v4569 = vshrl.u32 %v4564, 16
        %vm4570 = vc.u32 %v4562, %v4566
        %v4571 = vsel %vm4570, 1, 0
        %v4572 = vadd.s32 %v4562, %v4566
        %v4573 = vadd.s32 %v4565, %v4571
        %vm4574 = vc.u32 %v4572, %v4568
        %v4575 = vsel %vm4574, 1, 0
        %v4576 = vadd.s32 %v4572, %v4568
        %v4577 = vadd.s32 %v4573, %v4575
        %v4578 = vadd.s32 %v4577, %v4567
        %v4579 = vadd.s32 %v4578, %v4569
        %v4580 = vand.u32 %v4557, 65535
        %v4581 = vshrl.u32 %v4557, 16
        %v4582 = vand.u32 %v4552, 65535
        %v4583 = vshrl.u32 %v4552, 16
        %v4584 = vmul.u32 %v4580, %v4582
        %v4585 = vmul.u32 %v4580, %v4583
        %v4586 = vmul.u32 %v4581, %v4582
        %v4587 = vmul.u32 %v4581, %v4583
        %v4588 = vshll.u32 %v4585, 16
        %v4589 = vshrl.u32 %v4585, 16
        %v4590 = vshll.u32 %v4586, 16
        %v4591 = vshrl.u32 %v4586, 16
        %vm4592 = vc.u32 %v4584, %v4588
        %v4593 = vsel %vm4592, 1, 0
        %v4594 = vadd.s32 %v4584, %v4588
        %v4595 = vadd.s32 %v4587, %v4593
        %vm4596 = vc.u32 %v4594, %v4590
        %v4597 = vsel %vm4596, 1, 0
        %v4598 = vadd.s32 %v4594, %v4590
        %v4599 = vadd.s32 %v4595, %v4597
        %v4600 = vadd.s32 %v4599, %v4589
        %v4601 = vadd.s32 %v4600, %v4591
        %v4602 = vmul.u32 %v4557, %v4548
        %v4603 = vadd.s32 %v4579, %v4598
        %vm4604 = vc.u32 %v4579, %v4598
        %v4605 = vadd.s32 %v4601, 1
        %v4606 = vsel %vm4604, %v4605, %v4601
        %v4607 = vadd.s32 %v4602, %v4606
        %v4608 = vadd.s32 %v4607, 536870912
        %v4609 = vshrl.u32 %v4608, 30
        %v4610 = vshll.u32 %v4609, 30
        %v4611 = vsub.s32 %v4607, %v4610
        %vm4612 = vcmp.lt.s32.totalorder %v4611, 0
        %v4613 = vsub.s32 0, %v4611
        %v4614 = vsel %vm4612, %v4613, %v4611
        %v4615 = vclz %v4614
        %v4616 = vsub.s32 %v4615, 2
        %vm4617 = vcmp.gt.s32.totalorder 0, %v4616
        %v4618 = vsel %vm4617, 0, %v4616
        %v4619 = vsub.s32 32, %v4618
        %v4620 = vshll.u32 %v4611, %v4618
        %v4621 = vshrl.u32 %v4603, %v4619
        %v4622 = vor.u32 %v4620, %v4621
        %v4623 = vsub.s32 4294967266, %v4618
        %v4624 = vadd.s32 %v4623, 127
        %v4625 = vshll.u32 %v4624, 23
        %v4626 = vor.u32 4788187, %v4625
        %v4627 = vand.u32 2147483647, %v4626
        %v4629 = vcvt.s32.f32 %v4622
        %v4630 = vmul.f32 %v4629, %v4627
        %v4631 = vxor.u32 %v4630, 2147483648
        %v4632 = vsel %vm4511, %v4631, %v4630
        %v4633 = vsub.s32 4, %v4609
        %v4634 = vsel %vm4511, %v4633, %v4609
        %v4635 = vsel %vm4510, %v319, %v4632
        %v4636 = vsel %vm4510, 0, %v4634
        %v4637 = vmul.f32 %v4635, %v4635
        %v4638 = vmul.f32 %v4637, -0.001358992
        %v4639 = vadd.f32 %v4638, 0.041655596
        %v4640 = vmul.f32 %v4637, %v4639
        %v4641 = vadd.f32 %v4640, -0.4999988
        %v4642 = vmul.f32 %v4637, %v4641
        %v4643 = vadd.f32 1.0, %v4642
        %v4644 = vmul.f32 %v4635, %v4635
        %v4645 = vmul.f32 %v4644, -0.00019511016
        %v4646 = vadd.f32 %v4645, 0.008332121
        %v4647 = vmul.f32 %v4644, %v4646
        %v4648 = vadd.f32 %v4647, -0.16666654
        %v4649 = vmul.f32 %v4644, %v4648
        %v4650 = vadd.f32 %v4649, 1.0
        %v4651 = vmul.f32 %v4650, %v4635
        %vm4652 = vweird.f32 %v319
        %v4653 = vadd.s32 %v4636, 3
        %v4654 = vand.u32 %v4653, 3
        %vm4655 = vcmp.lt.s32.totalorder %v4654, 2
        %vm4656 = vcmp.eq.s32.totalorder %v4654, 0
        %v4657 = vxor.u32 %v4651, 2147483648
        %v4658 = vsel %vm4656, %v4643, %v4657
        %vm4659 = vcmp.eq.s32.totalorder %v4654, 2
        %v4660 = vxor.u32 %v4643, 2147483648
        %v4661 = vsel %vm4659, %v4660, %v4651
        %v4662 = vsel %vm4655, %v4658, %v4661
        %v4663 = vsel %vm4652, nan, %v4662
        %v4664 = vand.u32 2147483647, %v320
        %vm4665 = vcmp.le.f32.partialorder %v4664, 0.7853982
        %vm4666 = vcmp.lt.s32.totalorder %v320, 0
        %v4667 = vand.u32 %v320, 2139095040
        %v4668 = vshrl.u32 %v4667, 23
        %v4669 = vsub.s32 %v4668, 127
        %v4670 = vand.u32 2147483647, %v320
        %v4671 = vand.u32 %v4670, 8388607
        %v4672 = vor.u32 %v4671, 8388608
        %v4673 = vsub.s32 0, %v4672
        %v4674 = vadd.s32 %v4669, 1
        %vm4675 = vcmp.gt.s32.totalorder %v4674, 0
        %v4676 = vsel %vm4675, %v4674, 0
        %v4677 = vshrl.u32 %v4676, 5
        %v4678 = vand.u32 %v4676, 31
        %v4679 = vsub.s32 32, %v4678
        %v4680 = vshrl.u32 683565275, %v4679
        %v4681 = vshll.u32 683565275, %v4678
        %v4682 = vshrl.u32 2475754826, %v4679
        %v4683 = vor.u32 %v4681, %v4682
        %v4684 = vshll.u32 2475754826, %v4678
        %v4685 = vshrl.u32 2131351028, %v4679
        %v4686 = vor.u32 %v4684, %v4685
        %v4687 = vshll.u32 2131351028, %v4678
        %v4688 = vshrl.u32 2102212464, %v4679
        %v4689 = vor.u32 %v4687, %v4688
        %v4690 = vshll.u32 2102212464, %v4678
        %v4691 = vshrl.u32 920167782, %v4679
        %v4692 = vor.u32 %v4690, %v4691
        %v4693 = vshll.u32 920167782, %v4678
        %v4694 = vshrl.u32 1326507024, %v4679
        %v4695 = vor.u32 %v4693, %v4694
        %vm4696 = vcmp.lt.s32.totalorder %v4677, 1
        %vm4697 = vcmp.lt.s32.totalorder %v4677, 2
        %vm4698 = vcmp.lt.s32.totalorder %v4677, 3
        %vm4699 = vcmp.lt.s32.totalorder %v4677, 4
        %v4700 = vsel %vm4696, %v4680, %v4683
        %v4701 = vsel %vm4699, %v4689, 2102212464
        %v4702 = vsel %vm4698, %v4686, %v4701
        %v4703 = vsel %vm4697, %v4700, %v4702
        %v4704 = vsel %vm4696, %v4683, %v4686
        %v4705 = vsel %vm4699, %v4692, 920167782
        %v4706 = vsel %vm4698, %v4689, %v4705
        %v4707 = vsel %vm4697, %v4704, %v4706
        %v4708 = vsel %vm4696, %v4686, %v4689
        %v4709 = vsel %vm4699, %v4695, 1326507024
        %v4710 = vsel %vm4698, %v4692, %v4709
        %v4711 = vsel %vm4697, %v4708, %v4710
        %v4712 = vshll.u32 %v4672, 8
        %v4713 = vand.u32 %v4712, 65535
        %v4714 = vshrl.u32 %v4712, 16
        %v4715 = vand.u32 %v4711, 65535
        %v4716 = vshrl.u32 %v4711, 16
        %v4717 = vmul.u32 %v4713, %v4715
        %v4718 = vmul.u32 %v4713, %v4716
        %v4719 = vmul.u32 %v4714, %v4715
        %v4720 = vmul.u32 %v4714, %v4716
        %v4721 = vshll.u32 %v4718, 16
        %v4722 = vshrl.u32 %v4718, 16
        %v4723 = vshll.u32 %v4719, 16
        %v4724 = vshrl.u32 %v4719, 16
        %vm4725 = vc.u32 %v4717, %v4721
        %v4726 = vsel %vm4725, 1, 0
        %v4727 = vadd.s32 %v4717, %v4721
        %v4728 = vadd.s32 %v4720, %v4726
        %vm4729 = vc.u32 %v4727, %v4723
        %v4730 = vsel %vm4729, 1, 0
        %v4731 = vadd.s32 %v4727, %v4723
        %v4732 = vadd.s32 %v4728, %v4730
        %v4733 = vadd.s32 %v4732, %v4722
        %v4734 = vadd.s32 %v4733, %v4724
        %v4735 = vand.u32 %v4712, 65535
        %v4736 = vshrl.u32 %v4712, 16
        %v4737 = vand.u32 %v4707, 65535
        %v4738 = vshrl.u32 %v4707, 16
        %v4739 = vmul.u32 %v4735, %v4737
        %v4740 = vmul.u32 %v4735, %v4738
        %v4741 = vmul.u32 %v4736, %v4737
        %v4742 = vmul.u32 %v4736, %v4738
        %v4743 = vshll.u32 %v4740, 16
        %v4744 = vshrl.u32 %v4740, 16
        %v4745 = vshll.u32 %v4741, 16
        %v4746 = vshrl.u32 %v4741, 16
        %vm4747 = vc.u32 %v4739, %v4743
        %v4748 = vsel %vm4747, 1, 0
        %v4749 = vadd.s32 %v4739, %v4743
        %v4750 = vadd.s32 %v4742, %v4748
        %vm4751 = vc.u32 %v4749, %v4745
        %v4752 = vsel %vm4751, 1, 0
        %v4753 = vadd.s32 %v4749, %v4745
        %v4754 = vadd.s32 %v4750, %v4752
        %v4755 = vadd.s32 %v4754, %v4744
        %v4756 = vadd.s32 %v4755, %v4746
        %v4757 = vmul.u32 %v4712, %v4703
        %v4758 = vadd.s32 %v4734, %v4753
        %vm4759 = vc.u32 %v4734, %v4753
        %v4760 = vadd.s32 %v4756, 1
        %v4761 = vsel %vm4759, %v4760, %v4756
        %v4762 = vadd.s32 %v4757, %v4761
        %v4763 = vadd.s32 %v4762, 536870912
        %v4764 = vshrl.u32 %v4763, 30
        %v4765 = vshll.u32 %v4764, 30
        %v4766 = vsub.s32 %v4762, %v4765
        %vm4767 = vcmp.lt.s32.totalorder %v4766, 0
        %v4768 = vsub.s32 0, %v4766
        %v4769 = vsel %vm4767, %v4768, %v4766
        %v4770 = vclz %v4769
        %v4771 = vsub.s32 %v4770, 2
        %vm4772 = vcmp.gt.s32.totalorder 0, %v4771
        %v4773 = vsel %vm4772, 0, %v4771
        %v4774 = vsub.s32 32, %v4773
        %v4775 = vshll.u32 %v4766, %v4773
        %v4776 = vshrl.u32 %v4758, %v4774
        %v4777 = vor.u32 %v4775, %v4776
        %v4778 = vsub.s32 4294967266, %v4773
        %v4779 = vadd.s32 %v4778, 127
        %v4780 = vshll.u32 %v4779, 23
        %v4781 = vor.u32 4788187, %v4780
        %v4782 = vand.u32 2147483647, %v4781
        %v4784 = vcvt.s32.f32 %v4777
        %v4785 = vmul.f32 %v4784, %v4782
        %v4786 = vxor.u32 %v4785, 2147483648
        %v4787 = vsel %vm4666, %v4786, %v4785
        %v4788 = vsub.s32 4, %v4764
        %v4789 = vsel %vm4666, %v4788, %v4764
        %v4790 = vsel %vm4665, %v320, %v4787
        %v4791 = vsel %vm4665, 0, %v4789
        %v4792 = vmul.f32 %v4790, %v4790
        %v4793 = vmul.f32 %v4792, -0.001358992
        %v4794 = vadd.f32 %v4793, 0.041655596
        %v4795 = vmul.f32 %v4792, %v4794
        %v4796 = vadd.f32 %v4795, -0.4999988
        %v4797 = vmul.f32 %v4792, %v4796
        %v4798 = vadd.f32 1.0, %v4797
        %v4799 = vmul.f32 %v4790, %v4790
        %v4800 = vmul.f32 %v4799, -0.00019511016
        %v4801 = vadd.f32 %v4800, 0.008332121
        %v4802 = vmul.f32 %v4799, %v4801
        %v4803 = vadd.f32 %v4802, -0.16666654
        %v4804 = vmul.f32 %v4799, %v4803
        %v4805 = vadd.f32 %v4804, 1.0
        %v4806 = vmul.f32 %v4805, %v4790
        %vm4807 = vweird.f32 %v320
        %v4808 = vadd.s32 %v4791, 3
        %v4809 = vand.u32 %v4808, 3
        %vm4810 = vcmp.lt.s32.totalorder %v4809, 2
        %vm4811 = vcmp.eq.s32.totalorder %v4809, 0
        %v4812 = vxor.u32 %v4806, 2147483648
        %v4813 = vsel %vm4811, %v4798, %v4812
        %vm4814 = vcmp.eq.s32.totalorder %v4809, 2
        %v4815 = vxor.u32 %v4798, 2147483648
        %v4816 = vsel %vm4814, %v4815, %v4806
        %v4817 = vsel %vm4810, %v4813, %v4816
        %v4818 = vsel %vm4807, nan, %v4817
        %v4819 = vand.u32 2147483647, %v321
        %vm4820 = vcmp.le.f32.partialorder %v4819, 0.7853982
        %vm4821 = vcmp.lt.s32.totalorder %v321, 0
        %v4822 = vand.u32 %v321, 2139095040
        %v4823 = vshrl.u32 %v4822, 23
        %v4824 = vsub.s32 %v4823, 127
        %v4825 = vand.u32 2147483647, %v321
        %v4826 = vand.u32 %v4825, 8388607
        %v4827 = vor.u32 %v4826, 8388608
        %v4828 = vsub.s32 0, %v4827
        %v4829 = vadd.s32 %v4824, 1
        %vm4830 = vcmp.gt.s32.totalorder %v4829, 0
        %v4831 = vsel %vm4830, %v4829, 0
        %v4832 = vshrl.u32 %v4831, 5
        %v4833 = vand.u32 %v4831, 31
        %v4834 = vsub.s32 32, %v4833
        %v4835 = vshrl.u32 683565275, %v4834
        %v4836 = vshll.u32 683565275, %v4833
        %v4837 = vshrl.u32 2475754826, %v4834
        %v4838 = vor.u32 %v4836, %v4837
        %v4839 = vshll.u32 2475754826, %v4833
        %v4840 = vshrl.u32 2131351028, %v4834
        %v4841 = vor.u32 %v4839, %v4840
        %v4842 = vshll.u32 2131351028, %v4833
        %v4843 = vshrl.u32 2102212464, %v4834
        %v4844 = vor.u32 %v4842, %v4843
        %v4845 = vshll.u32 2102212464, %v4833
        %v4846 = vshrl.u32 920167782, %v4834
        %v4847 = vor.u32 %v4845, %v4846
        %v4848 = vshll.u32 920167782, %v4833
        %v4849 = vshrl.u32 1326507024, %v4834
        %v4850 = vor.u32 %v4848, %v4849
        %vm4851 = vcmp.lt.s32.totalorder %v4832, 1
        %vm4852 = vcmp.lt.s32.totalorder %v4832, 2
        %vm4853 = vcmp.lt.s32.totalorder %v4832, 3
        %vm4854 = vcmp.lt.s32.totalorder %v4832, 4
        %v4855 = vsel %vm4851, %v4835, %v4838
        %v4856 = vsel %vm4854, %v4844, 2102212464
        %v4857 = vsel %vm4853, %v4841, %v4856
        %v4858 = vsel %vm4852, %v4855, %v4857
        %v4859 = vsel %vm4851, %v4838, %v4841
        %v4860 = vsel %vm4854, %v4847, 920167782
        %v4861 = vsel %vm4853, %v4844, %v4860
        %v4862 = vsel %vm4852, %v4859, %v4861
        %v4863 = vsel %vm4851, %v4841, %v4844
        %v4864 = vsel %vm4854, %v4850, 1326507024
        %v4865 = vsel %vm4853, %v4847, %v4864
        %v4866 = vsel %vm4852, %v4863, %v4865
        %v4867 = vshll.u32 %v4827, 8
        %v4868 = vand.u32 %v4867, 65535
        %v4869 = vshrl.u32 %v4867, 16
        %v4870 = vand.u32 %v4866, 65535
        %v4871 = vshrl.u32 %v4866, 16
        %v4872 = vmul.u32 %v4868, %v4870
        %v4873 = vmul.u32 %v4868, %v4871
        %v4874 = vmul.u32 %v4869, %v4870
        %v4875 = vmul.u32 %v4869, %v4871
        %v4876 = vshll.u32 %v4873, 16
        %v4877 = vshrl.u32 %v4873, 16
        %v4878 = vshll.u32 %v4874, 16
        %v4879 = vshrl.u32 %v4874, 16
        %vm4880 = vc.u32 %v4872, %v4876
        %v4881 = vsel %vm4880, 1, 0
        %v4882 = vadd.s32 %v4872, %v4876
        %v4883 = vadd.s32 %v4875, %v4881
        %vm4884 = vc.u32 %v4882, %v4878
        %v4885 = vsel %vm4884, 1, 0
        %v4886 = vadd.s32 %v4882, %v4878
        %v4887 = vadd.s32 %v4883, %v4885
        %v4888 = vadd.s32 %v4887, %v4877
        %v4889 = vadd.s32 %v4888, %v4879
        %v4890 = vand.u32 %v4867, 65535
        %v4891 = vshrl.u32 %v4867, 16
        %v4892 = vand.u32 %v4862, 65535
        %v4893 = vshrl.u32 %v4862, 16
        %v4894 = vmul.u32 %v4890, %v4892
        %v4895 = vmul.u32 %v4890, %v4893
        %v4896 = vmul.u32 %v4891, %v4892
        %v4897 = vmul.u32 %v4891, %v4893
        %v4898 = vshll.u32 %v4895, 16
        %v4899 = vshrl.u32 %v4895, 16
        %v4900 = vshll.u32 %v4896, 16
        %v4901 = vshrl.u32 %v4896, 16
        %vm4902 = vc.u32 %v4894, %v4898
        %v4903 = vsel %vm4902, 1, 0
        %v4904 = vadd.s32 %v4894, %v4898
        %v4905 = vadd.s32 %v4897, %v4903
        %vm4906 = vc.u32 %v4904, %v4900
        %v4907 = vsel %vm4906, 1, 0
        %v4908 = vadd.s32 %v4904, %v4900
        %v4909 = vadd.s32 %v4905, %v4907
        %v4910 = vadd.s32 %v4909, %v4899
        %v4911 = vadd.s32 %v4910, %v4901
        %v4912 = vmul.u32 %v4867, %v4858
        %v4913 = vadd.s32 %v4889, %v4908
        %vm4914 = vc.u32 %v4889, %v4908
        %v4915 = vadd.s32 %v4911, 1
        %v4916 = vsel %vm4914, %v4915, %v4911
        %v4917 = vadd.s32 %v4912, %v4916
        %v4918 = vadd.s32 %v4917, 536870912
        %v4919 = vshrl.u32 %v4918, 30
        %v4920 = vshll.u32 %v4919, 30
        %v4921 = vsub.s32 %v4917, %v4920
        %vm4922 = vcmp.lt.s32.totalorder %v4921, 0
        %v4923 = vsub.s32 0, %v4921
        %v4924 = vsel %vm4922, %v4923, %v4921
        %v4925 = vclz %v4924
        %v4926 = vsub.s32 %v4925, 2
        %vm4927 = vcmp.gt.s32.totalorder 0, %v4926
        %v4928 = vsel %vm4927, 0, %v4926
        %v4929 = vsub.s32 32, %v4928
        %v4930 = vshll.u32 %v4921, %v4928
        %v4931 = vshrl.u32 %v4913, %v4929
        %v4932 = vor.u32 %v4930, %v4931
        %v4933 = vsub.s32 4294967266, %v4928
        %v4934 = vadd.s32 %v4933, 127
        %v4935 = vshll.u32 %v4934, 23
        %v4936 = vor.u32 4788187, %v4935
        %v4937 = vand.u32 2147483647, %v4936
        %v4939 = vcvt.s32.f32 %v4932
        %v4940 = vmul.f32 %v4939, %v4937
        %v4941 = vxor.u32 %v4940, 2147483648
        %v4942 = vsel %vm4821, %v4941, %v4940
        %v4943 = vsub.s32 4, %v4919
        %v4944 = vsel %vm4821, %v4943, %v4919
        %v4945 = vsel %vm4820, %v321, %v4942
        %v4946 = vsel %vm4820, 0, %v4944
        %v4947 = vmul.f32 %v4945, %v4945
        %v4948 = vmul.f32 %v4947, -0.001358992
        %v4949 = vadd.f32 %v4948, 0.041655596
        %v4950 = vmul.f32 %v4947, %v4949
        %v4951 = vadd.f32 %v4950, -0.4999988
        %v4952 = vmul.f32 %v4947, %v4951
        %v4953 = vadd.f32 1.0, %v4952
        %v4954 = vmul.f32 %v4945, %v4945
        %v4955 = vmul.f32 %v4954, -0.00019511016
        %v4956 = vadd.f32 %v4955, 0.008332121
        %v4957 = vmul.f32 %v4954, %v4956
        %v4958 = vadd.f32 %v4957, -0.16666654
        %v4959 = vmul.f32 %v4954, %v4958
        %v4960 = vadd.f32 %v4959, 1.0
        %v4961 = vmul.f32 %v4960, %v4945
        %vm4962 = vweird.f32 %v321
        %v4963 = vadd.s32 %v4946, 3
        %v4964 = vand.u32 %v4963, 3
        %vm4965 = vcmp.lt.s32.totalorder %v4964, 2
        %vm4966 = vcmp.eq.s32.totalorder %v4964, 0
        %v4967 = vxor.u32 %v4961, 2147483648
        %v4968 = vsel %vm4966, %v4953, %v4967
        %vm4969 = vcmp.eq.s32.totalorder %v4964, 2
        %v4970 = vxor.u32 %v4953, 2147483648
        %v4971 = vsel %vm4969, %v4970, %v4961
        %v4972 = vsel %vm4965, %v4968, %v4971
        %v4973 = vsel %vm4962, nan, %v4972
        %v4974 = vand.u32 2147483647, %v322
        %vm4975 = vcmp.le.f32.partialorder %v4974, 0.7853982
        %vm4976 = vcmp.lt.s32.totalorder %v322, 0
        %v4977 = vand.u32 %v322, 2139095040
        %v4978 = vshrl.u32 %v4977, 23
        %v4979 = vsub.s32 %v4978, 127
        %v4980 = vand.u32 2147483647, %v322
        %v4981 = vand.u32 %v4980, 8388607
        %v4982 = vor.u32 %v4981, 8388608
        %v4983 = vsub.s32 0, %v4982
        %v4984 = vadd.s32 %v4979, 1
        %vm4985 = vcmp.gt.s32.totalorder %v4984, 0
        %v4986 = vsel %vm4985, %v4984, 0
        %v4987 = vshrl.u32 %v4986, 5
        %v4988 = vand.u32 %v4986, 31
        %v4989 = vsub.s32 32, %v4988
        %v4990 = vshrl.u32 683565275, %v4989
        %v4991 = vshll.u32 683565275, %v4988
        %v4992 = vshrl.u32 2475754826, %v4989
        %v4993 = vor.u32 %v4991, %v4992
        %v4994 = vshll.u32 2475754826, %v4988
        %v4995 = vshrl.u32 2131351028, %v4989
        %v4996 = vor.u32 %v4994, %v4995
        %v4997 = vshll.u32 2131351028, %v4988
        %v4998 = vshrl.u32 2102212464, %v4989
        %v4999 = vor.u32 %v4997, %v4998
        %v5000 = vshll.u32 2102212464, %v4988
        %v5001 = vshrl.u32 920167782, %v4989
        %v5002 = vor.u32 %v5000, %v5001
        %v5003 = vshll.u32 920167782, %v4988
        %v5004 = vshrl.u32 1326507024, %v4989
        %v5005 = vor.u32 %v5003, %v5004
        %vm5006 = vcmp.lt.s32.totalorder %v4987, 1
        %vm5007 = vcmp.lt.s32.totalorder %v4987, 2
        %vm5008 = vcmp.lt.s32.totalorder %v4987, 3
        %vm5009 = vcmp.lt.s32.totalorder %v4987, 4
        %v5010 = vsel %vm5006, %v4990, %v4993
        %v5011 = vsel %vm5009, %v4999, 2102212464
        %v5012 = vsel %vm5008, %v4996, %v5011
        %v5013 = vsel %vm5007, %v5010, %v5012
        %v5014 = vsel %vm5006, %v4993, %v4996
        %v5015 = vsel %vm5009, %v5002, 920167782
        %v5016 = vsel %vm5008, %v4999, %v5015
        %v5017 = vsel %vm5007, %v5014, %v5016
        %v5018 = vsel %vm5006, %v4996, %v4999
        %v5019 = vsel %vm5009, %v5005, 1326507024
        %v5020 = vsel %vm5008, %v5002, %v5019
        %v5021 = vsel %vm5007, %v5018, %v5020
        %v5022 = vshll.u32 %v4982, 8
        %v5023 = vand.u32 %v5022, 65535
        %v5024 = vshrl.u32 %v5022, 16
        %v5025 = vand.u32 %v5021, 65535
        %v5026 = vshrl.u32 %v5021, 16
        %v5027 = vmul.u32 %v5023, %v5025
        %v5028 = vmul.u32 %v5023, %v5026
        %v5029 = vmul.u32 %v5024, %v5025
        %v5030 = vmul.u32 %v5024, %v5026
        %v5031 = vshll.u32 %v5028, 16
        %v5032 = vshrl.u32 %v5028, 16
        %v5033 = vshll.u32 %v5029, 16
        %v5034 = vshrl.u32 %v5029, 16
        %vm5035 = vc.u32 %v5027, %v5031
        %v5036 = vsel %vm5035, 1, 0
        %v5037 = vadd.s32 %v5027, %v5031
        %v5038 = vadd.s32 %v5030, %v5036
        %vm5039 = vc.u32 %v5037, %v5033
        %v5040 = vsel %vm5039, 1, 0
        %v5041 = vadd.s32 %v5037, %v5033
        %v5042 = vadd.s32 %v5038, %v5040
        %v5043 = vadd.s32 %v5042, %v5032
        %v5044 = vadd.s32 %v5043, %v5034
        %v5045 = vand.u32 %v5022, 65535
        %v5046 = vshrl.u32 %v5022, 16
        %v5047 = vand.u32 %v5017, 65535
        %v5048 = vshrl.u32 %v5017, 16
        %v5049 = vmul.u32 %v5045, %v5047
        %v5050 = vmul.u32 %v5045, %v5048
        %v5051 = vmul.u32 %v5046, %v5047
        %v5052 = vmul.u32 %v5046, %v5048
        %v5053 = vshll.u32 %v5050, 16
        %v5054 = vshrl.u32 %v5050, 16
        %v5055 = vshll.u32 %v5051, 16
        %v5056 = vshrl.u32 %v5051, 16
        %vm5057 = vc.u32 %v5049, %v5053
        %v5058 = vsel %vm5057, 1, 0
        %v5059 = vadd.s32 %v5049, %v5053
        %v5060 = vadd.s32 %v5052, %v5058
        %vm5061 = vc.u32 %v5059, %v5055
        %v5062 = vsel %vm5061, 1, 0
        %v5063 = vadd.s32 %v5059, %v5055
        %v5064 = vadd.s32 %v5060, %v5062
        %v5065 = vadd.s32 %v5064, %v5054
        %v5066 = vadd.s32 %v5065, %v5056
        %v5067 = vmul.u32 %v5022, %v5013
        %v5068 = vadd.s32 %v5044, %v5063
        %vm5069 = vc.u32 %v5044, %v5063
        %v5070 = vadd.s32 %v5066, 1
        %v5071 = vsel %vm5069, %v5070, %v5066
        %v5072 = vadd.s32 %v5067, %v5071
        %v5073 = vadd.s32 %v5072, 536870912
        %v5074 = vshrl.u32 %v5073, 30
        %v5075 = vshll.u32 %v5074, 30
        %v5076 = vsub.s32 %v5072, %v5075
        %vm5077 = vcmp.lt.s32.totalorder %v5076, 0
        %v5078 = vsub.s32 0, %v5076
        %v5079 = vsel %vm5077, %v5078, %v5076
        %v5080 = vclz %v5079
        %v5081 = vsub.s32 %v5080, 2
        %vm5082 = vcmp.gt.s32.totalorder 0, %v5081
        %v5083 = vsel %vm5082, 0, %v5081
        %v5084 = vsub.s32 32, %v5083
        %v5085 = vshll.u32 %v5076, %v5083
        %v5086 = vshrl.u32 %v5068, %v5084
        %v5087 = vor.u32 %v5085, %v5086
        %v5088 = vsub.s32 4294967266, %v5083
        %v5089 = vadd.s32 %v5088, 127
        %v5090 = vshll.u32 %v5089, 23
        %v5091 = vor.u32 4788187, %v5090
        %v5092 = vand.u32 2147483647, %v5091
        %v5094 = vcvt.s32.f32 %v5087
        %v5095 = vmul.f32 %v5094, %v5092
        %v5096 = vxor.u32 %v5095, 2147483648
        %v5097 = vsel %vm4976, %v5096, %v5095
        %v5098 = vsub.s32 4, %v5074
        %v5099 = vsel %vm4976, %v5098, %v5074
        %v5100 = vsel %vm4975, %v322, %v5097
        %v5101 = vsel %vm4975, 0, %v5099
        %v5102 = vmul.f32 %v5100, %v5100
        %v5103 = vmul.f32 %v5102, -0.001358992
        %v5104 = vadd.f32 %v5103, 0.041655596
        %v5105 = vmul.f32 %v5102, %v5104
        %v5106 = vadd.f32 %v5105, -0.4999988
        %v5107 = vmul.f32 %v5102, %v5106
        %v5108 = vadd.f32 1.0, %v5107
        %v5109 = vmul.f32 %v5100, %v5100
        %v5110 = vmul.f32 %v5109, -0.00019511016
        %v5111 = vadd.f32 %v5110, 0.008332121
        %v5112 = vmul.f32 %v5109, %v5111
        %v5113 = vadd.f32 %v5112, -0.16666654
        %v5114 = vmul.f32 %v5109, %v5113
        %v5115 = vadd.f32 %v5114, 1.0
        %v5116 = vmul.f32 %v5115, %v5100
        %vm5117 = vweird.f32 %v322
        %v5118 = vadd.s32 %v5101, 3
        %v5119 = vand.u32 %v5118, 3
        %vm5120 = vcmp.lt.s32.totalorder %v5119, 2
        %vm5121 = vcmp.eq.s32.totalorder %v5119, 0
        %v5122 = vxor.u32 %v5116, 2147483648
        %v5123 = vsel %vm5121, %v5108, %v5122
        %vm5124 = vcmp.eq.s32.totalorder %v5119, 2
        %v5125 = vxor.u32 %v5108, 2147483648
        %v5126 = vsel %vm5124, %v5125, %v5116
        %v5127 = vsel %vm5120, %v5123, %v5126
        %v5128 = vsel %vm5117, nan, %v5127
        %v5129 = vand.u32 2147483647, %v323
        %vm5130 = vcmp.le.f32.partialorder %v5129, 0.7853982
        %vm5131 = vcmp.lt.s32.totalorder %v323, 0
        %v5132 = vand.u32 %v323, 2139095040
        %v5133 = vshrl.u32 %v5132, 23
        %v5134 = vsub.s32 %v5133, 127
        %v5135 = vand.u32 2147483647, %v323
        %v5136 = vand.u32 %v5135, 8388607
        %v5137 = vor.u32 %v5136, 8388608
        %v5138 = vsub.s32 0, %v5137
        %v5139 = vadd.s32 %v5134, 1
        %vm5140 = vcmp.gt.s32.totalorder %v5139, 0
        %v5141 = vsel %vm5140, %v5139, 0
        %v5142 = vshrl.u32 %v5141, 5
        %v5143 = vand.u32 %v5141, 31
        %v5144 = vsub.s32 32, %v5143
        %v5145 = vshrl.u32 683565275, %v5144
        %v5146 = vshll.u32 683565275, %v5143
        %v5147 = vshrl.u32 2475754826, %v5144
        %v5148 = vor.u32 %v5146, %v5147
        %v5149 = vshll.u32 2475754826, %v5143
        %v5150 = vshrl.u32 2131351028, %v5144
        %v5151 = vor.u32 %v5149, %v5150
        %v5152 = vshll.u32 2131351028, %v5143
        %v5153 = vshrl.u32 2102212464, %v5144
        %v5154 = vor.u32 %v5152, %v5153
        %v5155 = vshll.u32 2102212464, %v5143
        %v5156 = vshrl.u32 920167782, %v5144
        %v5157 = vor.u32 %v5155, %v5156
        %v5158 = vshll.u32 920167782, %v5143
        %v5159 = vshrl.u32 1326507024, %v5144
        %v5160 = vor.u32 %v5158, %v5159
        %vm5161 = vcmp.lt.s32.totalorder %v5142, 1
        %vm5162 = vcmp.lt.s32.totalorder %v5142, 2
        %vm5163 = vcmp.lt.s32.totalorder %v5142, 3
        %vm5164 = vcmp.lt.s32.totalorder %v5142, 4
        %v5165 = vsel %vm5161, %v5145, %v5148
        %v5166 = vsel %vm5164, %v5154, 2102212464
        %v5167 = vsel %vm5163, %v5151, %v5166
        %v5168 = vsel %vm5162, %v5165, %v5167
        %v5169 = vsel %vm5161, %v5148, %v5151
        %v5170 = vsel %vm5164, %v5157, 920167782
        %v5171 = vsel %vm5163, %v5154, %v5170
        %v5172 = vsel %vm5162, %v5169, %v5171
        %v5173 = vsel %vm5161, %v5151, %v5154
        %v5174 = vsel %vm5164, %v5160, 1326507024
        %v5175 = vsel %vm5163, %v5157, %v5174
        %v5176 = vsel %vm5162, %v5173, %v5175
        %v5177 = vshll.u32 %v5137, 8
        %v5178 = vand.u32 %v5177, 65535
        %v5179 = vshrl.u32 %v5177, 16
        %v5180 = vand.u32 %v5176, 65535
        %v5181 = vshrl.u32 %v5176, 16
        %v5182 = vmul.u32 %v5178, %v5180
        %v5183 = vmul.u32 %v5178, %v5181
        %v5184 = vmul.u32 %v5179, %v5180
        %v5185 = vmul.u32 %v5179, %v5181
        %v5186 = vshll.u32 %v5183, 16
        %v5187 = vshrl.u32 %v5183, 16
        %v5188 = vshll.u32 %v5184, 16
        %v5189 = vshrl.u32 %v5184, 16
        %vm5190 = vc.u32 %v5182, %v5186
        %v5191 = vsel %vm5190, 1, 0
        %v5192 = vadd.s32 %v5182, %v5186
        %v5193 = vadd.s32 %v5185, %v5191
        %vm5194 = vc.u32 %v5192, %v5188
        %v5195 = vsel %vm5194, 1, 0
        %v5196 = vadd.s32 %v5192, %v5188
        %v5197 = vadd.s32 %v5193, %v5195
        %v5198 = vadd.s32 %v5197, %v5187
        %v5199 = vadd.s32 %v5198, %v5189
        %v5200 = vand.u32 %v5177, 65535
        %v5201 = vshrl.u32 %v5177, 16
        %v5202 = vand.u32 %v5172, 65535
        %v5203 = vshrl.u32 %v5172, 16
        %v5204 = vmul.u32 %v5200, %v5202
        %v5205 = vmul.u32 %v5200, %v5203
        %v5206 = vmul.u32 %v5201, %v5202
        %v5207 = vmul.u32 %v5201, %v5203
        %v5208 = vshll.u32 %v5205, 16
        %v5209 = vshrl.u32 %v5205, 16
        %v5210 = vshll.u32 %v5206, 16
        %v5211 = vshrl.u32 %v5206, 16
        %vm5212 = vc.u32 %v5204, %v5208
        %v5213 = vsel %vm5212, 1, 0
        %v5214 = vadd.s32 %v5204, %v5208
        %v5215 = vadd.s32 %v5207, %v5213
        %vm5216 = vc.u32 %v5214, %v5210
        %v5217 = vsel %vm5216, 1, 0
        %v5218 = vadd.s32 %v5214, %v5210
        %v5219 = vadd.s32 %v5215, %v5217
        %v5220 = vadd.s32 %v5219, %v5209
        %v5221 = vadd.s32 %v5220, %v5211
        %v5222 = vmul.u32 %v5177, %v5168
        %v5223 = vadd.s32 %v5199, %v5218
        %vm5224 = vc.u32 %v5199, %v5218
        %v5225 = vadd.s32 %v5221, 1
        %v5226 = vsel %vm5224, %v5225, %v5221
        %v5227 = vadd.s32 %v5222, %v5226
        %v5228 = vadd.s32 %v5227, 536870912
        %v5229 = vshrl.u32 %v5228, 30
        %v5230 = vshll.u32 %v5229, 30
        %v5231 = vsub.s32 %v5227, %v5230
        %vm5232 = vcmp.lt.s32.totalorder %v5231, 0
        %v5233 = vsub.s32 0, %v5231
        %v5234 = vsel %vm5232, %v5233, %v5231
        %v5235 = vclz %v5234
        %v5236 = vsub.s32 %v5235, 2
        %vm5237 = vcmp.gt.s32.totalorder 0, %v5236
        %v5238 = vsel %vm5237, 0, %v5236
        %v5239 = vsub.s32 32, %v5238
        %v5240 = vshll.u32 %v5231, %v5238
        %v5241 = vshrl.u32 %v5223, %v5239
        %v5242 = vor.u32 %v5240, %v5241
        %v5243 = vsub.s32 4294967266, %v5238
        %v5244 = vadd.s32 %v5243, 127
        %v5245 = vshll.u32 %v5244, 23
        %v5246 = vor.u32 4788187, %v5245
        %v5247 = vand.u32 2147483647, %v5246
        %v5249 = vcvt.s32.f32 %v5242
        %v5250 = vmul.f32 %v5249, %v5247
        %v5251 = vxor.u32 %v5250, 2147483648
        %v5252 = vsel %vm5131, %v5251, %v5250
        %v5253 = vsub.s32 4, %v5229
        %v5254 = vsel %vm5131, %v5253, %v5229
        %v5255 = vsel %vm5130, %v323, %v5252
        %v5256 = vsel %vm5130, 0, %v5254
        %v5257 = vmul.f32 %v5255, %v5255
        %v5258 = vmul.f32 %v5257, -0.001358992
        %v5259 = vadd.f32 %v5258, 0.041655596
        %v5260 = vmul.f32 %v5257, %v5259
        %v5261 = vadd.f32 %v5260, -0.4999988
        %v5262 = vmul.f32 %v5257, %v5261
        %v5263 = vadd.f32 1.0, %v5262
        %v5264 = vmul.f32 %v5255, %v5255
        %v5265 = vmul.f32 %v5264, -0.00019511016
        %v5266 = vadd.f32 %v5265, 0.008332121
        %v5267 = vmul.f32 %v5264, %v5266
        %v5268 = vadd.f32 %v5267, -0.16666654
        %v5269 = vmul.f32 %v5264, %v5268
        %v5270 = vadd.f32 %v5269, 1.0
        %v5271 = vmul.f32 %v5270, %v5255
        %vm5272 = vweird.f32 %v323
        %v5273 = vadd.s32 %v5256, 3
        %v5274 = vand.u32 %v5273, 3
        %vm5275 = vcmp.lt.s32.totalorder %v5274, 2
        %vm5276 = vcmp.eq.s32.totalorder %v5274, 0
        %v5277 = vxor.u32 %v5271, 2147483648
        %v5278 = vsel %vm5276, %v5263, %v5277
        %vm5279 = vcmp.eq.s32.totalorder %v5274, 2
        %v5280 = vxor.u32 %v5263, 2147483648
        %v5281 = vsel %vm5279, %v5280, %v5271
        %v5282 = vsel %vm5275, %v5278, %v5281
        %v5283 = vsel %vm5272, nan, %v5282
        %5284 = vst [vmem:[%s151] sm:$0xff] %v478
        %5285 = vst [vmem:[%s151 + $0x8] sm:$0xff] %v633
        %5286 = vst [vmem:[%s151 + $0x10] sm:$0xff] %v788
        %5287 = vst [vmem:[%s151 + $0x18] sm:$0xff] %v943
        %5288 = vst [vmem:[%s151 + $0x20] sm:$0xff] %v1098
        %5289 = vst [vmem:[%s151 + $0x28] sm:$0xff] %v1253
        %5290 = vst [vmem:[%s151 + $0x30] sm:$0xff] %v1408
        %5291 = vst [vmem:[%s151 + $0x38] sm:$0xff] %v1563
        %5292 = vst [vmem:[%s151 + $0x40] sm:$0xff] %v1718
        %5293 = vst [vmem:[%s151 + $0x48] sm:$0xff] %v1873
        %5294 = vst [vmem:[%s151 + $0x50] sm:$0xff] %v2028
        %5295 = vst [vmem:[%s151 + $0x58] sm:$0xff] %v2183
        %5296 = vst [vmem:[%s151 + $0x60] sm:$0xff] %v2338
        %5297 = vst [vmem:[%s151 + $0x68] sm:$0xff] %v2493
        %5298 = vst [vmem:[%s151 + $0x70] sm:$0xff] %v2648
        %5299 = vst [vmem:[%s151 + $0x78] sm:$0xff] %v2803
        %5300 = vst [vmem:[%s151 + $0x80] sm:$0xff] %v2958
        %5301 = vst [vmem:[%s151 + $0x88] sm:$0xff] %v3113
        %5302 = vst [vmem:[%s151 + $0x90] sm:$0xff] %v3268
        %5303 = vst [vmem:[%s151 + $0x98] sm:$0xff] %v3423
        %5304 = vst [vmem:[%s151 + $0xa0] sm:$0xff] %v3578
        %5305 = vst [vmem:[%s151 + $0xa8] sm:$0xff] %v3733
        %5306 = vst [vmem:[%s151 + $0xb0] sm:$0xff] %v3888
        %5307 = vst [vmem:[%s151 + $0xb8] sm:$0xff] %v4043
        %5308 = vst [vmem:[%s151 + $0xc0] sm:$0xff] %v4198
        %5309 = vst [vmem:[%s151 + $0xc8] sm:$0xff] %v4353
        %5310 = vst [vmem:[%s151 + $0xd0] sm:$0xff] %v4508
        %5311 = vst [vmem:[%s151 + $0xd8] sm:$0xff] %v4663
        %5312 = vst [vmem:[%s151 + $0xe0] sm:$0xff] %v4818
        %5313 = vst [vmem:[%s151 + $0xe8] sm:$0xff] %v4973
        %5314 = vst [vmem:[%s151 + $0xf0] sm:$0xff] %v5128
        %5315 = vst [vmem:[%s151 + $0xf8] sm:$0xff] %v5283
        %s5316 = sand.u32 %s68, 1
        %s5317 = scalar_lea.sflag [#allocation4], %s5316
        %s5318 = sand.u32 %s68, 1
        %s5319 = smul.addr %s5318, 256
        %s5320 = scalar_lea.vmem [#allocation7], %s5319
        // Predicated region
        $region37: #{tpu_custom_call.1} parent=27 // pred_check
          %p5321 = pneg %p78
        $region38: #{tpu_custom_call.1} parent=27 // pred_check_branch
          %5323 = sbr.rel (%p5321) target = $region40
        $region39: #{tpu_custom_call.1} parent=27 // pred_region
          %s5324 = smul.u32 32, %s18
          %5326 = vsyncadd %s5317, 0
          %s5327 = smul.addr %s5324, 8
          %s5328 = scalar_lea.hbm %s2, %s5327
          %s5329 = sshll.u32 %s5320, 4
          %s5330 = int_to_ptr.vmem [resolvable:$true] %s5329
          %s5331 = sshll.u32 %s5328, 4
          %s5332 = int_to_ptr.hbm [resolvable:$true] %s5331
          %5337 = dma.vmem_to_hbm [thread:$0]  %s5330, 4096, %s5332, %s5317, 128, 128, 8
        $region40: #{tpu_custom_call.1} parent=27 // pred_fallthru
          _
      $region28: #{tpu_custom_call.1} parent=5 // pred_fallthru
        _
      %p5338 = scmp.le.s32.totalorder 2, %s13
      // Predicated region
      $region41: #{tpu_custom_call.1} parent=5 // pred_check
        %p5339 = pneg %p5338
      $region42: #{tpu_custom_call.1} parent=5 // pred_check_branch
        %5341 = sbr.rel (%p5339) target = $region44
      $region43: #{tpu_custom_call.1} parent=5 // pred_region
        %s5342 = ssub.s32 %s13, 2
        // Predicated region
        $region45: #{tpu_custom_call.1} parent=43 // pred_check
          %p5343 = pneg %p84
        $region46: #{tpu_custom_call.1} parent=43 // pred_check_branch
          %5345 = sbr.rel (%p5343) target = $region48
        $region47: #{tpu_custom_call.1} parent=43 // pred_region
          %s5346 = sand.u32 %s69, 1
          %s5347 = scalar_lea.sflag [#allocation4], %s5346
          %s5348 = sand.u32 %s69, 1
          %s5349 = smul.addr %s5348, 256
          %s5350 = scalar_lea.vmem [#allocation7], %s5349
          %5352 = dma.done %s5347, 4096
        $region48: #{tpu_custom_call.1} parent=43 // pred_fallthru
          _
      $region44: #{tpu_custom_call.1} parent=5 // pred_fallthru
        _
    $region6: #{tpu_custom_call.1} parent=1 // loop_footer
      %s17 = sadd.s32 1, %s13
    $region7: #{tpu_custom_call.1} parent=1 // loop_footer_branch
      %12 = sbr.rel target = $region3
    $region8: #{tpu_custom_call.1} parent=1 // loop_exit
      _
    %5353 = vsyncpa [#allocation3], 1
    %s5354 = scalar_lea.sflag [#allocation3], 1
    %5355 = vsyncpa %s5354, 1
    %5356 = vsyncpa [#allocation6], 1
    %5357 = vsyncpa [#allocation4], 1
    %s5358 = scalar_lea.sflag [#allocation4], 1
    %5359 = vsyncpa %s5358, 1

</llo_original>
